<compile_context>
chip_gen: v5e
topology: v5e:2x2
jax: 0.10.0
libtpu: 0.0.40
codegen_flags: <defaults>
</compile_context>

<pallas_src>
import math
import functools

import jax
import jax.numpy as jnp
from jax import lax
from jax.experimental import pallas as pl
from jax.experimental.pallas import tpu as pltpu


def _layer_norm(x, gamma, beta, eps=1e-5):
    # PyTorch LayerNorm: biased variance, eps inside the sqrt.
    mean = jnp.mean(x, axis=-1, keepdims=True)
    var = jnp.mean((x - mean) ** 2, axis=-1, keepdims=True)
    return (x - mean) * lax.rsqrt(var + eps) * gamma + beta


def _transform_kernel(n_heads,
                      x_ref,
                      wqkv_ref, bqkv_ref,
                      hmask_ref, sbias_ref,
                      g1_ref, be1_ref,
                      w1_ref, bf1_ref, w2_ref, bf2_ref,
                      g2_ref, be2_ref,
                      o_ref):
    x = x_ref[...].astype(jnp.float32)                        # [R, F]
    R, F = x.shape

    # Fused QKV projection: one MXU matmul, one resident weight.
    # (1/sqrt(d) is already folded into the Wq/bq columns by the wrapper.)
    qkv = jnp.dot(x, wqkv_ref[...],
                  preferred_element_type=jnp.float32) + bqkv_ref[...]   # [R, 3F]
    q = qkv[:, 0:F]
    k = qkv[:, F:2 * F]
    v = qkv[:, 2 * F:3 * F]

    k_bf = k.astype(jnp.bfloat16)
    v_bf = v.astype(jnp.bfloat16)
    sbias = sbias_ref[...]                                     # [R, R] 0 / -1e30

    att = jnp.zeros_like(x)                                    # [R, F] f32
    for h in range(n_heads):
        m_h = hmask_ref[h:h + 1, :]                            # [1, F] 0/1 f32 (resident)
        # s_h[r, m] = sum_{f in head h} q[r,f] * k[m,f]   (mask one side only)
        q_h = (q * m_h).astype(jnp.bfloat16)
        s = lax.dot_general(q_h, k_bf, (((1,), (1,)), ((), ())),
                            preferred_element_type=jnp.float32) + sbias  # [R, R]
        s_max = jnp.max(s, axis=-1, keepdims=True)
        e = jnp.exp(s - s_max)                                 # masked cols -> 0
        denom = jnp.sum(e, axis=-1, keepdims=True)
        p = (e * pl.reciprocal(denom, approx=True)).astype(jnp.bfloat16)
        # Merge head h back into its own feature columns.
        att = att + jnp.dot(p, v_bf, preferred_element_type=jnp.float32) * m_h

    # Residual + LayerNorm.
    v_ln = _layer_norm(att + x, g1_ref[...], be1_ref[...])

    # Feed-forward: Linear -> ReLU -> Linear.
    h1 = jnp.dot(v_ln, w1_ref[...], preferred_element_type=jnp.float32) + bf1_ref[...]
    h1 = jnp.maximum(h1, 0.0)
    h2 = jnp.dot(h1, w2_ref[...], preferred_element_type=jnp.float32) + bf2_ref[...]

    o_ref[...] = _layer_norm(h2, g2_ref[...], be2_ref[...]).astype(o_ref.dtype)


def _choose_slabs_per_block(num_slabs, n_nodes, target_rows, hard_cap_rows=512):
    """Largest slab-group G such that:
       * num_slabs % G == 0,
       * (G * n_nodes) % 8 == 0  (sublane divisibility),
       * G * n_nodes <= target_rows (attention waste grows with R),
       * preferring num_slabs // G >= 2 grid steps (v7x megacore).
    Falls back to a hard 512-row cap (keeps the O(R^2) score intermediate
    well under v7x's 64 MiB VMEM) and finally to a single full block."""
    divisors = [g for g in range(1, num_slabs + 1) if num_slabs % g == 0]

    def pick(cands):
        multi = [g for g in cands if num_slabs // g >= 2]
        pool = multi if multi else cands
        return max(pool) if pool else None

    g = pick([g for g in divisors
              if (g * n_nodes) % 8 == 0 and g * n_nodes <= target_rows])
    if g is None:
        g = pick([g for g in divisors
                  if (g * n_nodes) % 8 == 0 and g * n_nodes <= hard_cap_rows])
    if g is None:
        g = num_slabs      # block_shape == full array dims is always legal
    return g


def transform_forward(x, params, d, target_rows=128):
    B, T, N, F = x.shape
    assert F % d == 0
    n_heads = F // d
    num_slabs = B * T
    num_rows = num_slabs * N

    (wq, bq, wk, bk, wv, bv, g1, be1, w1, bf1, w2, bf2, g2, be2) = params

    # Fold the 1/sqrt(d) attention scale into the query projection (free),
    # and fuse Q/K/V weights+biases into one matmul operand.
    scale = 1.0 / math.sqrt(d)
    wqkv = jnp.concatenate([wq * scale, wk, wv], axis=1)       # [F, 3F]
    bqkv = jnp.concatenate([bq * scale, bk, bv], axis=1)       # [1, 3F]

    G = _choose_slabs_per_block(num_slabs, N, target_rows)
    R = G * N
    num_blocks = num_slabs // G

    # Resident masks, precomputed once (no per-step iota/compare/where).
    hmask = (jnp.arange(F)[None, :] // d
             == jnp.arange(n_heads)[:, None]).astype(jnp.float32)        # [H, F]
    rows = jnp.arange(R)
    same_slab = (rows[:, None] // N) == (rows[None, :] // N)
    sbias = jnp.where(same_slab, 0.0, -1e30).astype(jnp.float32)         # [R, R]

    x2 = x.reshape(num_rows, F)

    const = lambda shape: pl.BlockSpec(shape, lambda i: (0, 0))   # resident operand

    out = pl.pallas_call(
        functools.partial(_transform_kernel, n_heads),
        out_shape=jax.ShapeDtypeStruct((num_rows, F), x.dtype),
        grid_spec=pltpu.PrefetchScalarGridSpec(
            num_scalar_prefetch=0,
            grid=(num_blocks,),
            in_specs=[
                pl.BlockSpec((R, F), lambda i: (i, 0)),          # x rows
                const((F, 3 * F)), const((1, 3 * F)),            # Wqkv, bqkv
                const((n_heads, F)), const((R, R)),              # head mask, slab bias
                const((1, F)), const((1, F)),                    # ln gamma, beta
                const((F, F)), const((1, F)),                    # ff W1, b1
                const((F, F)), const((1, F)),                    # ff W2, b2
                const((1, F)), const((1, F)),                    # lnff gamma, beta
            ],
            out_specs=pl.BlockSpec((R, F), lambda i: (i, 0)),
        ),
        compiler_params=pltpu.CompilerParams(
            dimension_semantics=("parallel",),
            vmem_limit_bytes=32 * 1024 * 1024),
    )(x2, wqkv, bqkv, hmask, sbias, g1, be1, w1, bf1, w2, bf2, g2, be2)

    return out.reshape(B, T, N, F)


def transform_reference(x, params, d):
    """Pure-JAX mirror of the PyTorch forward (for verification)."""
    (wq, bq, wk, bk, wv, bv, g1, be1, w1, bf1, w2, bf2, g2, be2) = params
    F = x.shape[-1]
    h = F // d

    q = x @ wq + bq
    k = x @ wk + bk
    v = x @ wv + bv

    q = jnp.concatenate(jnp.split(q, h, axis=-1), axis=0)                      # [h*B,T,N,d]
    k = jnp.concatenate(jnp.split(k, h, axis=-1), axis=0).transpose(0, 1, 3, 2)
    v = jnp.concatenate(jnp.split(v, h, axis=-1), axis=0)

    A = (q @ k) / math.sqrt(d)
    A = jax.nn.softmax(A, axis=-1)
    v = A @ v
    v = jnp.concatenate(jnp.split(v, h, axis=0), axis=-1)                      # [B,T,N,F]

    v = v + x
    v = _layer_norm(v, g1, be1)
    y = jnp.maximum(v @ w1 + bf1, 0.0) @ w2 + bf2
    return _layer_norm(y, g2, be2)


def init_params(key, outfea):
    keys = jax.random.split(key, 10)
    s = 1.0 / math.sqrt(outfea)
    mk = lambda k, shape: jax.random.uniform(k, shape, jnp.float32, -s, s)
    wq, bq = mk(keys[0], (outfea, outfea)), mk(keys[1], (1, outfea))
    wk, bk = mk(keys[2], (outfea, outfea)), mk(keys[3], (1, outfea))
    wv, bv = mk(keys[4], (outfea, outfea)), mk(keys[5], (1, outfea))
    w1, bf1 = mk(keys[6], (outfea, outfea)), mk(keys[7], (1, outfea))
    w2, bf2 = mk(keys[8], (outfea, outfea)), mk(keys[9], (1, outfea))
    g1, be1 = jnp.ones((1, outfea), jnp.float32), jnp.zeros((1, outfea), jnp.float32)
    g2, be2 = jnp.ones((1, outfea), jnp.float32), jnp.zeros((1, outfea), jnp.float32)
    return (wq, bq, wk, bk, wv, bv, g1, be1, w1, bf1, w2, bf2, g2, be2)


if __name__ == "__main__":
    # 16 (b,t) slabs of 16 nodes -> 2 grid steps of R = 128 rows each
    # (>= 2 even steps so both v7x TensorCores get work).
    B, T, N, outfea, d = 2, 8, 16, 32, 8   # 4 attention heads

    key = jax.random.PRNGKey(0)
    kx, kp = jax.random.split(key)
    x = jax.random.normal(kx, (B, T, N, outfea), jnp.float32)
    params = init_params(kp, outfea)

    out = jax.block_until_ready(transform_forward(x, params, d))

    ref = transform_reference(x, params, d)
    assert out.shape == (B, T, N, outfea)
    # bf16 MXU operands + approx reciprocal in the softmax denominator
    # -> looser tolerance than the pure-f32 variant.
    assert jnp.allclose(out, ref, rtol=2e-2, atol=2e-2), "mismatch vs JAX reference"

    print("KERNEL_OK")
</pallas_src>

<mosaic_0001>
module attributes {stable_mosaic.version = 11 : i64} {
  func.func @_transform_kernel(%arg0: i32, %arg1: memref<128x32xf32, #tpu.memory_space<vmem>>, %arg2: memref<32x96xf32, #tpu.memory_space<vmem>>, %arg3: memref<1x96xf32, #tpu.memory_space<vmem>>, %arg4: memref<4x32xf32, #tpu.memory_space<vmem>>, %arg5: memref<128x128xf32, #tpu.memory_space<vmem>>, %arg6: memref<1x32xf32, #tpu.memory_space<vmem>>, %arg7: memref<1x32xf32, #tpu.memory_space<vmem>>, %arg8: memref<32x32xf32, #tpu.memory_space<vmem>>, %arg9: memref<1x32xf32, #tpu.memory_space<vmem>>, %arg10: memref<32x32xf32, #tpu.memory_space<vmem>>, %arg11: memref<1x32xf32, #tpu.memory_space<vmem>>, %arg12: memref<1x32xf32, #tpu.memory_space<vmem>>, %arg13: memref<1x32xf32, #tpu.memory_space<vmem>>, %arg14: memref<128x32xf32, #tpu.memory_space<vmem>>) attributes {dimension_semantics = [#tpu.dimension_semantics<parallel>], iteration_bounds = array<i64: 2>, scalar_prefetch = 0 : i64, scratch_operands = 0 : i64, tpu.core_type = #tpu.core_type<tc>, window_params = [{transform_indices = @transform_0, window_bounds = array<i64: 128, 32>}, {pipeline_mode = #tpu.pipeline_mode<synchronous>, transform_indices = @transform_1, window_bounds = array<i64: 32, 96>}, {pipeline_mode = #tpu.pipeline_mode<synchronous>, transform_indices = @transform_2, window_bounds = array<i64: 1, 96>}, {pipeline_mode = #tpu.pipeline_mode<synchronous>, transform_indices = @transform_3, window_bounds = array<i64: 4, 32>}, {pipeline_mode = #tpu.pipeline_mode<synchronous>, transform_indices = @transform_4, window_bounds = array<i64: 128, 128>}, {pipeline_mode = #tpu.pipeline_mode<synchronous>, transform_indices = @transform_5, window_bounds = array<i64: 1, 32>}, {pipeline_mode = #tpu.pipeline_mode<synchronous>, transform_indices = @transform_6, window_bounds = array<i64: 1, 32>}, {pipeline_mode = #tpu.pipeline_mode<synchronous>, transform_indices = @transform_7, window_bounds = array<i64: 32, 32>}, {pipeline_mode = #tpu.pipeline_mode<synchronous>, transform_indices = @transform_8, window_bounds = array<i64: 1, 32>}, {pipeline_mode = #tpu.pipeline_mode<synchronous>, transform_indices = @transform_9, window_bounds = array<i64: 32, 32>}, {pipeline_mode = #tpu.pipeline_mode<synchronous>, transform_indices = @transform_10, window_bounds = array<i64: 1, 32>}, {pipeline_mode = #tpu.pipeline_mode<synchronous>, transform_indices = @transform_11, window_bounds = array<i64: 1, 32>}, {pipeline_mode = #tpu.pipeline_mode<synchronous>, transform_indices = @transform_12, window_bounds = array<i64: 1, 32>}, {transform_indices = @transform_13, window_bounds = array<i64: 128, 32>}]} {
    %c0 = arith.constant 0 : index
    %c0_0 = arith.constant 0 : index
    %0 = vector.load %arg1[%c0, %c0_0] : memref<128x32xf32, #tpu.memory_space<vmem>>, vector<128x32xf32>
    %c0_1 = arith.constant 0 : index
    %c0_2 = arith.constant 0 : index
    %1 = vector.load %arg2[%c0_1, %c0_2] : memref<32x96xf32, #tpu.memory_space<vmem>>, vector<32x96xf32>
    %cst = arith.constant dense<0.000000e+00> : vector<128x96xf32>
    %2 = tpu.matmul %0, %1, %cst {dimension_numbers = #tpu.dot_dimension_numbers<[1], [0], [0], [1], [0, 0, 1, 1], [], []>} : vector<128x32xf32>, vector<32x96xf32>, vector<128x96xf32> -> vector<128x96xf32>
    %c0_3 = arith.constant 0 : index
    %c0_4 = arith.constant 0 : index
    %3 = vector.load %arg3[%c0_3, %c0_4] : memref<1x96xf32, #tpu.memory_space<vmem>>, vector<1x96xf32>
    %4 = vector.broadcast %3 : vector<1x96xf32> to vector<128x96xf32>
    %5 = arith.addf %2, %4 : vector<128x96xf32>
    %6 = vector.extract_strided_slice %5 {offsets = [0, 0], sizes = [128, 32], strides = [1, 1]} : vector<128x96xf32> to vector<128x32xf32>
    %7 = vector.extract_strided_slice %5 {offsets = [0, 32], sizes = [128, 32], strides = [1, 1]} : vector<128x96xf32> to vector<128x32xf32>
    %8 = vector.extract_strided_slice %5 {offsets = [0, 64], sizes = [128, 32], strides = [1, 1]} : vector<128x96xf32> to vector<128x32xf32>
    %9 = arith.truncf %7 : vector<128x32xf32> to vector<128x32xbf16>
    %10 = arith.truncf %8 : vector<128x32xf32> to vector<128x32xbf16>
    %c0_5 = arith.constant 0 : index
    %c0_6 = arith.constant 0 : index
    %11 = vector.load %arg5[%c0_5, %c0_6] : memref<128x128xf32, #tpu.memory_space<vmem>>, vector<128x128xf32>
    %cst_7 = arith.constant 0.000000e+00 : f32
    %12 = vector.broadcast %cst_7 : f32 to vector<128x32xf32>
    %c0_8 = arith.constant 0 : index
    %c0_9 = arith.constant 0 : index
    %13 = vector.load %arg4[%c0_8, %c0_9] : memref<4x32xf32, #tpu.memory_space<vmem>>, vector<1x32xf32>
    %14 = vector.broadcast %13 : vector<1x32xf32> to vector<128x32xf32>
    %15 = arith.mulf %6, %14 : vector<128x32xf32>
    %16 = arith.truncf %15 : vector<128x32xf32> to vector<128x32xbf16>
    %cst_10 = arith.constant dense<0.000000e+00> : vector<128x128xf32>
    %17 = tpu.matmul %16, %9, %cst_10 {dimension_numbers = #tpu.dot_dimension_numbers<[1], [1], [0], [0], [0, 0, 1, 0], [], []>} : vector<128x32xbf16>, vector<128x32xbf16>, vector<128x128xf32> -> vector<128x128xf32>
    %18 = arith.addf %17, %11 : vector<128x128xf32>
    %cst_11 = arith.constant dense<0xFF800000> : vector<128xf32>
    %19 = vector.multi_reduction <maximumf>, %18, %cst_11 [1] : vector<128x128xf32> to vector<128xf32>
    %20 = vector.shape_cast %19 : vector<128xf32> to vector<128x1xf32>
    %21 = vector.broadcast %20 : vector<128x1xf32> to vector<128x128xf32>
    %22 = arith.subf %18, %21 : vector<128x128xf32>
    %23 = math.exp %22 : vector<128x128xf32>
    %cst_12 = arith.constant dense<0.000000e+00> : vector<128xf32>
    %24 = vector.multi_reduction <add>, %23, %cst_12 [1] : vector<128x128xf32> to vector<128xf32>
    %25 = vector.shape_cast %24 : vector<128xf32> to vector<128x1xf32>
    %26 = tpu.reciprocal %25 {approx = true} : vector<128x1xf32> -> vector<128x1xf32>
    %27 = vector.broadcast %26 : vector<128x1xf32> to vector<128x128xf32>
    %28 = arith.mulf %23, %27 : vector<128x128xf32>
    %29 = arith.truncf %28 : vector<128x128xf32> to vector<128x128xbf16>
    %cst_13 = arith.constant dense<0.000000e+00> : vector<128x32xf32>
    %30 = tpu.matmul %29, %10, %cst_13 {dimension_numbers = #tpu.dot_dimension_numbers<[1], [0], [0], [1], [0, 0, 1, 1], [], []>} : vector<128x128xbf16>, vector<128x32xbf16>, vector<128x32xf32> -> vector<128x32xf32>
    %31 = vector.broadcast %13 : vector<1x32xf32> to vector<128x32xf32>
    %32 = arith.mulf %30, %31 : vector<128x32xf32>
    %33 = arith.addf %12, %32 : vector<128x32xf32>
    %c1 = arith.constant 1 : index
    %c0_14 = arith.constant 0 : index
    %34 = vector.load %arg4[%c1, %c0_14] : memref<4x32xf32, #tpu.memory_space<vmem>>, vector<1x32xf32>
    %35 = vector.broadcast %34 : vector<1x32xf32> to vector<128x32xf32>
    %36 = arith.mulf %6, %35 : vector<128x32xf32>
    %37 = arith.truncf %36 : vector<128x32xf32> to vector<128x32xbf16>
    %cst_15 = arith.constant dense<0.000000e+00> : vector<128x128xf32>
    %38 = tpu.matmul %37, %9, %cst_15 {dimension_numbers = #tpu.dot_dimension_numbers<[1], [1], [0], [0], [0, 0, 1, 0], [], []>} : vector<128x32xbf16>, vector<128x32xbf16>, vector<128x128xf32> -> vector<128x128xf32>
    %39 = arith.addf %38, %11 : vector<128x128xf32>
    %cst_16 = arith.constant dense<0xFF800000> : vector<128xf32>
    %40 = vector.multi_reduction <maximumf>, %39, %cst_16 [1] : vector<128x128xf32> to vector<128xf32>
    %41 = vector.shape_cast %40 : vector<128xf32> to vector<128x1xf32>
    %42 = vector.broadcast %41 : vector<128x1xf32> to vector<128x128xf32>
    %43 = arith.subf %39, %42 : vector<128x128xf32>
    %44 = math.exp %43 : vector<128x128xf32>
    %cst_17 = arith.constant dense<0.000000e+00> : vector<128xf32>
    %45 = vector.multi_reduction <add>, %44, %cst_17 [1] : vector<128x128xf32> to vector<128xf32>
    %46 = vector.shape_cast %45 : vector<128xf32> to vector<128x1xf32>
    %47 = tpu.reciprocal %46 {approx = true} : vector<128x1xf32> -> vector<128x1xf32>
    %48 = vector.broadcast %47 : vector<128x1xf32> to vector<128x128xf32>
    %49 = arith.mulf %44, %48 : vector<128x128xf32>
    %50 = arith.truncf %49 : vector<128x128xf32> to vector<128x128xbf16>
    %cst_18 = arith.constant dense<0.000000e+00> : vector<128x32xf32>
    %51 = tpu.matmul %50, %10, %cst_18 {dimension_numbers = #tpu.dot_dimension_numbers<[1], [0], [0], [1], [0, 0, 1, 1], [], []>} : vector<128x128xbf16>, vector<128x32xbf16>, vector<128x32xf32> -> vector<128x32xf32>
    %52 = vector.broadcast %34 : vector<1x32xf32> to vector<128x32xf32>
    %53 = arith.mulf %51, %52 : vector<128x32xf32>
    %54 = arith.addf %33, %53 : vector<128x32xf32>
    %c2 = arith.constant 2 : index
    %c0_19 = arith.constant 0 : index
    %55 = vector.load %arg4[%c2, %c0_19] : memref<4x32xf32, #tpu.memory_space<vmem>>, vector<1x32xf32>
    %56 = vector.broadcast %55 : vector<1x32xf32> to vector<128x32xf32>
    %57 = arith.mulf %6, %56 : vector<128x32xf32>
    %58 = arith.truncf %57 : vector<128x32xf32> to vector<128x32xbf16>
    %cst_20 = arith.constant dense<0.000000e+00> : vector<128x128xf32>
    %59 = tpu.matmul %58, %9, %cst_20 {dimension_numbers = #tpu.dot_dimension_numbers<[1], [1], [0], [0], [0, 0, 1, 0], [], []>} : vector<128x32xbf16>, vector<128x32xbf16>, vector<128x128xf32> -> vector<128x128xf32>
    %60 = arith.addf %59, %11 : vector<128x128xf32>
    %cst_21 = arith.constant dense<0xFF800000> : vector<128xf32>
    %61 = vector.multi_reduction <maximumf>, %60, %cst_21 [1] : vector<128x128xf32> to vector<128xf32>
    %62 = vector.shape_cast %61 : vector<128xf32> to vector<128x1xf32>
    %63 = vector.broadcast %62 : vector<128x1xf32> to vector<128x128xf32>
    %64 = arith.subf %60, %63 : vector<128x128xf32>
    %65 = math.exp %64 : vector<128x128xf32>
    %cst_22 = arith.constant dense<0.000000e+00> : vector<128xf32>
    %66 = vector.multi_reduction <add>, %65, %cst_22 [1] : vector<128x128xf32> to vector<128xf32>
    %67 = vector.shape_cast %66 : vector<128xf32> to vector<128x1xf32>
    %68 = tpu.reciprocal %67 {approx = true} : vector<128x1xf32> -> vector<128x1xf32>
    %69 = vector.broadcast %68 : vector<128x1xf32> to vector<128x128xf32>
    %70 = arith.mulf %65, %69 : vector<128x128xf32>
    %71 = arith.truncf %70 : vector<128x128xf32> to vector<128x128xbf16>
    %cst_23 = arith.constant dense<0.000000e+00> : vector<128x32xf32>
    %72 = tpu.matmul %71, %10, %cst_23 {dimension_numbers = #tpu.dot_dimension_numbers<[1], [0], [0], [1], [0, 0, 1, 1], [], []>} : vector<128x128xbf16>, vector<128x32xbf16>, vector<128x32xf32> -> vector<128x32xf32>
    %73 = vector.broadcast %55 : vector<1x32xf32> to vector<128x32xf32>
    %74 = arith.mulf %72, %73 : vector<128x32xf32>
    %75 = arith.addf %54, %74 : vector<128x32xf32>
    %c3 = arith.constant 3 : index
    %c0_24 = arith.constant 0 : index
    %76 = vector.load %arg4[%c3, %c0_24] : memref<4x32xf32, #tpu.memory_space<vmem>>, vector<1x32xf32>
    %77 = vector.broadcast %76 : vector<1x32xf32> to vector<128x32xf32>
    %78 = arith.mulf %6, %77 : vector<128x32xf32>
    %79 = arith.truncf %78 : vector<128x32xf32> to vector<128x32xbf16>
    %cst_25 = arith.constant dense<0.000000e+00> : vector<128x128xf32>
    %80 = tpu.matmul %79, %9, %cst_25 {dimension_numbers = #tpu.dot_dimension_numbers<[1], [1], [0], [0], [0, 0, 1, 0], [], []>} : vector<128x32xbf16>, vector<128x32xbf16>, vector<128x128xf32> -> vector<128x128xf32>
    %81 = arith.addf %80, %11 : vector<128x128xf32>
    %cst_26 = arith.constant dense<0xFF800000> : vector<128xf32>
    %82 = vector.multi_reduction <maximumf>, %81, %cst_26 [1] : vector<128x128xf32> to vector<128xf32>
    %83 = vector.shape_cast %82 : vector<128xf32> to vector<128x1xf32>
    %84 = vector.broadcast %83 : vector<128x1xf32> to vector<128x128xf32>
    %85 = arith.subf %81, %84 : vector<128x128xf32>
    %86 = math.exp %85 : vector<128x128xf32>
    %cst_27 = arith.constant dense<0.000000e+00> : vector<128xf32>
    %87 = vector.multi_reduction <add>, %86, %cst_27 [1] : vector<128x128xf32> to vector<128xf32>
    %88 = vector.shape_cast %87 : vector<128xf32> to vector<128x1xf32>
    %89 = tpu.reciprocal %88 {approx = true} : vector<128x1xf32> -> vector<128x1xf32>
    %90 = vector.broadcast %89 : vector<128x1xf32> to vector<128x128xf32>
    %91 = arith.mulf %86, %90 : vector<128x128xf32>
    %92 = arith.truncf %91 : vector<128x128xf32> to vector<128x128xbf16>
    %cst_28 = arith.constant dense<0.000000e+00> : vector<128x32xf32>
    %93 = tpu.matmul %92, %10, %cst_28 {dimension_numbers = #tpu.dot_dimension_numbers<[1], [0], [0], [1], [0, 0, 1, 1], [], []>} : vector<128x128xbf16>, vector<128x32xbf16>, vector<128x32xf32> -> vector<128x32xf32>
    %94 = vector.broadcast %76 : vector<1x32xf32> to vector<128x32xf32>
    %95 = arith.mulf %93, %94 : vector<128x32xf32>
    %96 = arith.addf %75, %95 : vector<128x32xf32>
    %97 = arith.addf %96, %0 : vector<128x32xf32>
    %c0_29 = arith.constant 0 : index
    %c0_30 = arith.constant 0 : index
    %98 = vector.load %arg6[%c0_29, %c0_30] : memref<1x32xf32, #tpu.memory_space<vmem>>, vector<1x32xf32>
    %c0_31 = arith.constant 0 : index
    %c0_32 = arith.constant 0 : index
    %99 = vector.load %arg7[%c0_31, %c0_32] : memref<1x32xf32, #tpu.memory_space<vmem>>, vector<1x32xf32>
    %cst_33 = arith.constant dense<0.000000e+00> : vector<128xf32>
    %100 = vector.multi_reduction <add>, %97, %cst_33 [1] : vector<128x32xf32> to vector<128xf32>
    %101 = vector.shape_cast %100 : vector<128xf32> to vector<128x1xf32>
    %cst_34 = arith.constant 3.200000e+01 : f32
    %102 = vector.broadcast %cst_34 : f32 to vector<128x1xf32>
    %103 = arith.divf %101, %102 : vector<128x1xf32>
    %104 = vector.broadcast %103 : vector<128x1xf32> to vector<128x32xf32>
    %105 = arith.subf %97, %104 : vector<128x32xf32>
    %106 = arith.mulf %105, %105 : vector<128x32xf32>
    %cst_35 = arith.constant dense<0.000000e+00> : vector<128xf32>
    %107 = vector.multi_reduction <add>, %106, %cst_35 [1] : vector<128x32xf32> to vector<128xf32>
    %108 = vector.shape_cast %107 : vector<128xf32> to vector<128x1xf32>
    %cst_36 = arith.constant 3.200000e+01 : f32
    %109 = vector.broadcast %cst_36 : f32 to vector<128x1xf32>
    %110 = arith.divf %108, %109 : vector<128x1xf32>
    %111 = vector.broadcast %103 : vector<128x1xf32> to vector<128x32xf32>
    %112 = arith.subf %97, %111 : vector<128x32xf32>
    %cst_37 = arith.constant 9.99999974E-6 : f32
    %113 = vector.broadcast %cst_37 : f32 to vector<128x1xf32>
    %114 = arith.addf %110, %113 : vector<128x1xf32>
    %115 = math.rsqrt %114 : vector<128x1xf32>
    %116 = vector.broadcast %115 : vector<128x1xf32> to vector<128x32xf32>
    %117 = arith.mulf %112, %116 : vector<128x32xf32>
    %118 = vector.broadcast %98 : vector<1x32xf32> to vector<128x32xf32>
    %119 = arith.mulf %117, %118 : vector<128x32xf32>
    %120 = vector.broadcast %99 : vector<1x32xf32> to vector<128x32xf32>
    %121 = arith.addf %119, %120 : vector<128x32xf32>
    %c0_38 = arith.constant 0 : index
    %c0_39 = arith.constant 0 : index
    %122 = vector.load %arg8[%c0_38, %c0_39] : memref<32x32xf32, #tpu.memory_space<vmem>>, vector<32x32xf32>
    %cst_40 = arith.constant dense<0.000000e+00> : vector<128x32xf32>
    %123 = tpu.matmul %121, %122, %cst_40 {dimension_numbers = #tpu.dot_dimension_numbers<[1], [0], [0], [1], [0, 0, 1, 1], [], []>} : vector<128x32xf32>, vector<32x32xf32>, vector<128x32xf32> -> vector<128x32xf32>
    %c0_41 = arith.constant 0 : index
    %c0_42 = arith.constant 0 : index
    %124 = vector.load %arg9[%c0_41, %c0_42] : memref<1x32xf32, #tpu.memory_space<vmem>>, vector<1x32xf32>
    %125 = vector.broadcast %124 : vector<1x32xf32> to vector<128x32xf32>
    %126 = arith.addf %123, %125 : vector<128x32xf32>
    %cst_43 = arith.constant 0.000000e+00 : f32
    %127 = vector.broadcast %cst_43 : f32 to vector<128x32xf32>
    %128 = arith.maximumf %126, %127 : vector<128x32xf32>
    %c0_44 = arith.constant 0 : index
    %c0_45 = arith.constant 0 : index
    %129 = vector.load %arg10[%c0_44, %c0_45] : memref<32x32xf32, #tpu.memory_space<vmem>>, vector<32x32xf32>
    %cst_46 = arith.constant dense<0.000000e+00> : vector<128x32xf32>
    %130 = tpu.matmul %128, %129, %cst_46 {dimension_numbers = #tpu.dot_dimension_numbers<[1], [0], [0], [1], [0, 0, 1, 1], [], []>} : vector<128x32xf32>, vector<32x32xf32>, vector<128x32xf32> -> vector<128x32xf32>
    %c0_47 = arith.constant 0 : index
    %c0_48 = arith.constant 0 : index
    %131 = vector.load %arg11[%c0_47, %c0_48] : memref<1x32xf32, #tpu.memory_space<vmem>>, vector<1x32xf32>
    %132 = vector.broadcast %131 : vector<1x32xf32> to vector<128x32xf32>
    %133 = arith.addf %130, %132 : vector<128x32xf32>
    %c0_49 = arith.constant 0 : index
    %c0_50 = arith.constant 0 : index
    %134 = vector.load %arg12[%c0_49, %c0_50] : memref<1x32xf32, #tpu.memory_space<vmem>>, vector<1x32xf32>
    %c0_51 = arith.constant 0 : index
    %c0_52 = arith.constant 0 : index
    %135 = vector.load %arg13[%c0_51, %c0_52] : memref<1x32xf32, #tpu.memory_space<vmem>>, vector<1x32xf32>
    %cst_53 = arith.constant dense<0.000000e+00> : vector<128xf32>
    %136 = vector.multi_reduction <add>, %133, %cst_53 [1] : vector<128x32xf32> to vector<128xf32>
    %137 = vector.shape_cast %136 : vector<128xf32> to vector<128x1xf32>
    %cst_54 = arith.constant 3.200000e+01 : f32
    %138 = vector.broadcast %cst_54 : f32 to vector<128x1xf32>
    %139 = arith.divf %137, %138 : vector<128x1xf32>
    %140 = vector.broadcast %139 : vector<128x1xf32> to vector<128x32xf32>
    %141 = arith.subf %133, %140 : vector<128x32xf32>
    %142 = arith.mulf %141, %141 : vector<128x32xf32>
    %cst_55 = arith.constant dense<0.000000e+00> : vector<128xf32>
    %143 = vector.multi_reduction <add>, %142, %cst_55 [1] : vector<128x32xf32> to vector<128xf32>
    %144 = vector.shape_cast %143 : vector<128xf32> to vector<128x1xf32>
    %cst_56 = arith.constant 3.200000e+01 : f32
    %145 = vector.broadcast %cst_56 : f32 to vector<128x1xf32>
    %146 = arith.divf %144, %145 : vector<128x1xf32>
    %147 = vector.broadcast %139 : vector<128x1xf32> to vector<128x32xf32>
    %148 = arith.subf %133, %147 : vector<128x32xf32>
    %cst_57 = arith.constant 9.99999974E-6 : f32
    %149 = vector.broadcast %cst_57 : f32 to vector<128x1xf32>
    %150 = arith.addf %146, %149 : vector<128x1xf32>
    %151 = math.rsqrt %150 : vector<128x1xf32>
    %152 = vector.broadcast %151 : vector<128x1xf32> to vector<128x32xf32>
    %153 = arith.mulf %148, %152 : vector<128x32xf32>
    %154 = vector.broadcast %134 : vector<1x32xf32> to vector<128x32xf32>
    %155 = arith.mulf %153, %154 : vector<128x32xf32>
    %156 = vector.broadcast %135 : vector<1x32xf32> to vector<128x32xf32>
    %157 = arith.addf %155, %156 : vector<128x32xf32>
    %c0_58 = arith.constant 0 : index
    %c0_59 = arith.constant 0 : index
    %158 = vector.load %arg14[%c0_58, %c0_59] : memref<128x32xf32, #tpu.memory_space<vmem>>, vector<128x32xf32>
    tpu.vector_store %arg14[%c0_58, %c0_59], %157 {strides = array<i32>} : memref<128x32xf32, #tpu.memory_space<vmem>>, vector<128x32xf32>,
    return
  }
  func.func @transform_0(%arg0: i32) -> (i32, i32) {
    %c0_i32 = arith.constant 0 : i32
    %c0_i32_0 = arith.constant 0 : i32
    return %arg0, %c0_i32 : i32, i32
  }
  func.func @transform_1(%arg0: i32) -> (i32, i32) {
    %c0_i32 = arith.constant 0 : i32
    %c0_i32_0 = arith.constant 0 : i32
    %c0_i32_1 = arith.constant 0 : i32
    return %c0_i32, %c0_i32_0 : i32, i32
  }
  func.func @transform_2(%arg0: i32) -> (i32, i32) {
    %c0_i32 = arith.constant 0 : i32
    %c0_i32_0 = arith.constant 0 : i32
    %c0_i32_1 = arith.constant 0 : i32
    return %c0_i32, %c0_i32_0 : i32, i32
  }
  func.func @transform_3(%arg0: i32) -> (i32, i32) {
    %c0_i32 = arith.constant 0 : i32
    %c0_i32_0 = arith.constant 0 : i32
    %c0_i32_1 = arith.constant 0 : i32
    return %c0_i32, %c0_i32_0 : i32, i32
  }
  func.func @transform_4(%arg0: i32) -> (i32, i32) {
    %c0_i32 = arith.constant 0 : i32
    %c0_i32_0 = arith.constant 0 : i32
    %c0_i32_1 = arith.constant 0 : i32
    return %c0_i32, %c0_i32_0 : i32, i32
  }
  func.func @transform_5(%arg0: i32) -> (i32, i32) {
    %c0_i32 = arith.constant 0 : i32
    %c0_i32_0 = arith.constant 0 : i32
    %c0_i32_1 = arith.constant 0 : i32
    return %c0_i32, %c0_i32_0 : i32, i32
  }
  func.func @transform_6(%arg0: i32) -> (i32, i32) {
    %c0_i32 = arith.constant 0 : i32
    %c0_i32_0 = arith.constant 0 : i32
    %c0_i32_1 = arith.constant 0 : i32
    return %c0_i32, %c0_i32_0 : i32, i32
  }
  func.func @transform_7(%arg0: i32) -> (i32, i32) {
    %c0_i32 = arith.constant 0 : i32
    %c0_i32_0 = arith.constant 0 : i32
    %c0_i32_1 = arith.constant 0 : i32
    return %c0_i32, %c0_i32_0 : i32, i32
  }
  func.func @transform_8(%arg0: i32) -> (i32, i32) {
    %c0_i32 = arith.constant 0 : i32
    %c0_i32_0 = arith.constant 0 : i32
    %c0_i32_1 = arith.constant 0 : i32
    return %c0_i32, %c0_i32_0 : i32, i32
  }
  func.func @transform_9(%arg0: i32) -> (i32, i32) {
    %c0_i32 = arith.constant 0 : i32
    %c0_i32_0 = arith.constant 0 : i32
    %c0_i32_1 = arith.constant 0 : i32
    return %c0_i32, %c0_i32_0 : i32, i32
  }
  func.func @transform_10(%arg0: i32) -> (i32, i32) {
    %c0_i32 = arith.constant 0 : i32
    %c0_i32_0 = arith.constant 0 : i32
    %c0_i32_1 = arith.constant 0 : i32
    return %c0_i32, %c0_i32_0 : i32, i32
  }
  func.func @transform_11(%arg0: i32) -> (i32, i32) {
    %c0_i32 = arith.constant 0 : i32
    %c0_i32_0 = arith.constant 0 : i32
    %c0_i32_1 = arith.constant 0 : i32
    return %c0_i32, %c0_i32_0 : i32, i32
  }
  func.func @transform_12(%arg0: i32) -> (i32, i32) {
    %c0_i32 = arith.constant 0 : i32
    %c0_i32_0 = arith.constant 0 : i32
    %c0_i32_1 = arith.constant 0 : i32
    return %c0_i32, %c0_i32_0 : i32, i32
  }
  func.func @transform_13(%arg0: i32) -> (i32, i32) {
    %c0_i32 = arith.constant 0 : i32
    %c0_i32_0 = arith.constant 0 : i32
    return %arg0, %c0_i32 : i32, i32
  }
}

</mosaic_0001>

<llo_original>
// kernel: tpu_custom_call.1
$region0: #{tpu_custom_call.1}
  #allocation0 [shape = 'u32[]', space=smem, size = 0x4, offset = 0x4, fixed_abs, tag = 'smem constant byte address 0x4 - core index']
  #allocation1 [shape = 'u32[72,128]{1,0:T(1,128)}', space=vmem, size = 0x9000, scoped, tag = 'internal scratch']
  %s0 = inlined_call_operand.vmem [shape: f32[256,32], index: 0, kind: input, shape index: {}]
  %s1 = inlined_call_operand.vmem [shape: f32[32,96], index: 1, kind: input, shape index: {}]
  %s2 = inlined_call_operand.vmem [shape: f32[1,96], index: 2, kind: input, shape index: {}]
  %s3 = inlined_call_operand.vmem [shape: f32[4,32], index: 3, kind: input, shape index: {}]
  %s4 = inlined_call_operand.vmem [shape: f32[128,128], index: 4, kind: input, shape index: {}]
  %s5 = inlined_call_operand.vmem [shape: f32[1,32], index: 5, kind: input, shape index: {}]
  %s6 = inlined_call_operand.vmem [shape: f32[1,32], index: 6, kind: input, shape index: {}]
  %s7 = inlined_call_operand.vmem [shape: f32[32,32], index: 7, kind: input, shape index: {}]
  %s8 = inlined_call_operand.vmem [shape: f32[1,32], index: 8, kind: input, shape index: {}]
  %s9 = inlined_call_operand.vmem [shape: f32[32,32], index: 9, kind: input, shape index: {}]
  %s10 = inlined_call_operand.vmem [shape: f32[1,32], index: 10, kind: input, shape index: {}]
  %s11 = inlined_call_operand.vmem [shape: f32[1,32], index: 11, kind: input, shape index: {}]
  %s12 = inlined_call_operand.vmem [shape: f32[1,32], index: 12, kind: input, shape index: {}]
  %s13 = inlined_call_operand.vmem [shape: f32[256,32], index: 13, kind: output, shape index: {}]
  %s14 = sld [smem:[#allocation0]]
  $region85: #{tpu_custom_call.1} parent=0
    _
  %s16 = ssub.s32 1, %s14
  %s17 = scalar_select 0, %s16, %s14
  loop: start=0, step=1, limit=4
  $region2: #{tpu_custom_call.1} parent=0 // loop_pre_header
    _
  $region3: #{tpu_custom_call.1} parent=0 // loop_header
    %s19 = sphi 0, %s23
    %p20 = scmp.ge.s32.totalorder %s19, 4
    %s29 = sphi 0, %s31
    %s32 = sphi 0, %s29
    %s33 = sphi 0, %s32
    %s49 = sphi 0, %s33
    %s53 = sphi 0, %s53
    %s55 = sphi 0, %s53
    %s56 = sphi 0, %s55
    %s70 = sphi 0, %s56
    %s74 = sphi 0, %s74
    %s76 = sphi 0, %s74
    %s77 = sphi 0, %s76
    %s91 = sphi 0, %s77
    %s95 = sphi 0, %s95
    %s97 = sphi 0, %s95
    %s98 = sphi 0, %s97
    %s112 = sphi 0, %s98
    %s116 = sphi 0, %s116
    %s118 = sphi 0, %s116
    %s119 = sphi 0, %s118
    %s133 = sphi 0, %s119
    %s137 = sphi 0, %s137
    %s139 = sphi 0, %s137
    %s140 = sphi 0, %s139
    %s154 = sphi 0, %s140
    %s158 = sphi 0, %s158
    %s160 = sphi 0, %s158
    %s161 = sphi 0, %s160
    %s175 = sphi 0, %s161
    %s179 = sphi 0, %s179
    %s181 = sphi 0, %s179
    %s182 = sphi 0, %s181
    %s196 = sphi 0, %s182
    %s200 = sphi 0, %s200
    %s202 = sphi 0, %s200
    %s203 = sphi 0, %s202
    %s217 = sphi 0, %s203
    %s221 = sphi 0, %s221
    %s223 = sphi 0, %s221
    %s224 = sphi 0, %s223
    %s238 = sphi 0, %s224
    %s242 = sphi 0, %s242
    %s244 = sphi 0, %s242
    %s245 = sphi 0, %s244
    %s259 = sphi 0, %s245
    %s263 = sphi 0, %s263
    %s265 = sphi 0, %s263
    %s266 = sphi 0, %s265
    %s280 = sphi 0, %s266
    %s284 = sphi 0, %s284
    %s286 = sphi 0, %s284
    %s287 = sphi 0, %s286
    %s301 = sphi 0, %s287
    %s307 = sphi 0, %s309
    %s310 = sphi 0, %s307
    %s311 = sphi 0, %s310
    %s327 = sphi 0, %s311
  $region4: #{tpu_custom_call.1} parent=0 // loop_header_branch
    %22 = sbr.rel (%p20) target = $region8
  $region5: #{tpu_custom_call.1} parent=0 // loop_body
    %s24 = ssub.s32 %s19, 1
    %s25 = ssub.s32 %s19, 2
    %s26 = sadd.s32 %s19, 1
    %s27 = ssub.s32 %s19, %s26
    %p28 = scmp.eq.s32.totalorder %s27, 0
    %s30 = sadd.s32 %s29, 1
    %s31 = scalar_select %p28, %s29, %s30
    %p34 = pneg %p28
    %p35 = scmp.eq.s32.totalorder %s19, 1
    %p36 = por %p34, %p35
    %p37 = scmp.ne.s32.totalorder %s29, %s32
    %p38 = scmp.eq.s32.totalorder %s19, 0
    %p39 = por %p37, %p38
    %p40 = scmp.ne.s32.totalorder %s29, %s32
    %p41 = scmp.eq.s32.totalorder %s24, 1
    %p42 = por %p40, %p41
    %p43 = scmp.ne.s32.totalorder %s32, %s33
    %p44 = scmp.eq.s32.totalorder %s24, 0
    %p45 = por %p43, %p44
    %p46 = scmp.ne.s32.totalorder %s32, %s33
    %p47 = scmp.eq.s32.totalorder %s25, 1
    %p48 = por %p46, %p47
    %p50 = scmp.ne.s32.totalorder %s33, %s49
    %p51 = scmp.eq.s32.totalorder %s25, 0
    %p52 = por %p50, %p51
    %s54 = sadd.s32 %s53, 1
    %p57 = scmp.eq.s32.totalorder %s19, 1
    %p58 = scmp.ne.s32.totalorder %s53, %s55
    %p59 = scmp.eq.s32.totalorder %s19, 0
    %p60 = por %p58, %p59
    %p61 = scmp.ne.s32.totalorder %s53, %s55
    %p62 = scmp.eq.s32.totalorder %s24, 1
    %p63 = por %p61, %p62
    %p64 = scmp.ne.s32.totalorder %s55, %s56
    %p65 = scmp.eq.s32.totalorder %s24, 0
    %p66 = por %p64, %p65
    %p67 = scmp.ne.s32.totalorder %s55, %s56
    %p68 = scmp.eq.s32.totalorder %s25, 1
    %p69 = por %p67, %p68
    %p71 = scmp.ne.s32.totalorder %s56, %s70
    %p72 = scmp.eq.s32.totalorder %s25, 0
    %p73 = por %p71, %p72
    %s75 = sadd.s32 %s74, 1
    %p78 = scmp.eq.s32.totalorder %s19, 1
    %p79 = scmp.ne.s32.totalorder %s74, %s76
    %p80 = scmp.eq.s32.totalorder %s19, 0
    %p81 = por %p79, %p80
    %p82 = scmp.ne.s32.totalorder %s74, %s76
    %p83 = scmp.eq.s32.totalorder %s24, 1
    %p84 = por %p82, %p83
    %p85 = scmp.ne.s32.totalorder %s76, %s77
    %p86 = scmp.eq.s32.totalorder %s24, 0
    %p87 = por %p85, %p86
    %p88 = scmp.ne.s32.totalorder %s76, %s77
    %p89 = scmp.eq.s32.totalorder %s25, 1
    %p90 = por %p88, %p89
    %p92 = scmp.ne.s32.totalorder %s77, %s91
    %p93 = scmp.eq.s32.totalorder %s25, 0
    %p94 = por %p92, %p93
    %s96 = sadd.s32 %s95, 1
    %p99 = scmp.eq.s32.totalorder %s19, 1
    %p100 = scmp.ne.s32.totalorder %s95, %s97
    %p101 = scmp.eq.s32.totalorder %s19, 0
    %p102 = por %p100, %p101
    %p103 = scmp.ne.s32.totalorder %s95, %s97
    %p104 = scmp.eq.s32.totalorder %s24, 1
    %p105 = por %p103, %p104
    %p106 = scmp.ne.s32.totalorder %s97, %s98
    %p107 = scmp.eq.s32.totalorder %s24, 0
    %p108 = por %p106, %p107
    %p109 = scmp.ne.s32.totalorder %s97, %s98
    %p110 = scmp.eq.s32.totalorder %s25, 1
    %p111 = por %p109, %p110
    %p113 = scmp.ne.s32.totalorder %s98, %s112
    %p114 = scmp.eq.s32.totalorder %s25, 0
    %p115 = por %p113, %p114
    %s117 = sadd.s32 %s116, 1
    %p120 = scmp.eq.s32.totalorder %s19, 1
    %p121 = scmp.ne.s32.totalorder %s116, %s118
    %p122 = scmp.eq.s32.totalorder %s19, 0
    %p123 = por %p121, %p122
    %p124 = scmp.ne.s32.totalorder %s116, %s118
    %p125 = scmp.eq.s32.totalorder %s24, 1
    %p126 = por %p124, %p125
    %p127 = scmp.ne.s32.totalorder %s118, %s119
    %p128 = scmp.eq.s32.totalorder %s24, 0
    %p129 = por %p127, %p128
    %p130 = scmp.ne.s32.totalorder %s118, %s119
    %p131 = scmp.eq.s32.totalorder %s25, 1
    %p132 = por %p130, %p131
    %p134 = scmp.ne.s32.totalorder %s119, %s133
    %p135 = scmp.eq.s32.totalorder %s25, 0
    %p136 = por %p134, %p135
    %s138 = sadd.s32 %s137, 1
    %p141 = scmp.eq.s32.totalorder %s19, 1
    %p142 = scmp.ne.s32.totalorder %s137, %s139
    %p143 = scmp.eq.s32.totalorder %s19, 0
    %p144 = por %p142, %p143
    %p145 = scmp.ne.s32.totalorder %s137, %s139
    %p146 = scmp.eq.s32.totalorder %s24, 1
    %p147 = por %p145, %p146
    %p148 = scmp.ne.s32.totalorder %s139, %s140
    %p149 = scmp.eq.s32.totalorder %s24, 0
    %p150 = por %p148, %p149
    %p151 = scmp.ne.s32.totalorder %s139, %s140
    %p152 = scmp.eq.s32.totalorder %s25, 1
    %p153 = por %p151, %p152
    %p155 = scmp.ne.s32.totalorder %s140, %s154
    %p156 = scmp.eq.s32.totalorder %s25, 0
    %p157 = por %p155, %p156
    %s159 = sadd.s32 %s158, 1
    %p162 = scmp.eq.s32.totalorder %s19, 1
    %p163 = scmp.ne.s32.totalorder %s158, %s160
    %p164 = scmp.eq.s32.totalorder %s19, 0
    %p165 = por %p163, %p164
    %p166 = scmp.ne.s32.totalorder %s158, %s160
    %p167 = scmp.eq.s32.totalorder %s24, 1
    %p168 = por %p166, %p167
    %p169 = scmp.ne.s32.totalorder %s160, %s161
    %p170 = scmp.eq.s32.totalorder %s24, 0
    %p171 = por %p169, %p170
    %p172 = scmp.ne.s32.totalorder %s160, %s161
    %p173 = scmp.eq.s32.totalorder %s25, 1
    %p174 = por %p172, %p173
    %p176 = scmp.ne.s32.totalorder %s161, %s175
    %p177 = scmp.eq.s32.totalorder %s25, 0
    %p178 = por %p176, %p177
    %s180 = sadd.s32 %s179, 1
    %p183 = scmp.eq.s32.totalorder %s19, 1
    %p184 = scmp.ne.s32.totalorder %s179, %s181
    %p185 = scmp.eq.s32.totalorder %s19, 0
    %p186 = por %p184, %p185
    %p187 = scmp.ne.s32.totalorder %s179, %s181
    %p188 = scmp.eq.s32.totalorder %s24, 1
    %p189 = por %p187, %p188
    %p190 = scmp.ne.s32.totalorder %s181, %s182
    %p191 = scmp.eq.s32.totalorder %s24, 0
    %p192 = por %p190, %p191
    %p193 = scmp.ne.s32.totalorder %s181, %s182
    %p194 = scmp.eq.s32.totalorder %s25, 1
    %p195 = por %p193, %p194
    %p197 = scmp.ne.s32.totalorder %s182, %s196
    %p198 = scmp.eq.s32.totalorder %s25, 0
    %p199 = por %p197, %p198
    %s201 = sadd.s32 %s200, 1
    %p204 = scmp.eq.s32.totalorder %s19, 1
    %p205 = scmp.ne.s32.totalorder %s200, %s202
    %p206 = scmp.eq.s32.totalorder %s19, 0
    %p207 = por %p205, %p206
    %p208 = scmp.ne.s32.totalorder %s200, %s202
    %p209 = scmp.eq.s32.totalorder %s24, 1
    %p210 = por %p208, %p209
    %p211 = scmp.ne.s32.totalorder %s202, %s203
    %p212 = scmp.eq.s32.totalorder %s24, 0
    %p213 = por %p211, %p212
    %p214 = scmp.ne.s32.totalorder %s202, %s203
    %p215 = scmp.eq.s32.totalorder %s25, 1
    %p216 = por %p214, %p215
    %p218 = scmp.ne.s32.totalorder %s203, %s217
    %p219 = scmp.eq.s32.totalorder %s25, 0
    %p220 = por %p218, %p219
    %s222 = sadd.s32 %s221, 1
    %p225 = scmp.eq.s32.totalorder %s19, 1
    %p226 = scmp.ne.s32.totalorder %s221, %s223
    %p227 = scmp.eq.s32.totalorder %s19, 0
    %p228 = por %p226, %p227
    %p229 = scmp.ne.s32.totalorder %s221, %s223
    %p230 = scmp.eq.s32.totalorder %s24, 1
    %p231 = por %p229, %p230
    %p232 = scmp.ne.s32.totalorder %s223, %s224
    %p233 = scmp.eq.s32.totalorder %s24, 0
    %p234 = por %p232, %p233
    %p235 = scmp.ne.s32.totalorder %s223, %s224
    %p236 = scmp.eq.s32.totalorder %s25, 1
    %p237 = por %p235, %p236
    %p239 = scmp.ne.s32.totalorder %s224, %s238
    %p240 = scmp.eq.s32.totalorder %s25, 0
    %p241 = por %p239, %p240
    %s243 = sadd.s32 %s242, 1
    %p246 = scmp.eq.s32.totalorder %s19, 1
    %p247 = scmp.ne.s32.totalorder %s242, %s244
    %p248 = scmp.eq.s32.totalorder %s19, 0
    %p249 = por %p247, %p248
    %p250 = scmp.ne.s32.totalorder %s242, %s244
    %p251 = scmp.eq.s32.totalorder %s24, 1
    %p252 = por %p250, %p251
    %p253 = scmp.ne.s32.totalorder %s244, %s245
    %p254 = scmp.eq.s32.totalorder %s24, 0
    %p255 = por %p253, %p254
    %p256 = scmp.ne.s32.totalorder %s244, %s245
    %p257 = scmp.eq.s32.totalorder %s25, 1
    %p258 = por %p256, %p257
    %p260 = scmp.ne.s32.totalorder %s245, %s259
    %p261 = scmp.eq.s32.totalorder %s25, 0
    %p262 = por %p260, %p261
    %s264 = sadd.s32 %s263, 1
    %p267 = scmp.eq.s32.totalorder %s19, 1
    %p268 = scmp.ne.s32.totalorder %s263, %s265
    %p269 = scmp.eq.s32.totalorder %s19, 0
    %p270 = por %p268, %p269
    %p271 = scmp.ne.s32.totalorder %s263, %s265
    %p272 = scmp.eq.s32.totalorder %s24, 1
    %p273 = por %p271, %p272
    %p274 = scmp.ne.s32.totalorder %s265, %s266
    %p275 = scmp.eq.s32.totalorder %s24, 0
    %p276 = por %p274, %p275
    %p277 = scmp.ne.s32.totalorder %s265, %s266
    %p278 = scmp.eq.s32.totalorder %s25, 1
    %p279 = por %p277, %p278
    %p281 = scmp.ne.s32.totalorder %s266, %s280
    %p282 = scmp.eq.s32.totalorder %s25, 0
    %p283 = por %p281, %p282
    %s285 = sadd.s32 %s284, 1
    %p288 = scmp.eq.s32.totalorder %s19, 1
    %p289 = scmp.ne.s32.totalorder %s284, %s286
    %p290 = scmp.eq.s32.totalorder %s19, 0
    %p291 = por %p289, %p290
    %p292 = scmp.ne.s32.totalorder %s284, %s286
    %p293 = scmp.eq.s32.totalorder %s24, 1
    %p294 = por %p292, %p293
    %p295 = scmp.ne.s32.totalorder %s286, %s287
    %p296 = scmp.eq.s32.totalorder %s24, 0
    %p297 = por %p295, %p296
    %p298 = scmp.ne.s32.totalorder %s286, %s287
    %p299 = scmp.eq.s32.totalorder %s25, 1
    %p300 = por %p298, %p299
    %p302 = scmp.ne.s32.totalorder %s287, %s301
    %p303 = scmp.eq.s32.totalorder %s25, 0
    %p304 = por %p302, %p303
    %s305 = ssub.s32 %s19, %s26
    %p306 = scmp.eq.s32.totalorder %s305, 0
    %s308 = sadd.s32 %s307, 1
    %s309 = scalar_select %p306, %s307, %s308
    %p312 = pneg %p306
    %p313 = scmp.eq.s32.totalorder %s19, 1
    %p314 = por %p312, %p313
    %p315 = scmp.ne.s32.totalorder %s307, %s310
    %p316 = scmp.eq.s32.totalorder %s19, 0
    %p317 = por %p315, %p316
    %p318 = scmp.ne.s32.totalorder %s307, %s310
    %p319 = scmp.eq.s32.totalorder %s24, 1
    %p320 = por %p318, %p319
    %p321 = scmp.ne.s32.totalorder %s310, %s311
    %p322 = scmp.eq.s32.totalorder %s24, 0
    %p323 = por %p321, %p322
    %p324 = scmp.ne.s32.totalorder %s310, %s311
    %p325 = scmp.eq.s32.totalorder %s25, 1
    %p326 = por %p324, %p325
    %p328 = scmp.ne.s32.totalorder %s311, %s327
    %p329 = scmp.eq.s32.totalorder %s25, 0
    %p330 = por %p328, %p329
    %p331 = scmp.le.s32.totalorder 1, %s19
    %p332 = scmp.lt.s32.totalorder %s19, 3
    %p333 = pnand %p331, %p332
    %p334 = pneg %p333
    // Predicated region
    $region9: #{tpu_custom_call.1} parent=5 // pred_check
      _
    $region10: #{tpu_custom_call.1} parent=5 // pred_check_branch
      %336 = sbr.rel (%p333) target = $region12
    $region11: #{tpu_custom_call.1} parent=5 // pred_region
      %s337 = ssub.s32 %s19, 1
      // Predicated region
      $region13: #{tpu_custom_call.1} parent=11 // pred_check
        %p338 = pneg %p66
      $region14: #{tpu_custom_call.1} parent=11 // pred_check_branch
        %340 = sbr.rel (%p338) target = $region16
      $region15: #{tpu_custom_call.1} parent=11 // pred_region
        _
      $region16: #{tpu_custom_call.1} parent=11 // pred_fallthru
        _
      // Predicated region
      $region17: #{tpu_custom_call.1} parent=11 // pred_check
        %p341 = pneg %p87
      $region18: #{tpu_custom_call.1} parent=11 // pred_check_branch
        %343 = sbr.rel (%p341) target = $region20
      $region19: #{tpu_custom_call.1} parent=11 // pred_region
        _
      $region20: #{tpu_custom_call.1} parent=11 // pred_fallthru
        _
      // Predicated region
      $region21: #{tpu_custom_call.1} parent=11 // pred_check
        %p344 = pneg %p108
      $region22: #{tpu_custom_call.1} parent=11 // pred_check_branch
        %346 = sbr.rel (%p344) target = $region24
      $region23: #{tpu_custom_call.1} parent=11 // pred_region
        _
      $region24: #{tpu_custom_call.1} parent=11 // pred_fallthru
        _
      // Predicated region
      $region25: #{tpu_custom_call.1} parent=11 // pred_check
        %p347 = pneg %p129
      $region26: #{tpu_custom_call.1} parent=11 // pred_check_branch
        %349 = sbr.rel (%p347) target = $region28
      $region27: #{tpu_custom_call.1} parent=11 // pred_region
        _
      $region28: #{tpu_custom_call.1} parent=11 // pred_fallthru
        _
      // Predicated region
      $region29: #{tpu_custom_call.1} parent=11 // pred_check
        %p350 = pneg %p150
      $region30: #{tpu_custom_call.1} parent=11 // pred_check_branch
        %352 = sbr.rel (%p350) target = $region32
      $region31: #{tpu_custom_call.1} parent=11 // pred_region
        _
      $region32: #{tpu_custom_call.1} parent=11 // pred_fallthru
        _
      // Predicated region
      $region33: #{tpu_custom_call.1} parent=11 // pred_check
        %p353 = pneg %p171
      $region34: #{tpu_custom_call.1} parent=11 // pred_check_branch
        %355 = sbr.rel (%p353) target = $region36
      $region35: #{tpu_custom_call.1} parent=11 // pred_region
        _
      $region36: #{tpu_custom_call.1} parent=11 // pred_fallthru
        _
      // Predicated region
      $region37: #{tpu_custom_call.1} parent=11 // pred_check
        %p356 = pneg %p192
      $region38: #{tpu_custom_call.1} parent=11 // pred_check_branch
        %358 = sbr.rel (%p356) target = $region40
      $region39: #{tpu_custom_call.1} parent=11 // pred_region
        _
      $region40: #{tpu_custom_call.1} parent=11 // pred_fallthru
        _
      // Predicated region
      $region41: #{tpu_custom_call.1} parent=11 // pred_check
        %p359 = pneg %p213
      $region42: #{tpu_custom_call.1} parent=11 // pred_check_branch
        %361 = sbr.rel (%p359) target = $region44
      $region43: #{tpu_custom_call.1} parent=11 // pred_region
        _
      $region44: #{tpu_custom_call.1} parent=11 // pred_fallthru
        _
      // Predicated region
      $region45: #{tpu_custom_call.1} parent=11 // pred_check
        %p362 = pneg %p234
      $region46: #{tpu_custom_call.1} parent=11 // pred_check_branch
        %364 = sbr.rel (%p362) target = $region48
      $region47: #{tpu_custom_call.1} parent=11 // pred_region
        _
      $region48: #{tpu_custom_call.1} parent=11 // pred_fallthru
        _
      // Predicated region
      $region49: #{tpu_custom_call.1} parent=11 // pred_check
        %p365 = pneg %p255
      $region50: #{tpu_custom_call.1} parent=11 // pred_check_branch
        %367 = sbr.rel (%p365) target = $region52
      $region51: #{tpu_custom_call.1} parent=11 // pred_region
        _
      $region52: #{tpu_custom_call.1} parent=11 // pred_fallthru
        _
      // Predicated region
      $region53: #{tpu_custom_call.1} parent=11 // pred_check
        %p368 = pneg %p276
      $region54: #{tpu_custom_call.1} parent=11 // pred_check_branch
        %370 = sbr.rel (%p368) target = $region56
      $region55: #{tpu_custom_call.1} parent=11 // pred_region
        _
      $region56: #{tpu_custom_call.1} parent=11 // pred_fallthru
        _
      // Predicated region
      $region57: #{tpu_custom_call.1} parent=11 // pred_check
        %p371 = pneg %p297
      $region58: #{tpu_custom_call.1} parent=11 // pred_check_branch
        %373 = sbr.rel (%p371) target = $region60
      $region59: #{tpu_custom_call.1} parent=11 // pred_region
        _
      $region60: #{tpu_custom_call.1} parent=11 // pred_fallthru
        _
    $region12: #{tpu_custom_call.1} parent=5 // pred_fallthru
      _
    %p374 = scmp.lt.s32.totalorder %s19, 2
    // Predicated region
    $region61: #{tpu_custom_call.1} parent=5 // pred_check
      %p375 = pneg %p374
    $region62: #{tpu_custom_call.1} parent=5 // pred_check_branch
      %377 = sbr.rel (%p375) target = $region64
    $region63: #{tpu_custom_call.1} parent=5 // pred_region
      // Predicated region
      $region65: #{tpu_custom_call.1} parent=63 // pred_check
        %p378 = pneg %p39
      $region66: #{tpu_custom_call.1} parent=63 // pred_check_branch
        %380 = sbr.rel (%p378) target = $region68
      $region67: #{tpu_custom_call.1} parent=63 // pred_region
        %s381 = smul.u32 16, %s19
        %p382 = scmp.lt.s32.totalorder %s381, 31
        %s383 = scalar_select %p382, %s381, 31
        %s384 = smul.addr %s383, 8
        %s385 = scalar_lea.vmem %s0, %s384
        %s386 = smul.u32 16, %s19
      $region68: #{tpu_custom_call.1} parent=63 // pred_fallthru
        _
    $region64: #{tpu_custom_call.1} parent=5 // pred_fallthru
      _
    %p387 = scmp.le.s32.totalorder 1, %s19
    %p388 = scmp.lt.s32.totalorder %s19, 3
    %p389 = pnand %p387, %p388
    %p390 = pneg %p389
    // Predicated region
    $region69: #{tpu_custom_call.1} parent=5 // pred_check
      _
    $region70: #{tpu_custom_call.1} parent=5 // pred_check_branch
      %392 = sbr.rel (%p389) target = $region72
    $region71: #{tpu_custom_call.1} parent=5 // pred_region
      %s393 = ssub.s32 %s19, 1
      %s394 = smul.u32 16, %s24
      %p395 = scmp.lt.s32.totalorder %s394, 31
      %s396 = scalar_select %p395, %s394, 31
      %s397 = smul.addr %s396, 8
      %s398 = scalar_lea.vmem %s0, %s397
      %p399 = pneg %p45
      %p400 = pneg %p42
      %p401 = pneg %p66
      %p402 = pneg %p63
      %p403 = pneg %p87
      %p404 = pneg %p84
      %p405 = pneg %p108
      %p406 = pneg %p105
      %p407 = pneg %p129
      %p408 = pneg %p126
      %p409 = pneg %p150
      %p410 = pneg %p147
      %p411 = pneg %p171
      %p412 = pneg %p168
      %p413 = pneg %p192
      %p414 = pneg %p189
      %p415 = pneg %p213
      %p416 = pneg %p210
      %p417 = pneg %p234
      %p418 = pneg %p231
      %p419 = pneg %p255
      %p420 = pneg %p252
      %p421 = pneg %p276
      %p422 = pneg %p273
      %p423 = pneg %p297
      %p424 = pneg %p294
      %p425 = pneg %p323
      %p426 = pneg %p320
      %s427 = smul.u32 16, %s24
      %p428 = scmp.lt.s32.totalorder %s427, 31
      %s429 = scalar_select %p428, %s427, 31
      %s430 = smul.addr %s429, 8
      %s431 = scalar_lea.vmem %s13, %s430
      %s432 = smul.u32 16, %s24
      %p433 = scmp.lt.s32.totalorder %s432, 31
      %s434 = scalar_select %p433, %s432, 31
      %s435 = smul.addr %s434, 8
      %s436 = scalar_lea.vmem %s0, %s435
      %s437 = smul.u32 16, %s24
      %s438 = smul.u32 16, %s24
      %p439 = scmp.lt.s32.totalorder %s438, 31
      %s440 = scalar_select %p439, %s438, 31
      %s441 = smul.addr %s440, 8
      %s442 = scalar_lea.vmem %s13, %s441
      %s443 = smul.u32 16, %s24
      %v444 = vld [vmem:[%s436] sm:$0xff]
      %v445 = vld [vmem:[%s436 + $0x8] sm:$0xff]
      %v446 = vld [vmem:[%s436 + $0x10] sm:$0xff]
      %v447 = vld [vmem:[%s436 + $0x18] sm:$0xff]
      %v448 = vld [vmem:[%s436 + $0x20] sm:$0xff]
      %v449 = vld [vmem:[%s436 + $0x28] sm:$0xff]
      %v450 = vld [vmem:[%s436 + $0x30] sm:$0xff]
      %v451 = vld [vmem:[%s436 + $0x38] sm:$0xff]
      %v452 = vld [vmem:[%s436 + $0x40] sm:$0xff]
      %v453 = vld [vmem:[%s436 + $0x48] sm:$0xff]
      %v454 = vld [vmem:[%s436 + $0x50] sm:$0xff]
      %v455 = vld [vmem:[%s436 + $0x58] sm:$0xff]
      %v456 = vld [vmem:[%s436 + $0x60] sm:$0xff]
      %v457 = vld [vmem:[%s436 + $0x68] sm:$0xff]
      %v458 = vld [vmem:[%s436 + $0x70] sm:$0xff]
      %v459 = vld [vmem:[%s436 + $0x78] sm:$0xff]
      %v460 = vld [vmem:[%s1] sm:$0xff]
      %v461 = vld [vmem:[%s1 + $0x8] sm:$0xff]
      %v462 = vld [vmem:[%s1 + $0x10] sm:$0xff]
      %v463 = vld [vmem:[%s1 + $0x18] sm:$0xff]
      %v464 = vld [vmem:[%s2] sm:$0x1]
      %v466 = vperm.slane %v464, 0
      %vm468 = vcmask 261120
      %v470 = vsel %vm468, %v444, 0
      %v473 = vsel %vm468, %v445, 0
      %v476 = vsel %vm468, %v446, 0
      %v479 = vsel %vm468, %v447, 0
      %v482 = vsel %vm468, %v448, 0
      %v485 = vsel %vm468, %v449, 0
      %v488 = vsel %vm468, %v450, 0
      %v491 = vsel %vm468, %v451, 0
      %v494 = vsel %vm468, %v452, 0
      %v497 = vsel %vm468, %v453, 0
      %v500 = vsel %vm468, %v454, 0
      %v503 = vsel %vm468, %v455, 0
      %v506 = vsel %vm468, %v456, 0
      %v509 = vsel %vm468, %v457, 0
      %v512 = vsel %vm468, %v458, 0
      %v515 = vsel %vm468, %v459, 0
      %517 = vmatpush.msra.mxu0 0.0
      %518 = vmatpush.msra.mxu0 0.0
      %519 = vmatpush.msra.mxu0 0.0
      %520 = vmatpush.msra.mxu0 0.0
      %521 = vmatpush.msra.mxu0 0.0
      %522 = vmatpush.msra.mxu0 0.0
      %523 = vmatpush.msra.mxu0 0.0
      %524 = vmatpush.msra.mxu0 0.0
      %525 = vmatpush.msra.mxu0 0.0
      %526 = vmatpush.msra.mxu0 0.0
      %527 = vmatpush.msra.mxu0 0.0
      %528 = vmatpush.msra.mxu0 0.0
      %529 = vmatpush.msra.mxu0 %v463
      %530 = vmatpush.msra.mxu0 %v462
      %531 = vmatpush.msra.mxu0 %v461
      %532 = vmatpush.msra.mxu0 %v460
      %533 = vmatmul.f32.gmra.mxu0 %v470
      %v534 = vpop.f32.mrf.mxu0
      %v535 = vadd.f32 %v466, %v534
      %536 = vmatmul.f32.gmra.mxu0 %v473
      %v537 = vpop.f32.mrf.mxu0
      %v538 = vadd.f32 %v466, %v537
      %539 = vmatmul.f32.gmra.mxu0 %v476
      %v540 = vpop.f32.mrf.mxu0
      %v541 = vadd.f32 %v466, %v540
      %542 = vmatmul.f32.gmra.mxu0 %v479
      %v543 = vpop.f32.mrf.mxu0
      %v544 = vadd.f32 %v466, %v543
      %545 = vmatmul.f32.gmra.mxu0 %v482
      %v546 = vpop.f32.mrf.mxu0
      %v547 = vadd.f32 %v466, %v546
      %548 = vmatmul.f32.gmra.mxu0 %v485
      %v549 = vpop.f32.mrf.mxu0
      %v550 = vadd.f32 %v466, %v549
      %551 = vmatmul.f32.gmra.mxu0 %v488
      %v552 = vpop.f32.mrf.mxu0
      %v553 = vadd.f32 %v466, %v552
      %554 = vmatmul.f32.gmra.mxu0 %v491
      %v555 = vpop.f32.mrf.mxu0
      %v556 = vadd.f32 %v466, %v555
      %557 = vmatmul.f32.gmra.mxu0 %v494
      %v558 = vpop.f32.mrf.mxu0
      %v559 = vadd.f32 %v466, %v558
      %560 = vmatmul.f32.gmra.mxu0 %v497
      %v561 = vpop.f32.mrf.mxu0
      %v562 = vadd.f32 %v466, %v561
      %563 = vmatmul.f32.gmra.mxu0 %v500
      %v564 = vpop.f32.mrf.mxu0
      %v565 = vadd.f32 %v466, %v564
      %566 = vmatmul.f32.gmra.mxu0 %v503
      %v567 = vpop.f32.mrf.mxu0
      %v568 = vadd.f32 %v466, %v567
      %569 = vmatmul.f32.gmra.mxu0 %v506
      %v570 = vpop.f32.mrf.mxu0
      %v571 = vadd.f32 %v466, %v570
      %572 = vmatmul.f32.gmra.mxu0 %v509
      %v573 = vpop.f32.mrf.mxu0
      %v574 = vadd.f32 %v466, %v573
      %575 = vmatmul.f32.gmra.mxu0 %v512
      %v576 = vpop.f32.mrf.mxu0
      %v577 = vadd.f32 %v466, %v576
      %578 = vmatmul.f32.gmra.mxu0 %v515
      %v579 = vpop.f32.mrf.mxu0
      %v580 = vadd.f32 %v466, %v579
      %581 = vdwg.mxu0
      %v582 = vpack.c.bf16 %v538, %v535
      %v583 = vpack.c.bf16 %v544, %v541
      %v584 = vpack.c.bf16 %v550, %v547
      %v585 = vpack.c.bf16 %v556, %v553
      %v586 = vpack.c.bf16 %v562, %v559
      %v587 = vpack.c.bf16 %v568, %v565
      %v588 = vpack.c.bf16 %v574, %v571
      %v589 = vpack.c.bf16 %v580, %v577
      %v590 = vld [vmem:[%s4] sm:$0xff]
      %v591 = vld [vmem:[%s4 + $0x8] sm:$0xff]
      %v592 = vld [vmem:[%s4 + $0x10] sm:$0xff]
      %v593 = vld [vmem:[%s4 + $0x18] sm:$0xff]
      %v594 = vld [vmem:[%s4 + $0x20] sm:$0xff]
      %v595 = vld [vmem:[%s4 + $0x28] sm:$0xff]
      %v596 = vld [vmem:[%s4 + $0x30] sm:$0xff]
      %v597 = vld [vmem:[%s4 + $0x38] sm:$0xff]
      %v598 = vld [vmem:[%s4 + $0x40] sm:$0xff]
      %v599 = vld [vmem:[%s4 + $0x48] sm:$0xff]
      %v600 = vld [vmem:[%s4 + $0x50] sm:$0xff]
      %v601 = vld [vmem:[%s4 + $0x58] sm:$0xff]
      %v602 = vld [vmem:[%s4 + $0x60] sm:$0xff]
      %v603 = vld [vmem:[%s4 + $0x68] sm:$0xff]
      %v604 = vld [vmem:[%s4 + $0x70] sm:$0xff]
      %v605 = vld [vmem:[%s4 + $0x78] sm:$0xff]
      %v606 = vld [vmem:[%s3] sm:$0x1]
      %v607 = vperm.slane %v606, 0
      %v608 = vmul.f32 %v535, %v607
      %v609 = vmul.f32 %v538, %v607
      %v610 = vmul.f32 %v541, %v607
      %v611 = vmul.f32 %v544, %v607
      %v612 = vmul.f32 %v547, %v607
      %v613 = vmul.f32 %v550, %v607
      %v614 = vmul.f32 %v553, %v607
      %v615 = vmul.f32 %v556, %v607
      %v616 = vmul.f32 %v559, %v607
      %v617 = vmul.f32 %v562, %v607
      %v618 = vmul.f32 %v565, %v607
      %v619 = vmul.f32 %v568, %v607
      %v620 = vmul.f32 %v571, %v607
      %v621 = vmul.f32 %v574, %v607
      %v622 = vmul.f32 %v577, %v607
      %v623 = vmul.f32 %v580, %v607
      %v624 = vpack.c.bf16 %v609, %v608
      %v625 = vpack.c.bf16 %v611, %v610
      %v626 = vpack.c.bf16 %v613, %v612
      %v627 = vpack.c.bf16 %v615, %v614
      %v628 = vpack.c.bf16 %v617, %v616
      %v629 = vpack.c.bf16 %v619, %v618
      %v630 = vpack.c.bf16 %v621, %v620
      %v631 = vpack.c.bf16 %v623, %v622
      %640 = vrot.lane.b32.xlu0 %v582, 96
      %v641 = vpop.permute.xlu0 %640
      %642 = vrot.lane.b32.xlu0 %v583, 96
      %v643 = vpop.permute.xlu0 %642
      %644 = vrot.lane.b32.xlu0 %v584, 96
      %v645 = vpop.permute.xlu0 %644
      %646 = vrot.lane.b32.xlu0 %v585, 96
      %v647 = vpop.permute.xlu0 %646
      %648 = vrot.lane.b32.xlu0 %v586, 96
      %v649 = vpop.permute.xlu0 %648
      %650 = vrot.lane.b32.xlu0 %v587, 96
      %v651 = vpop.permute.xlu0 %650
      %652 = vrot.lane.b32.xlu0 %v588, 96
      %v653 = vpop.permute.xlu0 %652
      %654 = vrot.lane.b32.xlu0 %v589, 96
      %v655 = vpop.permute.xlu0 %654
      %v657 = vsel %vm468, %v624, 0
      %v660 = vsel %vm468, %v625, 0
      %v663 = vsel %vm468, %v626, 0
      %v666 = vsel %vm468, %v627, 0
      %v669 = vsel %vm468, %v628, 0
      %v672 = vsel %vm468, %v629, 0
      %v675 = vsel %vm468, %v630, 0
      %v678 = vsel %vm468, %v631, 0
      %v681 = vsel %vm468, %v641, 0
      %v684 = vsel %vm468, %v643, 0
      %v687 = vsel %vm468, %v645, 0
      %v690 = vsel %vm468, %v647, 0
      %v693 = vsel %vm468, %v649, 0
      %v696 = vsel %vm468, %v651, 0
      %v699 = vsel %vm468, %v653, 0
      %v702 = vsel %vm468, %v655, 0
      %704 = vmatpush.bf16.xpose.msra.mxu0 %v702
      %705 = vmatpush.bf16.xpose.msra.mxu0 %v699
      %706 = vmatpush.bf16.xpose.msra.mxu0 %v696
      %707 = vmatpush.bf16.xpose.msra.mxu0 %v693
      %708 = vmatpush.bf16.xpose.msra.mxu0 %v690
      %709 = vmatpush.bf16.xpose.msra.mxu0 %v687
      %710 = vmatpush.bf16.xpose.msra.mxu0 %v684
      %711 = vmatpush.bf16.xpose.msra.mxu0 %v681
      %712 = vmatmul.bf16.gmra.mxu0 %v657
      %v713 = vpop.f32.mrf.mxu0
      %v714 = vadd.f32 %v590, %v713
      %v715 = vpop.f32.mrf.mxu0
      %v716 = vadd.f32 %v591, %v715
      %717 = vmatmul.bf16.gmra.mxu0 %v660
      %v718 = vpop.f32.mrf.mxu0
      %v719 = vadd.f32 %v592, %v718
      %v720 = vpop.f32.mrf.mxu0
      %v721 = vadd.f32 %v593, %v720
      %722 = vmatmul.bf16.gmra.mxu0 %v663
      %v723 = vpop.f32.mrf.mxu0
      %v724 = vadd.f32 %v594, %v723
      %v725 = vpop.f32.mrf.mxu0
      %v726 = vadd.f32 %v595, %v725
      %727 = vmatmul.bf16.gmra.mxu0 %v666
      %v728 = vpop.f32.mrf.mxu0
      %v729 = vadd.f32 %v596, %v728
      %v730 = vpop.f32.mrf.mxu0
      %v731 = vadd.f32 %v597, %v730
      %732 = vmatmul.bf16.gmra.mxu0 %v669
      %v733 = vpop.f32.mrf.mxu0
      %v734 = vadd.f32 %v598, %v733
      %v735 = vpop.f32.mrf.mxu0
      %v736 = vadd.f32 %v599, %v735
      %737 = vmatmul.bf16.gmra.mxu0 %v672
      %v738 = vpop.f32.mrf.mxu0
      %v739 = vadd.f32 %v600, %v738
      %v740 = vpop.f32.mrf.mxu0
      %v741 = vadd.f32 %v601, %v740
      %742 = vmatmul.bf16.gmra.mxu0 %v675
      %v743 = vpop.f32.mrf.mxu0
      %v744 = vadd.f32 %v602, %v743
      %v745 = vpop.f32.mrf.mxu0
      %v746 = vadd.f32 %v603, %v745
      %747 = vmatmul.bf16.gmra.mxu0 %v678
      %v748 = vpop.f32.mrf.mxu0
      %v749 = vadd.f32 %v604, %v748
      %v750 = vpop.f32.mrf.mxu0
      %v751 = vadd.f32 %v605, %v750
      %752 = vdwg.mxu0
      %753 = vmax.xlane.f32.xlu0 %v714
      %v754 = vpop.xlane.xlu0 %753
      %755 = vmax.xlane.f32.xlu0 %v716
      %v756 = vpop.xlane.xlu0 %755
      %757 = vmax.xlane.f32.xlu0 %v719
      %v758 = vpop.xlane.xlu0 %757
      %759 = vmax.xlane.f32.xlu0 %v721
      %v760 = vpop.xlane.xlu0 %759
      %761 = vmax.xlane.f32.xlu0 %v724
      %v762 = vpop.xlane.xlu0 %761
      %763 = vmax.xlane.f32.xlu0 %v726
      %v764 = vpop.xlane.xlu0 %763
      %765 = vmax.xlane.f32.xlu0 %v729
      %v766 = vpop.xlane.xlu0 %765
      %767 = vmax.xlane.f32.xlu0 %v731
      %v768 = vpop.xlane.xlu0 %767
      %769 = vmax.xlane.f32.xlu0 %v734
      %v770 = vpop.xlane.xlu0 %769
      %771 = vmax.xlane.f32.xlu0 %v736
      %v772 = vpop.xlane.xlu0 %771
      %773 = vmax.xlane.f32.xlu0 %v739
      %v774 = vpop.xlane.xlu0 %773
      %775 = vmax.xlane.f32.xlu0 %v741
      %v776 = vpop.xlane.xlu0 %775
      %777 = vmax.xlane.f32.xlu0 %v744
      %v778 = vpop.xlane.xlu0 %777
      %779 = vmax.xlane.f32.xlu0 %v746
      %v780 = vpop.xlane.xlu0 %779
      %781 = vmax.xlane.f32.xlu0 %v749
      %v782 = vpop.xlane.xlu0 %781
      %783 = vmax.xlane.f32.xlu0 %v751
      %v784 = vpop.xlane.xlu0 %783
      %v785 = vsub.f32 %v714, %v754
      %v786 = vsub.f32 %v716, %v756
      %v787 = vsub.f32 %v719, %v758
      %v788 = vsub.f32 %v721, %v760
      %v789 = vsub.f32 %v724, %v762
      %v790 = vsub.f32 %v726, %v764
      %v791 = vsub.f32 %v729, %v766
      %v792 = vsub.f32 %v731, %v768
      %v793 = vsub.f32 %v734, %v770
      %v794 = vsub.f32 %v736, %v772
      %v795 = vsub.f32 %v739, %v774
      %v796 = vsub.f32 %v741, %v776
      %v797 = vsub.f32 %v744, %v778
      %v798 = vsub.f32 %v746, %v780
      %v799 = vsub.f32 %v749, %v782
      %v800 = vsub.f32 %v751, %v784
      %v801 = vmul.f32 %v785, 1.442695
      %v802 = vpow.pop %v801
      %v803 = vmul.f32 %v786, 1.442695
      %v804 = vpow.pop %v803
      %v805 = vmul.f32 %v787, 1.442695
      %v806 = vpow.pop %v805
      %v807 = vmul.f32 %v788, 1.442695
      %v808 = vpow.pop %v807
      %v809 = vmul.f32 %v789, 1.442695
      %v810 = vpow.pop %v809
      %v811 = vmul.f32 %v790, 1.442695
      %v812 = vpow.pop %v811
      %v813 = vmul.f32 %v791, 1.442695
      %v814 = vpow.pop %v813
      %v815 = vmul.f32 %v792, 1.442695
      %v816 = vpow.pop %v815
      %v817 = vmul.f32 %v793, 1.442695
      %v818 = vpow.pop %v817
      %v819 = vmul.f32 %v794, 1.442695
      %v820 = vpow.pop %v819
      %v821 = vmul.f32 %v795, 1.442695
      %v822 = vpow.pop %v821
      %v823 = vmul.f32 %v796, 1.442695
      %v824 = vpow.pop %v823
      %v825 = vmul.f32 %v797, 1.442695
      %v826 = vpow.pop %v825
      %v827 = vmul.f32 %v798, 1.442695
      %v828 = vpow.pop %v827
      %v829 = vmul.f32 %v799, 1.442695
      %v830 = vpow.pop %v829
      %v831 = vmul.f32 %v800, 1.442695
      %v832 = vpow.pop %v831
      %833 = vadd.xlane.f32.xlu0 %v802
      %v834 = vpop.xlane.xlu0 %833
      %835 = vadd.xlane.f32.xlu0 %v804
      %v836 = vpop.xlane.xlu0 %835
      %837 = vadd.xlane.f32.xlu0 %v806
      %v838 = vpop.xlane.xlu0 %837
      %839 = vadd.xlane.f32.xlu0 %v808
      %v840 = vpop.xlane.xlu0 %839
      %841 = vadd.xlane.f32.xlu0 %v810
      %v842 = vpop.xlane.xlu0 %841
      %843 = vadd.xlane.f32.xlu0 %v812
      %v844 = vpop.xlane.xlu0 %843
      %845 = vadd.xlane.f32.xlu0 %v814
      %v846 = vpop.xlane.xlu0 %845
      %847 = vadd.xlane.f32.xlu0 %v816
      %v848 = vpop.xlane.xlu0 %847
      %849 = vadd.xlane.f32.xlu0 %v818
      %v850 = vpop.xlane.xlu0 %849
      %851 = vadd.xlane.f32.xlu0 %v820
      %v852 = vpop.xlane.xlu0 %851
      %853 = vadd.xlane.f32.xlu0 %v822
      %v854 = vpop.xlane.xlu0 %853
      %855 = vadd.xlane.f32.xlu0 %v824
      %v856 = vpop.xlane.xlu0 %855
      %857 = vadd.xlane.f32.xlu0 %v826
      %v858 = vpop.xlane.xlu0 %857
      %859 = vadd.xlane.f32.xlu0 %v828
      %v860 = vpop.xlane.xlu0 %859
      %861 = vadd.xlane.f32.xlu0 %v830
      %v862 = vpop.xlane.xlu0 %861
      %863 = vadd.xlane.f32.xlu0 %v832
      %v864 = vpop.xlane.xlu0 %863
      %v865 = vrcp.pop %v834
      %v866 = vrcp.pop %v836
      %v867 = vrcp.pop %v838
      %v868 = vrcp.pop %v840
      %v869 = vrcp.pop %v842
      %v870 = vrcp.pop %v844
      %v871 = vrcp.pop %v846
      %v872 = vrcp.pop %v848
      %v873 = vrcp.pop %v850
      %v874 = vrcp.pop %v852
      %v875 = vrcp.pop %v854
      %v876 = vrcp.pop %v856
      %v877 = vrcp.pop %v858
      %v878 = vrcp.pop %v860
      %v879 = vrcp.pop %v862
      %v880 = vrcp.pop %v864
      %v881 = vmul.f32 %v802, %v865
      %v882 = vmul.f32 %v804, %v866
      %v883 = vmul.f32 %v806, %v867
      %v884 = vmul.f32 %v808, %v868
      %v885 = vmul.f32 %v810, %v869
      %v886 = vmul.f32 %v812, %v870
      %v887 = vmul.f32 %v814, %v871
      %v888 = vmul.f32 %v816, %v872
      %v889 = vmul.f32 %v818, %v873
      %v890 = vmul.f32 %v820, %v874
      %v891 = vmul.f32 %v822, %v875
      %v892 = vmul.f32 %v824, %v876
      %v893 = vmul.f32 %v826, %v877
      %v894 = vmul.f32 %v828, %v878
      %v895 = vmul.f32 %v830, %v879
      %v896 = vmul.f32 %v832, %v880
      %v897 = vpack.c.bf16 %v882, %v881
      %v898 = vpack.c.bf16 %v884, %v883
      %v899 = vpack.c.bf16 %v886, %v885
      %v900 = vpack.c.bf16 %v888, %v887
      %v901 = vpack.c.bf16 %v890, %v889
      %v902 = vpack.c.bf16 %v892, %v891
      %v903 = vpack.c.bf16 %v894, %v893
      %v904 = vpack.c.bf16 %v896, %v895
      %905 = vrot.lane.b32.xlu0 %v582, 64
      %v906 = vpop.permute.xlu0 %905
      %907 = vrot.lane.b32.xlu0 %v583, 64
      %v908 = vpop.permute.xlu0 %907
      %909 = vrot.lane.b32.xlu0 %v584, 64
      %v910 = vpop.permute.xlu0 %909
      %911 = vrot.lane.b32.xlu0 %v585, 64
      %v912 = vpop.permute.xlu0 %911
      %913 = vrot.lane.b32.xlu0 %v586, 64
      %v914 = vpop.permute.xlu0 %913
      %915 = vrot.lane.b32.xlu0 %v587, 64
      %v916 = vpop.permute.xlu0 %915
      %917 = vrot.lane.b32.xlu0 %v588, 64
      %v918 = vpop.permute.xlu0 %917
      %919 = vrot.lane.b32.xlu0 %v589, 64
      %v920 = vpop.permute.xlu0 %919
      %929 = vmatpush.bf16.msra.mxu0 %v920
      %930 = vmatpush.bf16.msra.mxu0 %v918
      %931 = vmatpush.bf16.msra.mxu0 %v916
      %932 = vmatpush.bf16.msra.mxu0 %v914
      %933 = vmatpush.bf16.msra.mxu0 %v912
      %934 = vmatpush.bf16.msra.mxu0 %v910
      %935 = vmatpush.bf16.msra.mxu0 %v908
      %936 = vmatpush.bf16.msra.mxu0 %v906
      %937 = vmatmul.bf16.gmra.mxu0 %v897
      %v938 = vpop.f32.mrf.mxu0
      %v939 = vadd.f32 0.0, %v938
      %v940 = vpop.f32.mrf.mxu0
      %v941 = vadd.f32 0.0, %v940
      %942 = vmatmul.bf16.gmra.mxu0 %v898
      %v943 = vpop.f32.mrf.mxu0
      %v944 = vadd.f32 0.0, %v943
      %v945 = vpop.f32.mrf.mxu0
      %v946 = vadd.f32 0.0, %v945
      %947 = vmatmul.bf16.gmra.mxu0 %v899
      %v948 = vpop.f32.mrf.mxu0
      %v949 = vadd.f32 0.0, %v948
      %v950 = vpop.f32.mrf.mxu0
      %v951 = vadd.f32 0.0, %v950
      %952 = vmatmul.bf16.gmra.mxu0 %v900
      %v953 = vpop.f32.mrf.mxu0
      %v954 = vadd.f32 0.0, %v953
      %v955 = vpop.f32.mrf.mxu0
      %v956 = vadd.f32 0.0, %v955
      %957 = vmatmul.bf16.gmra.mxu0 %v901
      %v958 = vpop.f32.mrf.mxu0
      %v959 = vadd.f32 0.0, %v958
      %v960 = vpop.f32.mrf.mxu0
      %v961 = vadd.f32 0.0, %v960
      %962 = vmatmul.bf16.gmra.mxu0 %v902
      %v963 = vpop.f32.mrf.mxu0
      %v964 = vadd.f32 0.0, %v963
      %v965 = vpop.f32.mrf.mxu0
      %v966 = vadd.f32 0.0, %v965
      %967 = vmatmul.bf16.gmra.mxu0 %v903
      %v968 = vpop.f32.mrf.mxu0
      %v969 = vadd.f32 0.0, %v968
      %v970 = vpop.f32.mrf.mxu0
      %v971 = vadd.f32 0.0, %v970
      %972 = vmatmul.bf16.gmra.mxu0 %v904
      %v973 = vpop.f32.mrf.mxu0
      %v974 = vadd.f32 0.0, %v973
      %v975 = vpop.f32.mrf.mxu0
      %v976 = vadd.f32 0.0, %v975
      %977 = vdwg.mxu0
      %v978 = vmul.f32 %v939, %v607
      %v979 = vmul.f32 %v941, %v607
      %v980 = vmul.f32 %v944, %v607
      %v981 = vmul.f32 %v946, %v607
      %v982 = vmul.f32 %v949, %v607
      %v983 = vmul.f32 %v951, %v607
      %v984 = vmul.f32 %v954, %v607
      %v985 = vmul.f32 %v956, %v607
      %v986 = vmul.f32 %v959, %v607
      %v987 = vmul.f32 %v961, %v607
      %v988 = vmul.f32 %v964, %v607
      %v989 = vmul.f32 %v966, %v607
      %v990 = vmul.f32 %v969, %v607
      %v991 = vmul.f32 %v971, %v607
      %v992 = vmul.f32 %v974, %v607
      %v993 = vmul.f32 %v976, %v607
      %v994 = vadd.f32 %v978, 0.0
      %v995 = vadd.f32 %v979, 0.0
      %v996 = vadd.f32 %v980, 0.0
      %v997 = vadd.f32 %v981, 0.0
      %v998 = vadd.f32 %v982, 0.0
      %v999 = vadd.f32 %v983, 0.0
      %v1000 = vadd.f32 %v984, 0.0
      %v1001 = vadd.f32 %v985, 0.0
      %v1002 = vadd.f32 %v986, 0.0
      %v1003 = vadd.f32 %v987, 0.0
      %v1004 = vadd.f32 %v988, 0.0
      %v1005 = vadd.f32 %v989, 0.0
      %v1006 = vadd.f32 %v990, 0.0
      %v1007 = vadd.f32 %v991, 0.0
      %v1008 = vadd.f32 %v992, 0.0
      %v1009 = vadd.f32 %v993, 0.0
      %v1010 = vld [vmem:[%s3 + $0x1] sm:$0x1]
      %v1011 = vperm.slane %v1010, 0
      %v1012 = vmul.f32 %v535, %v1011
      %v1013 = vmul.f32 %v538, %v1011
      %v1014 = vmul.f32 %v541, %v1011
      %v1015 = vmul.f32 %v544, %v1011
      %v1016 = vmul.f32 %v547, %v1011
      %v1017 = vmul.f32 %v550, %v1011
      %v1018 = vmul.f32 %v553, %v1011
      %v1019 = vmul.f32 %v556, %v1011
      %v1020 = vmul.f32 %v559, %v1011
      %v1021 = vmul.f32 %v562, %v1011
      %v1022 = vmul.f32 %v565, %v1011
      %v1023 = vmul.f32 %v568, %v1011
      %v1024 = vmul.f32 %v571, %v1011
      %v1025 = vmul.f32 %v574, %v1011
      %v1026 = vmul.f32 %v577, %v1011
      %v1027 = vmul.f32 %v580, %v1011
      %v1028 = vpack.c.bf16 %v1013, %v1012
      %v1029 = vpack.c.bf16 %v1015, %v1014
      %v1030 = vpack.c.bf16 %v1017, %v1016
      %v1031 = vpack.c.bf16 %v1019, %v1018
      %v1032 = vpack.c.bf16 %v1021, %v1020
      %v1033 = vpack.c.bf16 %v1023, %v1022
      %v1034 = vpack.c.bf16 %v1025, %v1024
      %v1035 = vpack.c.bf16 %v1027, %v1026
      %v1037 = vsel %vm468, %v1028, 0
      %v1040 = vsel %vm468, %v1029, 0
      %v1043 = vsel %vm468, %v1030, 0
      %v1046 = vsel %vm468, %v1031, 0
      %v1049 = vsel %vm468, %v1032, 0
      %v1052 = vsel %vm468, %v1033, 0
      %v1055 = vsel %vm468, %v1034, 0
      %v1058 = vsel %vm468, %v1035, 0
      %1060 = vmatpush.bf16.xpose.msra.mxu0 %v702
      %1061 = vmatpush.bf16.xpose.msra.mxu0 %v699
      %1062 = vmatpush.bf16.xpose.msra.mxu0 %v696
      %1063 = vmatpush.bf16.xpose.msra.mxu0 %v693
      %1064 = vmatpush.bf16.xpose.msra.mxu0 %v690
      %1065 = vmatpush.bf16.xpose.msra.mxu0 %v687
      %1066 = vmatpush.bf16.xpose.msra.mxu0 %v684
      %1067 = vmatpush.bf16.xpose.msra.mxu0 %v681
      %1068 = vmatmul.bf16.gmra.mxu0 %v1037
      %v1069 = vpop.f32.mrf.mxu0
      %v1070 = vadd.f32 %v590, %v1069
      %v1071 = vpop.f32.mrf.mxu0
      %v1072 = vadd.f32 %v591, %v1071
      %1073 = vmatmul.bf16.gmra.mxu0 %v1040
      %v1074 = vpop.f32.mrf.mxu0
      %v1075 = vadd.f32 %v592, %v1074
      %v1076 = vpop.f32.mrf.mxu0
      %v1077 = vadd.f32 %v593, %v1076
      %1078 = vmatmul.bf16.gmra.mxu0 %v1043
      %v1079 = vpop.f32.mrf.mxu0
      %v1080 = vadd.f32 %v594, %v1079
      %v1081 = vpop.f32.mrf.mxu0
      %v1082 = vadd.f32 %v595, %v1081
      %1083 = vmatmul.bf16.gmra.mxu0 %v1046
      %v1084 = vpop.f32.mrf.mxu0
      %v1085 = vadd.f32 %v596, %v1084
      %v1086 = vpop.f32.mrf.mxu0
      %v1087 = vadd.f32 %v597, %v1086
      %1088 = vmatmul.bf16.gmra.mxu0 %v1049
      %v1089 = vpop.f32.mrf.mxu0
      %v1090 = vadd.f32 %v598, %v1089
      %v1091 = vpop.f32.mrf.mxu0
      %v1092 = vadd.f32 %v599, %v1091
      %1093 = vmatmul.bf16.gmra.mxu0 %v1052
      %v1094 = vpop.f32.mrf.mxu0
      %v1095 = vadd.f32 %v600, %v1094
      %v1096 = vpop.f32.mrf.mxu0
      %v1097 = vadd.f32 %v601, %v1096
      %1098 = vmatmul.bf16.gmra.mxu0 %v1055
      %v1099 = vpop.f32.mrf.mxu0
      %v1100 = vadd.f32 %v602, %v1099
      %v1101 = vpop.f32.mrf.mxu0
      %v1102 = vadd.f32 %v603, %v1101
      %1103 = vmatmul.bf16.gmra.mxu0 %v1058
      %v1104 = vpop.f32.mrf.mxu0
      %v1105 = vadd.f32 %v604, %v1104
      %v1106 = vpop.f32.mrf.mxu0
      %v1107 = vadd.f32 %v605, %v1106
      %1108 = vdwg.mxu0
      %1109 = vmax.xlane.f32.xlu0 %v1070
      %v1110 = vpop.xlane.xlu0 %1109
      %1111 = vmax.xlane.f32.xlu0 %v1072
      %v1112 = vpop.xlane.xlu0 %1111
      %1113 = vmax.xlane.f32.xlu0 %v1075
      %v1114 = vpop.xlane.xlu0 %1113
      %1115 = vmax.xlane.f32.xlu0 %v1077
      %v1116 = vpop.xlane.xlu0 %1115
      %1117 = vmax.xlane.f32.xlu0 %v1080
      %v1118 = vpop.xlane.xlu0 %1117
      %1119 = vmax.xlane.f32.xlu0 %v1082
      %v1120 = vpop.xlane.xlu0 %1119
      %1121 = vmax.xlane.f32.xlu0 %v1085
      %v1122 = vpop.xlane.xlu0 %1121
      %1123 = vmax.xlane.f32.xlu0 %v1087
      %v1124 = vpop.xlane.xlu0 %1123
      %1125 = vmax.xlane.f32.xlu0 %v1090
      %v1126 = vpop.xlane.xlu0 %1125
      %1127 = vmax.xlane.f32.xlu0 %v1092
      %v1128 = vpop.xlane.xlu0 %1127
      %1129 = vmax.xlane.f32.xlu0 %v1095
      %v1130 = vpop.xlane.xlu0 %1129
      %1131 = vmax.xlane.f32.xlu0 %v1097
      %v1132 = vpop.xlane.xlu0 %1131
      %1133 = vmax.xlane.f32.xlu0 %v1100
      %v1134 = vpop.xlane.xlu0 %1133
      %1135 = vmax.xlane.f32.xlu0 %v1102
      %v1136 = vpop.xlane.xlu0 %1135
      %1137 = vmax.xlane.f32.xlu0 %v1105
      %v1138 = vpop.xlane.xlu0 %1137
      %1139 = vmax.xlane.f32.xlu0 %v1107
      %v1140 = vpop.xlane.xlu0 %1139
      %v1141 = vsub.f32 %v1070, %v1110
      %v1142 = vsub.f32 %v1072, %v1112
      %v1143 = vsub.f32 %v1075, %v1114
      %v1144 = vsub.f32 %v1077, %v1116
      %v1145 = vsub.f32 %v1080, %v1118
      %v1146 = vsub.f32 %v1082, %v1120
      %v1147 = vsub.f32 %v1085, %v1122
      %v1148 = vsub.f32 %v1087, %v1124
      %v1149 = vsub.f32 %v1090, %v1126
      %v1150 = vsub.f32 %v1092, %v1128
      %v1151 = vsub.f32 %v1095, %v1130
      %v1152 = vsub.f32 %v1097, %v1132
      %v1153 = vsub.f32 %v1100, %v1134
      %v1154 = vsub.f32 %v1102, %v1136
      %v1155 = vsub.f32 %v1105, %v1138
      %v1156 = vsub.f32 %v1107, %v1140
      %v1157 = vmul.f32 %v1141, 1.442695
      %v1158 = vpow.pop %v1157
      %v1159 = vmul.f32 %v1142, 1.442695
      %v1160 = vpow.pop %v1159
      %v1161 = vmul.f32 %v1143, 1.442695
      %v1162 = vpow.pop %v1161
      %v1163 = vmul.f32 %v1144, 1.442695
      %v1164 = vpow.pop %v1163
      %v1165 = vmul.f32 %v1145, 1.442695
      %v1166 = vpow.pop %v1165
      %v1167 = vmul.f32 %v1146, 1.442695
      %v1168 = vpow.pop %v1167
      %v1169 = vmul.f32 %v1147, 1.442695
      %v1170 = vpow.pop %v1169
      %v1171 = vmul.f32 %v1148, 1.442695
      %v1172 = vpow.pop %v1171
      %v1173 = vmul.f32 %v1149, 1.442695
      %v1174 = vpow.pop %v1173
      %v1175 = vmul.f32 %v1150, 1.442695
      %v1176 = vpow.pop %v1175
      %v1177 = vmul.f32 %v1151, 1.442695
      %v1178 = vpow.pop %v1177
      %v1179 = vmul.f32 %v1152, 1.442695
      %v1180 = vpow.pop %v1179
      %v1181 = vmul.f32 %v1153, 1.442695
      %v1182 = vpow.pop %v1181
      %v1183 = vmul.f32 %v1154, 1.442695
      %v1184 = vpow.pop %v1183
      %v1185 = vmul.f32 %v1155, 1.442695
      %v1186 = vpow.pop %v1185
      %v1187 = vmul.f32 %v1156, 1.442695
      %v1188 = vpow.pop %v1187
      %1189 = vadd.xlane.f32.xlu0 %v1158
      %v1190 = vpop.xlane.xlu0 %1189
      %1191 = vadd.xlane.f32.xlu0 %v1160
      %v1192 = vpop.xlane.xlu0 %1191
      %1193 = vadd.xlane.f32.xlu0 %v1162
      %v1194 = vpop.xlane.xlu0 %1193
      %1195 = vadd.xlane.f32.xlu0 %v1164
      %v1196 = vpop.xlane.xlu0 %1195
      %1197 = vadd.xlane.f32.xlu0 %v1166
      %v1198 = vpop.xlane.xlu0 %1197
      %1199 = vadd.xlane.f32.xlu0 %v1168
      %v1200 = vpop.xlane.xlu0 %1199
      %1201 = vadd.xlane.f32.xlu0 %v1170
      %v1202 = vpop.xlane.xlu0 %1201
      %1203 = vadd.xlane.f32.xlu0 %v1172
      %v1204 = vpop.xlane.xlu0 %1203
      %1205 = vadd.xlane.f32.xlu0 %v1174
      %v1206 = vpop.xlane.xlu0 %1205
      %1207 = vadd.xlane.f32.xlu0 %v1176
      %v1208 = vpop.xlane.xlu0 %1207
      %1209 = vadd.xlane.f32.xlu0 %v1178
      %v1210 = vpop.xlane.xlu0 %1209
      %1211 = vadd.xlane.f32.xlu0 %v1180
      %v1212 = vpop.xlane.xlu0 %1211
      %1213 = vadd.xlane.f32.xlu0 %v1182
      %v1214 = vpop.xlane.xlu0 %1213
      %1215 = vadd.xlane.f32.xlu0 %v1184
      %v1216 = vpop.xlane.xlu0 %1215
      %1217 = vadd.xlane.f32.xlu0 %v1186
      %v1218 = vpop.xlane.xlu0 %1217
      %1219 = vadd.xlane.f32.xlu0 %v1188
      %v1220 = vpop.xlane.xlu0 %1219
      %v1221 = vrcp.pop %v1190
      %v1222 = vrcp.pop %v1192
      %v1223 = vrcp.pop %v1194
      %v1224 = vrcp.pop %v1196
      %v1225 = vrcp.pop %v1198
      %v1226 = vrcp.pop %v1200
      %v1227 = vrcp.pop %v1202
      %v1228 = vrcp.pop %v1204
      %v1229 = vrcp.pop %v1206
      %v1230 = vrcp.pop %v1208
      %v1231 = vrcp.pop %v1210
      %v1232 = vrcp.pop %v1212
      %v1233 = vrcp.pop %v1214
      %v1234 = vrcp.pop %v1216
      %v1235 = vrcp.pop %v1218
      %v1236 = vrcp.pop %v1220
      %v1237 = vmul.f32 %v1158, %v1221
      %v1238 = vmul.f32 %v1160, %v1222
      %v1239 = vmul.f32 %v1162, %v1223
      %v1240 = vmul.f32 %v1164, %v1224
      %v1241 = vmul.f32 %v1166, %v1225
      %v1242 = vmul.f32 %v1168, %v1226
      %v1243 = vmul.f32 %v1170, %v1227
      %v1244 = vmul.f32 %v1172, %v1228
      %v1245 = vmul.f32 %v1174, %v1229
      %v1246 = vmul.f32 %v1176, %v1230
      %v1247 = vmul.f32 %v1178, %v1231
      %v1248 = vmul.f32 %v1180, %v1232
      %v1249 = vmul.f32 %v1182, %v1233
      %v1250 = vmul.f32 %v1184, %v1234
      %v1251 = vmul.f32 %v1186, %v1235
      %v1252 = vmul.f32 %v1188, %v1236
      %v1253 = vpack.c.bf16 %v1238, %v1237
      %v1254 = vpack.c.bf16 %v1240, %v1239
      %v1255 = vpack.c.bf16 %v1242, %v1241
      %v1256 = vpack.c.bf16 %v1244, %v1243
      %v1257 = vpack.c.bf16 %v1246, %v1245
      %v1258 = vpack.c.bf16 %v1248, %v1247
      %v1259 = vpack.c.bf16 %v1250, %v1249
      %v1260 = vpack.c.bf16 %v1252, %v1251
      %1261 = vmatpush.bf16.msra.mxu0 %v920
      %1262 = vmatpush.bf16.msra.mxu0 %v918
      %1263 = vmatpush.bf16.msra.mxu0 %v916
      %1264 = vmatpush.bf16.msra.mxu0 %v914
      %1265 = vmatpush.bf16.msra.mxu0 %v912
      %1266 = vmatpush.bf16.msra.mxu0 %v910
      %1267 = vmatpush.bf16.msra.mxu0 %v908
      %1268 = vmatpush.bf16.msra.mxu0 %v906
      %1269 = vmatmul.bf16.gmra.mxu0 %v1253
      %v1270 = vpop.f32.mrf.mxu0
      %v1271 = vadd.f32 0.0, %v1270
      %v1272 = vpop.f32.mrf.mxu0
      %v1273 = vadd.f32 0.0, %v1272
      %1274 = vmatmul.bf16.gmra.mxu0 %v1254
      %v1275 = vpop.f32.mrf.mxu0
      %v1276 = vadd.f32 0.0, %v1275
      %v1277 = vpop.f32.mrf.mxu0
      %v1278 = vadd.f32 0.0, %v1277
      %1279 = vmatmul.bf16.gmra.mxu0 %v1255
      %v1280 = vpop.f32.mrf.mxu0
      %v1281 = vadd.f32 0.0, %v1280
      %v1282 = vpop.f32.mrf.mxu0
      %v1283 = vadd.f32 0.0, %v1282
      %1284 = vmatmul.bf16.gmra.mxu0 %v1256
      %v1285 = vpop.f32.mrf.mxu0
      %v1286 = vadd.f32 0.0, %v1285
      %v1287 = vpop.f32.mrf.mxu0
      %v1288 = vadd.f32 0.0, %v1287
      %1289 = vmatmul.bf16.gmra.mxu0 %v1257
      %v1290 = vpop.f32.mrf.mxu0
      %v1291 = vadd.f32 0.0, %v1290
      %v1292 = vpop.f32.mrf.mxu0
      %v1293 = vadd.f32 0.0, %v1292
      %1294 = vmatmul.bf16.gmra.mxu0 %v1258
      %v1295 = vpop.f32.mrf.mxu0
      %v1296 = vadd.f32 0.0, %v1295
      %v1297 = vpop.f32.mrf.mxu0
      %v1298 = vadd.f32 0.0, %v1297
      %1299 = vmatmul.bf16.gmra.mxu0 %v1259
      %v1300 = vpop.f32.mrf.mxu0
      %v1301 = vadd.f32 0.0, %v1300
      %v1302 = vpop.f32.mrf.mxu0
      %v1303 = vadd.f32 0.0, %v1302
      %1304 = vmatmul.bf16.gmra.mxu0 %v1260
      %v1305 = vpop.f32.mrf.mxu0
      %v1306 = vadd.f32 0.0, %v1305
      %v1307 = vpop.f32.mrf.mxu0
      %v1308 = vadd.f32 0.0, %v1307
      %1309 = vdwg.mxu0
      %v1310 = vmul.f32 %v1271, %v1011
      %v1311 = vmul.f32 %v1273, %v1011
      %v1312 = vmul.f32 %v1276, %v1011
      %v1313 = vmul.f32 %v1278, %v1011
      %v1314 = vmul.f32 %v1281, %v1011
      %v1315 = vmul.f32 %v1283, %v1011
      %v1316 = vmul.f32 %v1286, %v1011
      %v1317 = vmul.f32 %v1288, %v1011
      %v1318 = vmul.f32 %v1291, %v1011
      %v1319 = vmul.f32 %v1293, %v1011
      %v1320 = vmul.f32 %v1296, %v1011
      %v1321 = vmul.f32 %v1298, %v1011
      %v1322 = vmul.f32 %v1301, %v1011
      %v1323 = vmul.f32 %v1303, %v1011
      %v1324 = vmul.f32 %v1306, %v1011
      %v1325 = vmul.f32 %v1308, %v1011
      %v1326 = vadd.f32 %v994, %v1310
      %v1327 = vadd.f32 %v995, %v1311
      %v1328 = vadd.f32 %v996, %v1312
      %v1329 = vadd.f32 %v997, %v1313
      %v1330 = vadd.f32 %v998, %v1314
      %v1331 = vadd.f32 %v999, %v1315
      %v1332 = vadd.f32 %v1000, %v1316
      %v1333 = vadd.f32 %v1001, %v1317
      %v1334 = vadd.f32 %v1002, %v1318
      %v1335 = vadd.f32 %v1003, %v1319
      %v1336 = vadd.f32 %v1004, %v1320
      %v1337 = vadd.f32 %v1005, %v1321
      %v1338 = vadd.f32 %v1006, %v1322
      %v1339 = vadd.f32 %v1007, %v1323
      %v1340 = vadd.f32 %v1008, %v1324
      %v1341 = vadd.f32 %v1009, %v1325
      %v1342 = vld [vmem:[%s3 + $0x2] sm:$0x1]
      %v1343 = vperm.slane %v1342, 0
      %v1344 = vmul.f32 %v535, %v1343
      %v1345 = vmul.f32 %v538, %v1343
      %v1346 = vmul.f32 %v541, %v1343
      %v1347 = vmul.f32 %v544, %v1343
      %v1348 = vmul.f32 %v547, %v1343
      %v1349 = vmul.f32 %v550, %v1343
      %v1350 = vmul.f32 %v553, %v1343
      %v1351 = vmul.f32 %v556, %v1343
      %v1352 = vmul.f32 %v559, %v1343
      %v1353 = vmul.f32 %v562, %v1343
      %v1354 = vmul.f32 %v565, %v1343
      %v1355 = vmul.f32 %v568, %v1343
      %v1356 = vmul.f32 %v571, %v1343
      %v1357 = vmul.f32 %v574, %v1343
      %v1358 = vmul.f32 %v577, %v1343
      %v1359 = vmul.f32 %v580, %v1343
      %v1360 = vpack.c.bf16 %v1345, %v1344
      %v1361 = vpack.c.bf16 %v1347, %v1346
      %v1362 = vpack.c.bf16 %v1349, %v1348
      %v1363 = vpack.c.bf16 %v1351, %v1350
      %v1364 = vpack.c.bf16 %v1353, %v1352
      %v1365 = vpack.c.bf16 %v1355, %v1354
      %v1366 = vpack.c.bf16 %v1357, %v1356
      %v1367 = vpack.c.bf16 %v1359, %v1358
      %v1369 = vsel %vm468, %v1360, 0
      %v1372 = vsel %vm468, %v1361, 0
      %v1375 = vsel %vm468, %v1362, 0
      %v1378 = vsel %vm468, %v1363, 0
      %v1381 = vsel %vm468, %v1364, 0
      %v1384 = vsel %vm468, %v1365, 0
      %v1387 = vsel %vm468, %v1366, 0
      %v1390 = vsel %vm468, %v1367, 0
      %1392 = vmatpush.bf16.xpose.msra.mxu0 %v702
      %1393 = vmatpush.bf16.xpose.msra.mxu0 %v699
      %1394 = vmatpush.bf16.xpose.msra.mxu0 %v696
      %1395 = vmatpush.bf16.xpose.msra.mxu0 %v693
      %1396 = vmatpush.bf16.xpose.msra.mxu0 %v690
      %1397 = vmatpush.bf16.xpose.msra.mxu0 %v687
      %1398 = vmatpush.bf16.xpose.msra.mxu0 %v684
      %1399 = vmatpush.bf16.xpose.msra.mxu0 %v681
      %1400 = vmatmul.bf16.gmra.mxu0 %v1369
      %v1401 = vpop.f32.mrf.mxu0
      %v1402 = vadd.f32 %v590, %v1401
      %v1403 = vpop.f32.mrf.mxu0
      %v1404 = vadd.f32 %v591, %v1403
      %1405 = vmatmul.bf16.gmra.mxu0 %v1372
      %v1406 = vpop.f32.mrf.mxu0
      %v1407 = vadd.f32 %v592, %v1406
      %v1408 = vpop.f32.mrf.mxu0
      %v1409 = vadd.f32 %v593, %v1408
      %1410 = vmatmul.bf16.gmra.mxu0 %v1375
      %v1411 = vpop.f32.mrf.mxu0
      %v1412 = vadd.f32 %v594, %v1411
      %v1413 = vpop.f32.mrf.mxu0
      %v1414 = vadd.f32 %v595, %v1413
      %1415 = vmatmul.bf16.gmra.mxu0 %v1378
      %v1416 = vpop.f32.mrf.mxu0
      %v1417 = vadd.f32 %v596, %v1416
      %v1418 = vpop.f32.mrf.mxu0
      %v1419 = vadd.f32 %v597, %v1418
      %1420 = vmatmul.bf16.gmra.mxu0 %v1381
      %v1421 = vpop.f32.mrf.mxu0
      %v1422 = vadd.f32 %v598, %v1421
      %v1423 = vpop.f32.mrf.mxu0
      %v1424 = vadd.f32 %v599, %v1423
      %1425 = vmatmul.bf16.gmra.mxu0 %v1384
      %v1426 = vpop.f32.mrf.mxu0
      %v1427 = vadd.f32 %v600, %v1426
      %v1428 = vpop.f32.mrf.mxu0
      %v1429 = vadd.f32 %v601, %v1428
      %1430 = vmatmul.bf16.gmra.mxu0 %v1387
      %v1431 = vpop.f32.mrf.mxu0
      %v1432 = vadd.f32 %v602, %v1431
      %v1433 = vpop.f32.mrf.mxu0
      %v1434 = vadd.f32 %v603, %v1433
      %1435 = vmatmul.bf16.gmra.mxu0 %v1390
      %v1436 = vpop.f32.mrf.mxu0
      %v1437 = vadd.f32 %v604, %v1436
      %v1438 = vpop.f32.mrf.mxu0
      %v1439 = vadd.f32 %v605, %v1438
      %1440 = vdwg.mxu0
      %1441 = vmax.xlane.f32.xlu0 %v1402
      %v1442 = vpop.xlane.xlu0 %1441
      %1443 = vmax.xlane.f32.xlu0 %v1404
      %v1444 = vpop.xlane.xlu0 %1443
      %1445 = vmax.xlane.f32.xlu0 %v1407
      %v1446 = vpop.xlane.xlu0 %1445
      %1447 = vmax.xlane.f32.xlu0 %v1409
      %v1448 = vpop.xlane.xlu0 %1447
      %1449 = vmax.xlane.f32.xlu0 %v1412
      %v1450 = vpop.xlane.xlu0 %1449
      %1451 = vmax.xlane.f32.xlu0 %v1414
      %v1452 = vpop.xlane.xlu0 %1451
      %1453 = vmax.xlane.f32.xlu0 %v1417
      %v1454 = vpop.xlane.xlu0 %1453
      %1455 = vmax.xlane.f32.xlu0 %v1419
      %v1456 = vpop.xlane.xlu0 %1455
      %1457 = vmax.xlane.f32.xlu0 %v1422
      %v1458 = vpop.xlane.xlu0 %1457
      %1459 = vmax.xlane.f32.xlu0 %v1424
      %v1460 = vpop.xlane.xlu0 %1459
      %1461 = vmax.xlane.f32.xlu0 %v1427
      %v1462 = vpop.xlane.xlu0 %1461
      %1463 = vmax.xlane.f32.xlu0 %v1429
      %v1464 = vpop.xlane.xlu0 %1463
      %1465 = vmax.xlane.f32.xlu0 %v1432
      %v1466 = vpop.xlane.xlu0 %1465
      %1467 = vmax.xlane.f32.xlu0 %v1434
      %v1468 = vpop.xlane.xlu0 %1467
      %1469 = vmax.xlane.f32.xlu0 %v1437
      %v1470 = vpop.xlane.xlu0 %1469
      %1471 = vmax.xlane.f32.xlu0 %v1439
      %v1472 = vpop.xlane.xlu0 %1471
      %v1473 = vsub.f32 %v1402, %v1442
      %v1474 = vsub.f32 %v1404, %v1444
      %v1475 = vsub.f32 %v1407, %v1446
      %v1476 = vsub.f32 %v1409, %v1448
      %v1477 = vsub.f32 %v1412, %v1450
      %v1478 = vsub.f32 %v1414, %v1452
      %v1479 = vsub.f32 %v1417, %v1454
      %v1480 = vsub.f32 %v1419, %v1456
      %v1481 = vsub.f32 %v1422, %v1458
      %v1482 = vsub.f32 %v1424, %v1460
      %v1483 = vsub.f32 %v1427, %v1462
      %v1484 = vsub.f32 %v1429, %v1464
      %v1485 = vsub.f32 %v1432, %v1466
      %v1486 = vsub.f32 %v1434, %v1468
      %v1487 = vsub.f32 %v1437, %v1470
      %v1488 = vsub.f32 %v1439, %v1472
      %v1489 = vmul.f32 %v1473, 1.442695
      %v1490 = vpow.pop %v1489
      %v1491 = vmul.f32 %v1474, 1.442695
      %v1492 = vpow.pop %v1491
      %v1493 = vmul.f32 %v1475, 1.442695
      %v1494 = vpow.pop %v1493
      %v1495 = vmul.f32 %v1476, 1.442695
      %v1496 = vpow.pop %v1495
      %v1497 = vmul.f32 %v1477, 1.442695
      %v1498 = vpow.pop %v1497
      %v1499 = vmul.f32 %v1478, 1.442695
      %v1500 = vpow.pop %v1499
      %v1501 = vmul.f32 %v1479, 1.442695
      %v1502 = vpow.pop %v1501
      %v1503 = vmul.f32 %v1480, 1.442695
      %v1504 = vpow.pop %v1503
      %v1505 = vmul.f32 %v1481, 1.442695
      %v1506 = vpow.pop %v1505
      %v1507 = vmul.f32 %v1482, 1.442695
      %v1508 = vpow.pop %v1507
      %v1509 = vmul.f32 %v1483, 1.442695
      %v1510 = vpow.pop %v1509
      %v1511 = vmul.f32 %v1484, 1.442695
      %v1512 = vpow.pop %v1511
      %v1513 = vmul.f32 %v1485, 1.442695
      %v1514 = vpow.pop %v1513
      %v1515 = vmul.f32 %v1486, 1.442695
      %v1516 = vpow.pop %v1515
      %v1517 = vmul.f32 %v1487, 1.442695
      %v1518 = vpow.pop %v1517
      %v1519 = vmul.f32 %v1488, 1.442695
      %v1520 = vpow.pop %v1519
      %1521 = vadd.xlane.f32.xlu0 %v1490
      %v1522 = vpop.xlane.xlu0 %1521
      %1523 = vadd.xlane.f32.xlu0 %v1492
      %v1524 = vpop.xlane.xlu0 %1523
      %1525 = vadd.xlane.f32.xlu0 %v1494
      %v1526 = vpop.xlane.xlu0 %1525
      %1527 = vadd.xlane.f32.xlu0 %v1496
      %v1528 = vpop.xlane.xlu0 %1527
      %1529 = vadd.xlane.f32.xlu0 %v1498
      %v1530 = vpop.xlane.xlu0 %1529
      %1531 = vadd.xlane.f32.xlu0 %v1500
      %v1532 = vpop.xlane.xlu0 %1531
      %1533 = vadd.xlane.f32.xlu0 %v1502
      %v1534 = vpop.xlane.xlu0 %1533
      %1535 = vadd.xlane.f32.xlu0 %v1504
      %v1536 = vpop.xlane.xlu0 %1535
      %1537 = vadd.xlane.f32.xlu0 %v1506
      %v1538 = vpop.xlane.xlu0 %1537
      %1539 = vadd.xlane.f32.xlu0 %v1508
      %v1540 = vpop.xlane.xlu0 %1539
      %1541 = vadd.xlane.f32.xlu0 %v1510
      %v1542 = vpop.xlane.xlu0 %1541
      %1543 = vadd.xlane.f32.xlu0 %v1512
      %v1544 = vpop.xlane.xlu0 %1543
      %1545 = vadd.xlane.f32.xlu0 %v1514
      %v1546 = vpop.xlane.xlu0 %1545
      %1547 = vadd.xlane.f32.xlu0 %v1516
      %v1548 = vpop.xlane.xlu0 %1547
      %1549 = vadd.xlane.f32.xlu0 %v1518
      %v1550 = vpop.xlane.xlu0 %1549
      %1551 = vadd.xlane.f32.xlu0 %v1520
      %v1552 = vpop.xlane.xlu0 %1551
      %v1553 = vrcp.pop %v1522
      %v1554 = vrcp.pop %v1524
      %v1555 = vrcp.pop %v1526
      %v1556 = vrcp.pop %v1528
      %v1557 = vrcp.pop %v1530
      %v1558 = vrcp.pop %v1532
      %v1559 = vrcp.pop %v1534
      %v1560 = vrcp.pop %v1536
      %v1561 = vrcp.pop %v1538
      %v1562 = vrcp.pop %v1540
      %v1563 = vrcp.pop %v1542
      %v1564 = vrcp.pop %v1544
      %v1565 = vrcp.pop %v1546
      %v1566 = vrcp.pop %v1548
      %v1567 = vrcp.pop %v1550
      %v1568 = vrcp.pop %v1552
      %v1569 = vmul.f32 %v1490, %v1553
      %v1570 = vmul.f32 %v1492, %v1554
      %v1571 = vmul.f32 %v1494, %v1555
      %v1572 = vmul.f32 %v1496, %v1556
      %v1573 = vmul.f32 %v1498, %v1557
      %v1574 = vmul.f32 %v1500, %v1558
      %v1575 = vmul.f32 %v1502, %v1559
      %v1576 = vmul.f32 %v1504, %v1560
      %v1577 = vmul.f32 %v1506, %v1561
      %v1578 = vmul.f32 %v1508, %v1562
      %v1579 = vmul.f32 %v1510, %v1563
      %v1580 = vmul.f32 %v1512, %v1564
      %v1581 = vmul.f32 %v1514, %v1565
      %v1582 = vmul.f32 %v1516, %v1566
      %v1583 = vmul.f32 %v1518, %v1567
      %v1584 = vmul.f32 %v1520, %v1568
      %v1585 = vpack.c.bf16 %v1570, %v1569
      %v1586 = vpack.c.bf16 %v1572, %v1571
      %v1587 = vpack.c.bf16 %v1574, %v1573
      %v1588 = vpack.c.bf16 %v1576, %v1575
      %v1589 = vpack.c.bf16 %v1578, %v1577
      %v1590 = vpack.c.bf16 %v1580, %v1579
      %v1591 = vpack.c.bf16 %v1582, %v1581
      %v1592 = vpack.c.bf16 %v1584, %v1583
      %1593 = vmatpush.bf16.msra.mxu0 %v920
      %1594 = vmatpush.bf16.msra.mxu0 %v918
      %1595 = vmatpush.bf16.msra.mxu0 %v916
      %1596 = vmatpush.bf16.msra.mxu0 %v914
      %1597 = vmatpush.bf16.msra.mxu0 %v912
      %1598 = vmatpush.bf16.msra.mxu0 %v910
      %1599 = vmatpush.bf16.msra.mxu0 %v908
      %1600 = vmatpush.bf16.msra.mxu0 %v906
      %1601 = vmatmul.bf16.gmra.mxu0 %v1585
      %v1602 = vpop.f32.mrf.mxu0
      %v1603 = vadd.f32 0.0, %v1602
      %v1604 = vpop.f32.mrf.mxu0
      %v1605 = vadd.f32 0.0, %v1604
      %1606 = vmatmul.bf16.gmra.mxu0 %v1586
      %v1607 = vpop.f32.mrf.mxu0
      %v1608 = vadd.f32 0.0, %v1607
      %v1609 = vpop.f32.mrf.mxu0
      %v1610 = vadd.f32 0.0, %v1609
      %1611 = vmatmul.bf16.gmra.mxu0 %v1587
      %v1612 = vpop.f32.mrf.mxu0
      %v1613 = vadd.f32 0.0, %v1612
      %v1614 = vpop.f32.mrf.mxu0
      %v1615 = vadd.f32 0.0, %v1614
      %1616 = vmatmul.bf16.gmra.mxu0 %v1588
      %v1617 = vpop.f32.mrf.mxu0
      %v1618 = vadd.f32 0.0, %v1617
      %v1619 = vpop.f32.mrf.mxu0
      %v1620 = vadd.f32 0.0, %v1619
      %1621 = vmatmul.bf16.gmra.mxu0 %v1589
      %v1622 = vpop.f32.mrf.mxu0
      %v1623 = vadd.f32 0.0, %v1622
      %v1624 = vpop.f32.mrf.mxu0
      %v1625 = vadd.f32 0.0, %v1624
      %1626 = vmatmul.bf16.gmra.mxu0 %v1590
      %v1627 = vpop.f32.mrf.mxu0
      %v1628 = vadd.f32 0.0, %v1627
      %v1629 = vpop.f32.mrf.mxu0
      %v1630 = vadd.f32 0.0, %v1629
      %1631 = vmatmul.bf16.gmra.mxu0 %v1591
      %v1632 = vpop.f32.mrf.mxu0
      %v1633 = vadd.f32 0.0, %v1632
      %v1634 = vpop.f32.mrf.mxu0
      %v1635 = vadd.f32 0.0, %v1634
      %1636 = vmatmul.bf16.gmra.mxu0 %v1592
      %v1637 = vpop.f32.mrf.mxu0
      %v1638 = vadd.f32 0.0, %v1637
      %v1639 = vpop.f32.mrf.mxu0
      %v1640 = vadd.f32 0.0, %v1639
      %1641 = vdwg.mxu0
      %v1642 = vmul.f32 %v1603, %v1343
      %v1643 = vmul.f32 %v1605, %v1343
      %v1644 = vmul.f32 %v1608, %v1343
      %v1645 = vmul.f32 %v1610, %v1343
      %v1646 = vmul.f32 %v1613, %v1343
      %v1647 = vmul.f32 %v1615, %v1343
      %v1648 = vmul.f32 %v1618, %v1343
      %v1649 = vmul.f32 %v1620, %v1343
      %v1650 = vmul.f32 %v1623, %v1343
      %v1651 = vmul.f32 %v1625, %v1343
      %v1652 = vmul.f32 %v1628, %v1343
      %v1653 = vmul.f32 %v1630, %v1343
      %v1654 = vmul.f32 %v1633, %v1343
      %v1655 = vmul.f32 %v1635, %v1343
      %v1656 = vmul.f32 %v1638, %v1343
      %v1657 = vmul.f32 %v1640, %v1343
      %v1658 = vadd.f32 %v1326, %v1642
      %v1659 = vadd.f32 %v1327, %v1643
      %v1660 = vadd.f32 %v1328, %v1644
      %v1661 = vadd.f32 %v1329, %v1645
      %v1662 = vadd.f32 %v1330, %v1646
      %v1663 = vadd.f32 %v1331, %v1647
      %v1664 = vadd.f32 %v1332, %v1648
      %v1665 = vadd.f32 %v1333, %v1649
      %v1666 = vadd.f32 %v1334, %v1650
      %v1667 = vadd.f32 %v1335, %v1651
      %v1668 = vadd.f32 %v1336, %v1652
      %v1669 = vadd.f32 %v1337, %v1653
      %v1670 = vadd.f32 %v1338, %v1654
      %v1671 = vadd.f32 %v1339, %v1655
      %v1672 = vadd.f32 %v1340, %v1656
      %v1673 = vadd.f32 %v1341, %v1657
      %v1674 = vld [vmem:[%s3 + $0x3] sm:$0x1]
      %v1675 = vperm.slane %v1674, 0
      %v1676 = vmul.f32 %v535, %v1675
      %v1677 = vmul.f32 %v538, %v1675
      %v1678 = vmul.f32 %v541, %v1675
      %v1679 = vmul.f32 %v544, %v1675
      %v1680 = vmul.f32 %v547, %v1675
      %v1681 = vmul.f32 %v550, %v1675
      %v1682 = vmul.f32 %v553, %v1675
      %v1683 = vmul.f32 %v556, %v1675
      %v1684 = vmul.f32 %v559, %v1675
      %v1685 = vmul.f32 %v562, %v1675
      %v1686 = vmul.f32 %v565, %v1675
      %v1687 = vmul.f32 %v568, %v1675
      %v1688 = vmul.f32 %v571, %v1675
      %v1689 = vmul.f32 %v574, %v1675
      %v1690 = vmul.f32 %v577, %v1675
      %v1691 = vmul.f32 %v580, %v1675
      %v1692 = vpack.c.bf16 %v1677, %v1676
      %v1693 = vpack.c.bf16 %v1679, %v1678
      %v1694 = vpack.c.bf16 %v1681, %v1680
      %v1695 = vpack.c.bf16 %v1683, %v1682
      %v1696 = vpack.c.bf16 %v1685, %v1684
      %v1697 = vpack.c.bf16 %v1687, %v1686
      %v1698 = vpack.c.bf16 %v1689, %v1688
      %v1699 = vpack.c.bf16 %v1691, %v1690
      %v1701 = vsel %vm468, %v1692, 0
      %v1704 = vsel %vm468, %v1693, 0
      %v1707 = vsel %vm468, %v1694, 0
      %v1710 = vsel %vm468, %v1695, 0
      %v1713 = vsel %vm468, %v1696, 0
      %v1716 = vsel %vm468, %v1697, 0
      %v1719 = vsel %vm468, %v1698, 0
      %v1722 = vsel %vm468, %v1699, 0
      %1724 = vmatpush.bf16.xpose.msra.mxu0 %v702
      %1725 = vmatpush.bf16.xpose.msra.mxu0 %v699
      %1726 = vmatpush.bf16.xpose.msra.mxu0 %v696
      %1727 = vmatpush.bf16.xpose.msra.mxu0 %v693
      %1728 = vmatpush.bf16.xpose.msra.mxu0 %v690
      %1729 = vmatpush.bf16.xpose.msra.mxu0 %v687
      %1730 = vmatpush.bf16.xpose.msra.mxu0 %v684
      %1731 = vmatpush.bf16.xpose.msra.mxu0 %v681
      %1732 = vmatmul.bf16.gmra.mxu0 %v1701
      %v1733 = vpop.f32.mrf.mxu0
      %v1734 = vadd.f32 %v590, %v1733
      %v1735 = vpop.f32.mrf.mxu0
      %v1736 = vadd.f32 %v591, %v1735
      %1737 = vmatmul.bf16.gmra.mxu0 %v1704
      %v1738 = vpop.f32.mrf.mxu0
      %v1739 = vadd.f32 %v592, %v1738
      %v1740 = vpop.f32.mrf.mxu0
      %v1741 = vadd.f32 %v593, %v1740
      %1742 = vmatmul.bf16.gmra.mxu0 %v1707
      %v1743 = vpop.f32.mrf.mxu0
      %v1744 = vadd.f32 %v594, %v1743
      %v1745 = vpop.f32.mrf.mxu0
      %v1746 = vadd.f32 %v595, %v1745
      %1747 = vmatmul.bf16.gmra.mxu0 %v1710
      %v1748 = vpop.f32.mrf.mxu0
      %v1749 = vadd.f32 %v596, %v1748
      %v1750 = vpop.f32.mrf.mxu0
      %v1751 = vadd.f32 %v597, %v1750
      %1752 = vmatmul.bf16.gmra.mxu0 %v1713
      %v1753 = vpop.f32.mrf.mxu0
      %v1754 = vadd.f32 %v598, %v1753
      %v1755 = vpop.f32.mrf.mxu0
      %v1756 = vadd.f32 %v599, %v1755
      %1757 = vmatmul.bf16.gmra.mxu0 %v1716
      %v1758 = vpop.f32.mrf.mxu0
      %v1759 = vadd.f32 %v600, %v1758
      %v1760 = vpop.f32.mrf.mxu0
      %v1761 = vadd.f32 %v601, %v1760
      %1762 = vmatmul.bf16.gmra.mxu0 %v1719
      %v1763 = vpop.f32.mrf.mxu0
      %v1764 = vadd.f32 %v602, %v1763
      %v1765 = vpop.f32.mrf.mxu0
      %v1766 = vadd.f32 %v603, %v1765
      %1767 = vmatmul.bf16.gmra.mxu0 %v1722
      %v1768 = vpop.f32.mrf.mxu0
      %v1769 = vadd.f32 %v604, %v1768
      %v1770 = vpop.f32.mrf.mxu0
      %v1771 = vadd.f32 %v605, %v1770
      %1772 = vdwg.mxu0
      %1773 = vmax.xlane.f32.xlu0 %v1734
      %v1774 = vpop.xlane.xlu0 %1773
      %1775 = vmax.xlane.f32.xlu0 %v1736
      %v1776 = vpop.xlane.xlu0 %1775
      %1777 = vmax.xlane.f32.xlu0 %v1739
      %v1778 = vpop.xlane.xlu0 %1777
      %1779 = vmax.xlane.f32.xlu0 %v1741
      %v1780 = vpop.xlane.xlu0 %1779
      %1781 = vmax.xlane.f32.xlu0 %v1744
      %v1782 = vpop.xlane.xlu0 %1781
      %1783 = vmax.xlane.f32.xlu0 %v1746
      %v1784 = vpop.xlane.xlu0 %1783
      %1785 = vmax.xlane.f32.xlu0 %v1749
      %v1786 = vpop.xlane.xlu0 %1785
      %1787 = vmax.xlane.f32.xlu0 %v1751
      %v1788 = vpop.xlane.xlu0 %1787
      %1789 = vmax.xlane.f32.xlu0 %v1754
      %v1790 = vpop.xlane.xlu0 %1789
      %1791 = vmax.xlane.f32.xlu0 %v1756
      %v1792 = vpop.xlane.xlu0 %1791
      %1793 = vmax.xlane.f32.xlu0 %v1759
      %v1794 = vpop.xlane.xlu0 %1793
      %1795 = vmax.xlane.f32.xlu0 %v1761
      %v1796 = vpop.xlane.xlu0 %1795
      %1797 = vmax.xlane.f32.xlu0 %v1764
      %v1798 = vpop.xlane.xlu0 %1797
      %1799 = vmax.xlane.f32.xlu0 %v1766
      %v1800 = vpop.xlane.xlu0 %1799
      %1801 = vmax.xlane.f32.xlu0 %v1769
      %v1802 = vpop.xlane.xlu0 %1801
      %1803 = vmax.xlane.f32.xlu0 %v1771
      %v1804 = vpop.xlane.xlu0 %1803
      %v1805 = vsub.f32 %v1734, %v1774
      %v1806 = vsub.f32 %v1736, %v1776
      %v1807 = vsub.f32 %v1739, %v1778
      %v1808 = vsub.f32 %v1741, %v1780
      %v1809 = vsub.f32 %v1744, %v1782
      %v1810 = vsub.f32 %v1746, %v1784
      %v1811 = vsub.f32 %v1749, %v1786
      %v1812 = vsub.f32 %v1751, %v1788
      %v1813 = vsub.f32 %v1754, %v1790
      %v1814 = vsub.f32 %v1756, %v1792
      %v1815 = vsub.f32 %v1759, %v1794
      %v1816 = vsub.f32 %v1761, %v1796
      %v1817 = vsub.f32 %v1764, %v1798
      %v1818 = vsub.f32 %v1766, %v1800
      %v1819 = vsub.f32 %v1769, %v1802
      %v1820 = vsub.f32 %v1771, %v1804
      %v1821 = vmul.f32 %v1805, 1.442695
      %v1822 = vpow.pop %v1821
      %v1823 = vmul.f32 %v1806, 1.442695
      %v1824 = vpow.pop %v1823
      %v1825 = vmul.f32 %v1807, 1.442695
      %v1826 = vpow.pop %v1825
      %v1827 = vmul.f32 %v1808, 1.442695
      %v1828 = vpow.pop %v1827
      %v1829 = vmul.f32 %v1809, 1.442695
      %v1830 = vpow.pop %v1829
      %v1831 = vmul.f32 %v1810, 1.442695
      %v1832 = vpow.pop %v1831
      %v1833 = vmul.f32 %v1811, 1.442695
      %v1834 = vpow.pop %v1833
      %v1835 = vmul.f32 %v1812, 1.442695
      %v1836 = vpow.pop %v1835
      %v1837 = vmul.f32 %v1813, 1.442695
      %v1838 = vpow.pop %v1837
      %v1839 = vmul.f32 %v1814, 1.442695
      %v1840 = vpow.pop %v1839
      %v1841 = vmul.f32 %v1815, 1.442695
      %v1842 = vpow.pop %v1841
      %v1843 = vmul.f32 %v1816, 1.442695
      %v1844 = vpow.pop %v1843
      %v1845 = vmul.f32 %v1817, 1.442695
      %v1846 = vpow.pop %v1845
      %v1847 = vmul.f32 %v1818, 1.442695
      %v1848 = vpow.pop %v1847
      %v1849 = vmul.f32 %v1819, 1.442695
      %v1850 = vpow.pop %v1849
      %v1851 = vmul.f32 %v1820, 1.442695
      %v1852 = vpow.pop %v1851
      %1853 = vadd.xlane.f32.xlu0 %v1822
      %v1854 = vpop.xlane.xlu0 %1853
      %1855 = vadd.xlane.f32.xlu0 %v1824
      %v1856 = vpop.xlane.xlu0 %1855
      %1857 = vadd.xlane.f32.xlu0 %v1826
      %v1858 = vpop.xlane.xlu0 %1857
      %1859 = vadd.xlane.f32.xlu0 %v1828
      %v1860 = vpop.xlane.xlu0 %1859
      %1861 = vadd.xlane.f32.xlu0 %v1830
      %v1862 = vpop.xlane.xlu0 %1861
      %1863 = vadd.xlane.f32.xlu0 %v1832
      %v1864 = vpop.xlane.xlu0 %1863
      %1865 = vadd.xlane.f32.xlu0 %v1834
      %v1866 = vpop.xlane.xlu0 %1865
      %1867 = vadd.xlane.f32.xlu0 %v1836
      %v1868 = vpop.xlane.xlu0 %1867
      %1869 = vadd.xlane.f32.xlu0 %v1838
      %v1870 = vpop.xlane.xlu0 %1869
      %1871 = vadd.xlane.f32.xlu0 %v1840
      %v1872 = vpop.xlane.xlu0 %1871
      %1873 = vadd.xlane.f32.xlu0 %v1842
      %v1874 = vpop.xlane.xlu0 %1873
      %1875 = vadd.xlane.f32.xlu0 %v1844
      %v1876 = vpop.xlane.xlu0 %1875
      %1877 = vadd.xlane.f32.xlu0 %v1846
      %v1878 = vpop.xlane.xlu0 %1877
      %1879 = vadd.xlane.f32.xlu0 %v1848
      %v1880 = vpop.xlane.xlu0 %1879
      %1881 = vadd.xlane.f32.xlu0 %v1850
      %v1882 = vpop.xlane.xlu0 %1881
      %1883 = vadd.xlane.f32.xlu0 %v1852
      %v1884 = vpop.xlane.xlu0 %1883
      %v1885 = vrcp.pop %v1854
      %v1886 = vrcp.pop %v1856
      %v1887 = vrcp.pop %v1858
      %v1888 = vrcp.pop %v1860
      %v1889 = vrcp.pop %v1862
      %v1890 = vrcp.pop %v1864
      %v1891 = vrcp.pop %v1866
      %v1892 = vrcp.pop %v1868
      %v1893 = vrcp.pop %v1870
      %v1894 = vrcp.pop %v1872
      %v1895 = vrcp.pop %v1874
      %v1896 = vrcp.pop %v1876
      %v1897 = vrcp.pop %v1878
      %v1898 = vrcp.pop %v1880
      %v1899 = vrcp.pop %v1882
      %v1900 = vrcp.pop %v1884
      %v1901 = vmul.f32 %v1822, %v1885
      %v1902 = vmul.f32 %v1824, %v1886
      %v1903 = vmul.f32 %v1826, %v1887
      %v1904 = vmul.f32 %v1828, %v1888
      %v1905 = vmul.f32 %v1830, %v1889
      %v1906 = vmul.f32 %v1832, %v1890
      %v1907 = vmul.f32 %v1834, %v1891
      %v1908 = vmul.f32 %v1836, %v1892
      %v1909 = vmul.f32 %v1838, %v1893
      %v1910 = vmul.f32 %v1840, %v1894
      %v1911 = vmul.f32 %v1842, %v1895
      %v1912 = vmul.f32 %v1844, %v1896
      %v1913 = vmul.f32 %v1846, %v1897
      %v1914 = vmul.f32 %v1848, %v1898
      %v1915 = vmul.f32 %v1850, %v1899
      %v1916 = vmul.f32 %v1852, %v1900
      %v1917 = vpack.c.bf16 %v1902, %v1901
      %v1918 = vpack.c.bf16 %v1904, %v1903
      %v1919 = vpack.c.bf16 %v1906, %v1905
      %v1920 = vpack.c.bf16 %v1908, %v1907
      %v1921 = vpack.c.bf16 %v1910, %v1909
      %v1922 = vpack.c.bf16 %v1912, %v1911
      %v1923 = vpack.c.bf16 %v1914, %v1913
      %v1924 = vpack.c.bf16 %v1916, %v1915
      %1925 = vmatpush.bf16.msra.mxu0 %v920
      %1926 = vmatpush.bf16.msra.mxu0 %v918
      %1927 = vmatpush.bf16.msra.mxu0 %v916
      %1928 = vmatpush.bf16.msra.mxu0 %v914
      %1929 = vmatpush.bf16.msra.mxu0 %v912
      %1930 = vmatpush.bf16.msra.mxu0 %v910
      %1931 = vmatpush.bf16.msra.mxu0 %v908
      %1932 = vmatpush.bf16.msra.mxu0 %v906
      %1933 = vmatmul.bf16.gmra.mxu0 %v1917
      %v1934 = vpop.f32.mrf.mxu0
      %v1935 = vadd.f32 0.0, %v1934
      %v1936 = vpop.f32.mrf.mxu0
      %v1937 = vadd.f32 0.0, %v1936
      %1938 = vmatmul.bf16.gmra.mxu0 %v1918
      %v1939 = vpop.f32.mrf.mxu0
      %v1940 = vadd.f32 0.0, %v1939
      %v1941 = vpop.f32.mrf.mxu0
      %v1942 = vadd.f32 0.0, %v1941
      %1943 = vmatmul.bf16.gmra.mxu0 %v1919
      %v1944 = vpop.f32.mrf.mxu0
      %v1945 = vadd.f32 0.0, %v1944
      %v1946 = vpop.f32.mrf.mxu0
      %v1947 = vadd.f32 0.0, %v1946
      %1948 = vmatmul.bf16.gmra.mxu0 %v1920
      %v1949 = vpop.f32.mrf.mxu0
      %v1950 = vadd.f32 0.0, %v1949
      %v1951 = vpop.f32.mrf.mxu0
      %v1952 = vadd.f32 0.0, %v1951
      %1953 = vmatmul.bf16.gmra.mxu0 %v1921
      %v1954 = vpop.f32.mrf.mxu0
      %v1955 = vadd.f32 0.0, %v1954
      %v1956 = vpop.f32.mrf.mxu0
      %v1957 = vadd.f32 0.0, %v1956
      %1958 = vmatmul.bf16.gmra.mxu0 %v1922
      %v1959 = vpop.f32.mrf.mxu0
      %v1960 = vadd.f32 0.0, %v1959
      %v1961 = vpop.f32.mrf.mxu0
      %v1962 = vadd.f32 0.0, %v1961
      %1963 = vmatmul.bf16.gmra.mxu0 %v1923
      %v1964 = vpop.f32.mrf.mxu0
      %v1965 = vadd.f32 0.0, %v1964
      %v1966 = vpop.f32.mrf.mxu0
      %v1967 = vadd.f32 0.0, %v1966
      %1968 = vmatmul.bf16.gmra.mxu0 %v1924
      %v1969 = vpop.f32.mrf.mxu0
      %v1970 = vadd.f32 0.0, %v1969
      %v1971 = vpop.f32.mrf.mxu0
      %v1972 = vadd.f32 0.0, %v1971
      %1973 = vdwg.mxu0
      %v1974 = vmul.f32 %v1935, %v1675
      %v1975 = vmul.f32 %v1937, %v1675
      %v1976 = vmul.f32 %v1940, %v1675
      %v1977 = vmul.f32 %v1942, %v1675
      %v1978 = vmul.f32 %v1945, %v1675
      %v1979 = vmul.f32 %v1947, %v1675
      %v1980 = vmul.f32 %v1950, %v1675
      %v1981 = vmul.f32 %v1952, %v1675
      %v1982 = vmul.f32 %v1955, %v1675
      %v1983 = vmul.f32 %v1957, %v1675
      %v1984 = vmul.f32 %v1960, %v1675
      %v1985 = vmul.f32 %v1962, %v1675
      %v1986 = vmul.f32 %v1965, %v1675
      %v1987 = vmul.f32 %v1967, %v1675
      %v1988 = vmul.f32 %v1970, %v1675
      %v1989 = vmul.f32 %v1972, %v1675
      %v1990 = vadd.f32 %v1658, %v1974
      %v1991 = vadd.f32 %v1659, %v1975
      %v1992 = vadd.f32 %v1660, %v1976
      %v1993 = vadd.f32 %v1661, %v1977
      %v1994 = vadd.f32 %v1662, %v1978
      %v1995 = vadd.f32 %v1663, %v1979
      %v1996 = vadd.f32 %v1664, %v1980
      %v1997 = vadd.f32 %v1665, %v1981
      %v1998 = vadd.f32 %v1666, %v1982
      %v1999 = vadd.f32 %v1667, %v1983
      %v2000 = vadd.f32 %v1668, %v1984
      %v2001 = vadd.f32 %v1669, %v1985
      %v2002 = vadd.f32 %v1670, %v1986
      %v2003 = vadd.f32 %v1671, %v1987
      %v2004 = vadd.f32 %v1672, %v1988
      %v2005 = vadd.f32 %v1673, %v1989
      %v2006 = vadd.f32 %v1990, %v444
      %v2007 = vadd.f32 %v1991, %v445
      %v2008 = vadd.f32 %v1992, %v446
      %v2009 = vadd.f32 %v1993, %v447
      %v2010 = vadd.f32 %v1994, %v448
      %v2011 = vadd.f32 %v1995, %v449
      %v2012 = vadd.f32 %v1996, %v450
      %v2013 = vadd.f32 %v1997, %v451
      %v2014 = vadd.f32 %v1998, %v452
      %v2015 = vadd.f32 %v1999, %v453
      %v2016 = vadd.f32 %v2000, %v454
      %v2017 = vadd.f32 %v2001, %v455
      %v2018 = vadd.f32 %v2002, %v456
      %v2019 = vadd.f32 %v2003, %v457
      %v2020 = vadd.f32 %v2004, %v458
      %v2021 = vadd.f32 %v2005, %v459
      %v2022 = vld [vmem:[%s5] sm:$0x1]
      %v2023 = vld [vmem:[%s6] sm:$0x1]
      %v2024 = vsel %vm468, %v2006, 0.0
      %2025 = vadd.xlane.f32.xlu0 %v2024
      %v2026 = vpop.xlane.xlu0 %2025
      %v2027 = vsel %vm468, %v2007, 0.0
      %2028 = vadd.xlane.f32.xlu0 %v2027
      %v2029 = vpop.xlane.xlu0 %2028
      %v2030 = vsel %vm468, %v2008, 0.0
      %2031 = vadd.xlane.f32.xlu0 %v2030
      %v2032 = vpop.xlane.xlu0 %2031
      %v2033 = vsel %vm468, %v2009, 0.0
      %2034 = vadd.xlane.f32.xlu0 %v2033
      %v2035 = vpop.xlane.xlu0 %2034
      %v2036 = vsel %vm468, %v2010, 0.0
      %2037 = vadd.xlane.f32.xlu0 %v2036
      %v2038 = vpop.xlane.xlu0 %2037
      %v2039 = vsel %vm468, %v2011, 0.0
      %2040 = vadd.xlane.f32.xlu0 %v2039
      %v2041 = vpop.xlane.xlu0 %2040
      %v2042 = vsel %vm468, %v2012, 0.0
      %2043 = vadd.xlane.f32.xlu0 %v2042
      %v2044 = vpop.xlane.xlu0 %2043
      %v2045 = vsel %vm468, %v2013, 0.0
      %2046 = vadd.xlane.f32.xlu0 %v2045
      %v2047 = vpop.xlane.xlu0 %2046
      %v2048 = vsel %vm468, %v2014, 0.0
      %2049 = vadd.xlane.f32.xlu0 %v2048
      %v2050 = vpop.xlane.xlu0 %2049
      %v2051 = vsel %vm468, %v2015, 0.0
      %2052 = vadd.xlane.f32.xlu0 %v2051
      %v2053 = vpop.xlane.xlu0 %2052
      %v2054 = vsel %vm468, %v2016, 0.0
      %2055 = vadd.xlane.f32.xlu0 %v2054
      %v2056 = vpop.xlane.xlu0 %2055
      %v2057 = vsel %vm468, %v2017, 0.0
      %2058 = vadd.xlane.f32.xlu0 %v2057
      %v2059 = vpop.xlane.xlu0 %2058
      %v2060 = vsel %vm468, %v2018, 0.0
      %2061 = vadd.xlane.f32.xlu0 %v2060
      %v2062 = vpop.xlane.xlu0 %2061
      %v2063 = vsel %vm468, %v2019, 0.0
      %2064 = vadd.xlane.f32.xlu0 %v2063
      %v2065 = vpop.xlane.xlu0 %2064
      %v2066 = vsel %vm468, %v2020, 0.0
      %2067 = vadd.xlane.f32.xlu0 %v2066
      %v2068 = vpop.xlane.xlu0 %2067
      %v2069 = vsel %vm468, %v2021, 0.0
      %2070 = vadd.xlane.f32.xlu0 %v2069
      %v2071 = vpop.xlane.xlu0 %2070
      %v2072 = vrcp.pop 32.0
      %v2073 = vmul.f32 32.0, %v2072
      %v2074 = vsub.f32 1.0, %v2073
      %v2075 = vmul.f32 %v2072, %v2074
      %v2076 = vadd.f32 %v2072, %v2075
      %vm2077 = vweird.f32 %v2072
      %v2078 = vsel %vm2077, %v2072, %v2076
      %v2079 = vmul.f32 %v2026, %v2078
      %v2080 = vmul.f32 %v2029, %v2078
      %v2081 = vmul.f32 %v2032, %v2078
      %v2082 = vmul.f32 %v2035, %v2078
      %v2083 = vmul.f32 %v2038, %v2078
      %v2084 = vmul.f32 %v2041, %v2078
      %v2085 = vmul.f32 %v2044, %v2078
      %v2086 = vmul.f32 %v2047, %v2078
      %v2087 = vmul.f32 %v2050, %v2078
      %v2088 = vmul.f32 %v2053, %v2078
      %v2089 = vmul.f32 %v2056, %v2078
      %v2090 = vmul.f32 %v2059, %v2078
      %v2091 = vmul.f32 %v2062, %v2078
      %v2092 = vmul.f32 %v2065, %v2078
      %v2093 = vmul.f32 %v2068, %v2078
      %v2094 = vmul.f32 %v2071, %v2078
      %v2095 = vsub.f32 %v2006, %v2079
      %v2096 = vsub.f32 %v2007, %v2080
      %v2097 = vsub.f32 %v2008, %v2081
      %v2098 = vsub.f32 %v2009, %v2082
      %v2099 = vsub.f32 %v2010, %v2083
      %v2100 = vsub.f32 %v2011, %v2084
      %v2101 = vsub.f32 %v2012, %v2085
      %v2102 = vsub.f32 %v2013, %v2086
      %v2103 = vsub.f32 %v2014, %v2087
      %v2104 = vsub.f32 %v2015, %v2088
      %v2105 = vsub.f32 %v2016, %v2089
      %v2106 = vsub.f32 %v2017, %v2090
      %v2107 = vsub.f32 %v2018, %v2091
      %v2108 = vsub.f32 %v2019, %v2092
      %v2109 = vsub.f32 %v2020, %v2093
      %v2110 = vsub.f32 %v2021, %v2094
      %v2111 = vmul.f32 %v2095, %v2095
      %v2112 = vmul.f32 %v2096, %v2096
      %v2113 = vmul.f32 %v2097, %v2097
      %v2114 = vmul.f32 %v2098, %v2098
      %v2115 = vmul.f32 %v2099, %v2099
      %v2116 = vmul.f32 %v2100, %v2100
      %v2117 = vmul.f32 %v2101, %v2101
      %v2118 = vmul.f32 %v2102, %v2102
      %v2119 = vmul.f32 %v2103, %v2103
      %v2120 = vmul.f32 %v2104, %v2104
      %v2121 = vmul.f32 %v2105, %v2105
      %v2122 = vmul.f32 %v2106, %v2106
      %v2123 = vmul.f32 %v2107, %v2107
      %v2124 = vmul.f32 %v2108, %v2108
      %v2125 = vmul.f32 %v2109, %v2109
      %v2126 = vmul.f32 %v2110, %v2110
      %v2127 = vsel %vm468, %v2111, 0.0
      %2128 = vadd.xlane.f32.xlu0 %v2127
      %v2129 = vpop.xlane.xlu0 %2128
      %v2130 = vsel %vm468, %v2112, 0.0
      %2131 = vadd.xlane.f32.xlu0 %v2130
      %v2132 = vpop.xlane.xlu0 %2131
      %v2133 = vsel %vm468, %v2113, 0.0
      %2134 = vadd.xlane.f32.xlu0 %v2133
      %v2135 = vpop.xlane.xlu0 %2134
      %v2136 = vsel %vm468, %v2114, 0.0
      %2137 = vadd.xlane.f32.xlu0 %v2136
      %v2138 = vpop.xlane.xlu0 %2137
      %v2139 = vsel %vm468, %v2115, 0.0
      %2140 = vadd.xlane.f32.xlu0 %v2139
      %v2141 = vpop.xlane.xlu0 %2140
      %v2142 = vsel %vm468, %v2116, 0.0
      %2143 = vadd.xlane.f32.xlu0 %v2142
      %v2144 = vpop.xlane.xlu0 %2143
      %v2145 = vsel %vm468, %v2117, 0.0
      %2146 = vadd.xlane.f32.xlu0 %v2145
      %v2147 = vpop.xlane.xlu0 %2146
      %v2148 = vsel %vm468, %v2118, 0.0
      %2149 = vadd.xlane.f32.xlu0 %v2148
      %v2150 = vpop.xlane.xlu0 %2149
      %v2151 = vsel %vm468, %v2119, 0.0
      %2152 = vadd.xlane.f32.xlu0 %v2151
      %v2153 = vpop.xlane.xlu0 %2152
      %v2154 = vsel %vm468, %v2120, 0.0
      %2155 = vadd.xlane.f32.xlu0 %v2154
      %v2156 = vpop.xlane.xlu0 %2155
      %v2157 = vsel %vm468, %v2121, 0.0
      %2158 = vadd.xlane.f32.xlu0 %v2157
      %v2159 = vpop.xlane.xlu0 %2158
      %v2160 = vsel %vm468, %v2122, 0.0
      %2161 = vadd.xlane.f32.xlu0 %v2160
      %v2162 = vpop.xlane.xlu0 %2161
      %v2163 = vsel %vm468, %v2123, 0.0
      %2164 = vadd.xlane.f32.xlu0 %v2163
      %v2165 = vpop.xlane.xlu0 %2164
      %v2166 = vsel %vm468, %v2124, 0.0
      %2167 = vadd.xlane.f32.xlu0 %v2166
      %v2168 = vpop.xlane.xlu0 %2167
      %v2169 = vsel %vm468, %v2125, 0.0
      %2170 = vadd.xlane.f32.xlu0 %v2169
      %v2171 = vpop.xlane.xlu0 %2170
      %v2172 = vsel %vm468, %v2126, 0.0
      %2173 = vadd.xlane.f32.xlu0 %v2172
      %v2174 = vpop.xlane.xlu0 %2173
      %v2175 = vmul.f32 %v2129, %v2078
      %v2176 = vmul.f32 %v2132, %v2078
      %v2177 = vmul.f32 %v2135, %v2078
      %v2178 = vmul.f32 %v2138, %v2078
      %v2179 = vmul.f32 %v2141, %v2078
      %v2180 = vmul.f32 %v2144, %v2078
      %v2181 = vmul.f32 %v2147, %v2078
      %v2182 = vmul.f32 %v2150, %v2078
      %v2183 = vmul.f32 %v2153, %v2078
      %v2184 = vmul.f32 %v2156, %v2078
      %v2185 = vmul.f32 %v2159, %v2078
      %v2186 = vmul.f32 %v2162, %v2078
      %v2187 = vmul.f32 %v2165, %v2078
      %v2188 = vmul.f32 %v2168, %v2078
      %v2189 = vmul.f32 %v2171, %v2078
      %v2190 = vmul.f32 %v2174, %v2078
      %v2191 = vadd.f32 %v2175, 1e-05
      %v2192 = vadd.f32 %v2176, 1e-05
      %v2193 = vadd.f32 %v2177, 1e-05
      %v2194 = vadd.f32 %v2178, 1e-05
      %v2195 = vadd.f32 %v2179, 1e-05
      %v2196 = vadd.f32 %v2180, 1e-05
      %v2197 = vadd.f32 %v2181, 1e-05
      %v2198 = vadd.f32 %v2182, 1e-05
      %v2199 = vadd.f32 %v2183, 1e-05
      %v2200 = vadd.f32 %v2184, 1e-05
      %v2201 = vadd.f32 %v2185, 1e-05
      %v2202 = vadd.f32 %v2186, 1e-05
      %v2203 = vadd.f32 %v2187, 1e-05
      %v2204 = vadd.f32 %v2188, 1e-05
      %v2205 = vadd.f32 %v2189, 1e-05
      %v2206 = vadd.f32 %v2190, 1e-05
      %v2207 = vrsqrt.pop %v2191
      %v2208 = vmul.f32 %v2207, %v2191
      %v2209 = vmul.f32 %v2208, %v2207
      %v2210 = vmul.f32 0.5, %v2209
      %v2211 = vsub.f32 1.5, %v2210
      %v2212 = vmul.f32 %v2207, %v2211
      %vm2213 = vweird.f32 %v2191
      %vm2214 = vweird.f32 %v2207
      %vm2215 = vmor %vm2213, %vm2214
      %v2216 = vsel %vm2215, %v2207, %v2212
      %v2217 = vrsqrt.pop %v2192
      %v2218 = vmul.f32 %v2217, %v2192
      %v2219 = vmul.f32 %v2218, %v2217
      %v2220 = vmul.f32 0.5, %v2219
      %v2221 = vsub.f32 1.5, %v2220
      %v2222 = vmul.f32 %v2217, %v2221
      %vm2223 = vweird.f32 %v2192
      %vm2224 = vweird.f32 %v2217
      %vm2225 = vmor %vm2223, %vm2224
      %v2226 = vsel %vm2225, %v2217, %v2222
      %v2227 = vrsqrt.pop %v2193
      %v2228 = vmul.f32 %v2227, %v2193
      %v2229 = vmul.f32 %v2228, %v2227
      %v2230 = vmul.f32 0.5, %v2229
      %v2231 = vsub.f32 1.5, %v2230
      %v2232 = vmul.f32 %v2227, %v2231
      %vm2233 = vweird.f32 %v2193
      %vm2234 = vweird.f32 %v2227
      %vm2235 = vmor %vm2233, %vm2234
      %v2236 = vsel %vm2235, %v2227, %v2232
      %v2237 = vrsqrt.pop %v2194
      %v2238 = vmul.f32 %v2237, %v2194
      %v2239 = vmul.f32 %v2238, %v2237
      %v2240 = vmul.f32 0.5, %v2239
      %v2241 = vsub.f32 1.5, %v2240
      %v2242 = vmul.f32 %v2237, %v2241
      %vm2243 = vweird.f32 %v2194
      %vm2244 = vweird.f32 %v2237
      %vm2245 = vmor %vm2243, %vm2244
      %v2246 = vsel %vm2245, %v2237, %v2242
      %v2247 = vrsqrt.pop %v2195
      %v2248 = vmul.f32 %v2247, %v2195
      %v2249 = vmul.f32 %v2248, %v2247
      %v2250 = vmul.f32 0.5, %v2249
      %v2251 = vsub.f32 1.5, %v2250
      %v2252 = vmul.f32 %v2247, %v2251
      %vm2253 = vweird.f32 %v2195
      %vm2254 = vweird.f32 %v2247
      %vm2255 = vmor %vm2253, %vm2254
      %v2256 = vsel %vm2255, %v2247, %v2252
      %v2257 = vrsqrt.pop %v2196
      %v2258 = vmul.f32 %v2257, %v2196
      %v2259 = vmul.f32 %v2258, %v2257
      %v2260 = vmul.f32 0.5, %v2259
      %v2261 = vsub.f32 1.5, %v2260
      %v2262 = vmul.f32 %v2257, %v2261
      %vm2263 = vweird.f32 %v2196
      %vm2264 = vweird.f32 %v2257
      %vm2265 = vmor %vm2263, %vm2264
      %v2266 = vsel %vm2265, %v2257, %v2262
      %v2267 = vrsqrt.pop %v2197
      %v2268 = vmul.f32 %v2267, %v2197
      %v2269 = vmul.f32 %v2268, %v2267
      %v2270 = vmul.f32 0.5, %v2269
      %v2271 = vsub.f32 1.5, %v2270
      %v2272 = vmul.f32 %v2267, %v2271
      %vm2273 = vweird.f32 %v2197
      %vm2274 = vweird.f32 %v2267
      %vm2275 = vmor %vm2273, %vm2274
      %v2276 = vsel %vm2275, %v2267, %v2272
      %v2277 = vrsqrt.pop %v2198
      %v2278 = vmul.f32 %v2277, %v2198
      %v2279 = vmul.f32 %v2278, %v2277
      %v2280 = vmul.f32 0.5, %v2279
      %v2281 = vsub.f32 1.5, %v2280
      %v2282 = vmul.f32 %v2277, %v2281
      %vm2283 = vweird.f32 %v2198
      %vm2284 = vweird.f32 %v2277
      %vm2285 = vmor %vm2283, %vm2284
      %v2286 = vsel %vm2285, %v2277, %v2282
      %v2287 = vrsqrt.pop %v2199
      %v2288 = vmul.f32 %v2287, %v2199
      %v2289 = vmul.f32 %v2288, %v2287
      %v2290 = vmul.f32 0.5, %v2289
      %v2291 = vsub.f32 1.5, %v2290
      %v2292 = vmul.f32 %v2287, %v2291
      %vm2293 = vweird.f32 %v2199
      %vm2294 = vweird.f32 %v2287
      %vm2295 = vmor %vm2293, %vm2294
      %v2296 = vsel %vm2295, %v2287, %v2292
      %v2297 = vrsqrt.pop %v2200
      %v2298 = vmul.f32 %v2297, %v2200
      %v2299 = vmul.f32 %v2298, %v2297
      %v2300 = vmul.f32 0.5, %v2299
      %v2301 = vsub.f32 1.5, %v2300
      %v2302 = vmul.f32 %v2297, %v2301
      %vm2303 = vweird.f32 %v2200
      %vm2304 = vweird.f32 %v2297
      %vm2305 = vmor %vm2303, %vm2304
      %v2306 = vsel %vm2305, %v2297, %v2302
      %v2307 = vrsqrt.pop %v2201
      %v2308 = vmul.f32 %v2307, %v2201
      %v2309 = vmul.f32 %v2308, %v2307
      %v2310 = vmul.f32 0.5, %v2309
      %v2311 = vsub.f32 1.5, %v2310
      %v2312 = vmul.f32 %v2307, %v2311
      %vm2313 = vweird.f32 %v2201
      %vm2314 = vweird.f32 %v2307
      %vm2315 = vmor %vm2313, %vm2314
      %v2316 = vsel %vm2315, %v2307, %v2312
      %v2317 = vrsqrt.pop %v2202
      %v2318 = vmul.f32 %v2317, %v2202
      %v2319 = vmul.f32 %v2318, %v2317
      %v2320 = vmul.f32 0.5, %v2319
      %v2321 = vsub.f32 1.5, %v2320
      %v2322 = vmul.f32 %v2317, %v2321
      %vm2323 = vweird.f32 %v2202
      %vm2324 = vweird.f32 %v2317
      %vm2325 = vmor %vm2323, %vm2324
      %v2326 = vsel %vm2325, %v2317, %v2322
      %v2327 = vrsqrt.pop %v2203
      %v2328 = vmul.f32 %v2327, %v2203
      %v2329 = vmul.f32 %v2328, %v2327
      %v2330 = vmul.f32 0.5, %v2329
      %v2331 = vsub.f32 1.5, %v2330
      %v2332 = vmul.f32 %v2327, %v2331
      %vm2333 = vweird.f32 %v2203
      %vm2334 = vweird.f32 %v2327
      %vm2335 = vmor %vm2333, %vm2334
      %v2336 = vsel %vm2335, %v2327, %v2332
      %v2337 = vrsqrt.pop %v2204
      %v2338 = vmul.f32 %v2337, %v2204
      %v2339 = vmul.f32 %v2338, %v2337
      %v2340 = vmul.f32 0.5, %v2339
      %v2341 = vsub.f32 1.5, %v2340
      %v2342 = vmul.f32 %v2337, %v2341
      %vm2343 = vweird.f32 %v2204
      %vm2344 = vweird.f32 %v2337
      %vm2345 = vmor %vm2343, %vm2344
      %v2346 = vsel %vm2345, %v2337, %v2342
      %v2347 = vrsqrt.pop %v2205
      %v2348 = vmul.f32 %v2347, %v2205
      %v2349 = vmul.f32 %v2348, %v2347
      %v2350 = vmul.f32 0.5, %v2349
      %v2351 = vsub.f32 1.5, %v2350
      %v2352 = vmul.f32 %v2347, %v2351
      %vm2353 = vweird.f32 %v2205
      %vm2354 = vweird.f32 %v2347
      %vm2355 = vmor %vm2353, %vm2354
      %v2356 = vsel %vm2355, %v2347, %v2352
      %v2357 = vrsqrt.pop %v2206
      %v2358 = vmul.f32 %v2357, %v2206
      %v2359 = vmul.f32 %v2358, %v2357
      %v2360 = vmul.f32 0.5, %v2359
      %v2361 = vsub.f32 1.5, %v2360
      %v2362 = vmul.f32 %v2357, %v2361
      %vm2363 = vweird.f32 %v2206
      %vm2364 = vweird.f32 %v2357
      %vm2365 = vmor %vm2363, %vm2364
      %v2366 = vsel %vm2365, %v2357, %v2362
      %v2367 = vmul.f32 %v2095, %v2216
      %v2368 = vmul.f32 %v2096, %v2226
      %v2369 = vmul.f32 %v2097, %v2236
      %v2370 = vmul.f32 %v2098, %v2246
      %v2371 = vmul.f32 %v2099, %v2256
      %v2372 = vmul.f32 %v2100, %v2266
      %v2373 = vmul.f32 %v2101, %v2276
      %v2374 = vmul.f32 %v2102, %v2286
      %v2375 = vmul.f32 %v2103, %v2296
      %v2376 = vmul.f32 %v2104, %v2306
      %v2377 = vmul.f32 %v2105, %v2316
      %v2378 = vmul.f32 %v2106, %v2326
      %v2379 = vmul.f32 %v2107, %v2336
      %v2380 = vmul.f32 %v2108, %v2346
      %v2381 = vmul.f32 %v2109, %v2356
      %v2382 = vmul.f32 %v2110, %v2366
      %v2384 = vperm.slane %v2022, 0
      %v2386 = vmul.f32 %v2367, %v2384
      %v2387 = vmul.f32 %v2368, %v2384
      %v2388 = vmul.f32 %v2369, %v2384
      %v2389 = vmul.f32 %v2370, %v2384
      %v2390 = vmul.f32 %v2371, %v2384
      %v2391 = vmul.f32 %v2372, %v2384
      %v2392 = vmul.f32 %v2373, %v2384
      %v2393 = vmul.f32 %v2374, %v2384
      %v2394 = vmul.f32 %v2375, %v2384
      %v2395 = vmul.f32 %v2376, %v2384
      %v2396 = vmul.f32 %v2377, %v2384
      %v2397 = vmul.f32 %v2378, %v2384
      %v2398 = vmul.f32 %v2379, %v2384
      %v2399 = vmul.f32 %v2380, %v2384
      %v2400 = vmul.f32 %v2381, %v2384
      %v2401 = vmul.f32 %v2382, %v2384
      %v2403 = vperm.slane %v2023, 0
      %v2405 = vadd.f32 %v2386, %v2403
      %v2406 = vadd.f32 %v2387, %v2403
      %v2407 = vadd.f32 %v2388, %v2403
      %v2408 = vadd.f32 %v2389, %v2403
      %v2409 = vadd.f32 %v2390, %v2403
      %v2410 = vadd.f32 %v2391, %v2403
      %v2411 = vadd.f32 %v2392, %v2403
      %v2412 = vadd.f32 %v2393, %v2403
      %v2413 = vadd.f32 %v2394, %v2403
      %v2414 = vadd.f32 %v2395, %v2403
      %v2415 = vadd.f32 %v2396, %v2403
      %v2416 = vadd.f32 %v2397, %v2403
      %v2417 = vadd.f32 %v2398, %v2403
      %v2418 = vadd.f32 %v2399, %v2403
      %v2419 = vadd.f32 %v2400, %v2403
      %v2420 = vadd.f32 %v2401, %v2403
      %v2421 = vld [vmem:[%s7] sm:$0xff]
      %v2422 = vld [vmem:[%s7 + $0x8] sm:$0xff]
      %v2423 = vld [vmem:[%s7 + $0x10] sm:$0xff]
      %v2424 = vld [vmem:[%s7 + $0x18] sm:$0xff]
      %v2425 = vld [vmem:[%s8] sm:$0x1]
      %v2427 = vperm.slane %v2425, 0
      %v2430 = vsel %vm468, %v2405, 0
      %v2433 = vsel %vm468, %v2406, 0
      %v2436 = vsel %vm468, %v2407, 0
      %v2439 = vsel %vm468, %v2408, 0
      %v2442 = vsel %vm468, %v2409, 0
      %v2445 = vsel %vm468, %v2410, 0
      %v2448 = vsel %vm468, %v2411, 0
      %v2451 = vsel %vm468, %v2412, 0
      %v2454 = vsel %vm468, %v2413, 0
      %v2457 = vsel %vm468, %v2414, 0
      %v2460 = vsel %vm468, %v2415, 0
      %v2463 = vsel %vm468, %v2416, 0
      %v2466 = vsel %vm468, %v2417, 0
      %v2469 = vsel %vm468, %v2418, 0
      %v2472 = vsel %vm468, %v2419, 0
      %v2475 = vsel %vm468, %v2420, 0
      %2477 = vmatpush.msra.mxu0 0.0
      %2478 = vmatpush.msra.mxu0 0.0
      %2479 = vmatpush.msra.mxu0 0.0
      %2480 = vmatpush.msra.mxu0 0.0
      %2481 = vmatpush.msra.mxu0 0.0
      %2482 = vmatpush.msra.mxu0 0.0
      %2483 = vmatpush.msra.mxu0 0.0
      %2484 = vmatpush.msra.mxu0 0.0
      %2485 = vmatpush.msra.mxu0 0.0
      %2486 = vmatpush.msra.mxu0 0.0
      %2487 = vmatpush.msra.mxu0 0.0
      %2488 = vmatpush.msra.mxu0 0.0
      %2489 = vmatpush.msra.mxu0 %v2424
      %2490 = vmatpush.msra.mxu0 %v2423
      %2491 = vmatpush.msra.mxu0 %v2422
      %2492 = vmatpush.msra.mxu0 %v2421
      %2493 = vmatmul.f32.gmra.mxu0 %v2430
      %v2494 = vpop.f32.mrf.mxu0
      %v2495 = vadd.f32 %v2427, %v2494
      %2496 = vmatmul.f32.gmra.mxu0 %v2433
      %v2497 = vpop.f32.mrf.mxu0
      %v2498 = vadd.f32 %v2427, %v2497
      %2499 = vmatmul.f32.gmra.mxu0 %v2436
      %v2500 = vpop.f32.mrf.mxu0
      %v2501 = vadd.f32 %v2427, %v2500
      %2502 = vmatmul.f32.gmra.mxu0 %v2439
      %v2503 = vpop.f32.mrf.mxu0
      %v2504 = vadd.f32 %v2427, %v2503
      %2505 = vmatmul.f32.gmra.mxu0 %v2442
      %v2506 = vpop.f32.mrf.mxu0
      %v2507 = vadd.f32 %v2427, %v2506
      %2508 = vmatmul.f32.gmra.mxu0 %v2445
      %v2509 = vpop.f32.mrf.mxu0
      %v2510 = vadd.f32 %v2427, %v2509
      %2511 = vmatmul.f32.gmra.mxu0 %v2448
      %v2512 = vpop.f32.mrf.mxu0
      %v2513 = vadd.f32 %v2427, %v2512
      %2514 = vmatmul.f32.gmra.mxu0 %v2451
      %v2515 = vpop.f32.mrf.mxu0
      %v2516 = vadd.f32 %v2427, %v2515
      %2517 = vmatmul.f32.gmra.mxu0 %v2454
      %v2518 = vpop.f32.mrf.mxu0
      %v2519 = vadd.f32 %v2427, %v2518
      %2520 = vmatmul.f32.gmra.mxu0 %v2457
      %v2521 = vpop.f32.mrf.mxu0
      %v2522 = vadd.f32 %v2427, %v2521
      %2523 = vmatmul.f32.gmra.mxu0 %v2460
      %v2524 = vpop.f32.mrf.mxu0
      %v2525 = vadd.f32 %v2427, %v2524
      %2526 = vmatmul.f32.gmra.mxu0 %v2463
      %v2527 = vpop.f32.mrf.mxu0
      %v2528 = vadd.f32 %v2427, %v2527
      %2529 = vmatmul.f32.gmra.mxu0 %v2466
      %v2530 = vpop.f32.mrf.mxu0
      %v2531 = vadd.f32 %v2427, %v2530
      %2532 = vmatmul.f32.gmra.mxu0 %v2469
      %v2533 = vpop.f32.mrf.mxu0
      %v2534 = vadd.f32 %v2427, %v2533
      %2535 = vmatmul.f32.gmra.mxu0 %v2472
      %v2536 = vpop.f32.mrf.mxu0
      %v2537 = vadd.f32 %v2427, %v2536
      %2538 = vmatmul.f32.gmra.mxu0 %v2475
      %v2539 = vpop.f32.mrf.mxu0
      %v2540 = vadd.f32 %v2427, %v2539
      %2541 = vdwg.mxu0
      %v2542 = vmax.f32 %v2495, 0.0
      %v2543 = vmax.f32 %v2498, 0.0
      %v2544 = vmax.f32 %v2501, 0.0
      %v2545 = vmax.f32 %v2504, 0.0
      %v2546 = vmax.f32 %v2507, 0.0
      %v2547 = vmax.f32 %v2510, 0.0
      %v2548 = vmax.f32 %v2513, 0.0
      %v2549 = vmax.f32 %v2516, 0.0
      %v2550 = vmax.f32 %v2519, 0.0
      %v2551 = vmax.f32 %v2522, 0.0
      %v2552 = vmax.f32 %v2525, 0.0
      %v2553 = vmax.f32 %v2528, 0.0
      %v2554 = vmax.f32 %v2531, 0.0
      %v2555 = vmax.f32 %v2534, 0.0
      %v2556 = vmax.f32 %v2537, 0.0
      %v2557 = vmax.f32 %v2540, 0.0
      %v2558 = vld [vmem:[%s9] sm:$0xff]
      %v2559 = vld [vmem:[%s9 + $0x8] sm:$0xff]
      %v2560 = vld [vmem:[%s9 + $0x10] sm:$0xff]
      %v2561 = vld [vmem:[%s9 + $0x18] sm:$0xff]
      %v2562 = vld [vmem:[%s10] sm:$0x1]
      %v2564 = vperm.slane %v2562, 0
      %v2567 = vsel %vm468, %v2542, 0
      %v2570 = vsel %vm468, %v2543, 0
      %v2573 = vsel %vm468, %v2544, 0
      %v2576 = vsel %vm468, %v2545, 0
      %v2579 = vsel %vm468, %v2546, 0
      %v2582 = vsel %vm468, %v2547, 0
      %v2585 = vsel %vm468, %v2548, 0
      %v2588 = vsel %vm468, %v2549, 0
      %v2591 = vsel %vm468, %v2550, 0
      %v2594 = vsel %vm468, %v2551, 0
      %v2597 = vsel %vm468, %v2552, 0
      %v2600 = vsel %vm468, %v2553, 0
      %v2603 = vsel %vm468, %v2554, 0
      %v2606 = vsel %vm468, %v2555, 0
      %v2609 = vsel %vm468, %v2556, 0
      %v2612 = vsel %vm468, %v2557, 0
      %2614 = vmatpush.msra.mxu0 0.0
      %2615 = vmatpush.msra.mxu0 0.0
      %2616 = vmatpush.msra.mxu0 0.0
      %2617 = vmatpush.msra.mxu0 0.0
      %2618 = vmatpush.msra.mxu0 0.0
      %2619 = vmatpush.msra.mxu0 0.0
      %2620 = vmatpush.msra.mxu0 0.0
      %2621 = vmatpush.msra.mxu0 0.0
      %2622 = vmatpush.msra.mxu0 0.0
      %2623 = vmatpush.msra.mxu0 0.0
      %2624 = vmatpush.msra.mxu0 0.0
      %2625 = vmatpush.msra.mxu0 0.0
      %2626 = vmatpush.msra.mxu0 %v2561
      %2627 = vmatpush.msra.mxu0 %v2560
      %2628 = vmatpush.msra.mxu0 %v2559
      %2629 = vmatpush.msra.mxu0 %v2558
      %2630 = vmatmul.f32.gmra.mxu0 %v2567
      %v2631 = vpop.f32.mrf.mxu0
      %v2632 = vadd.f32 %v2564, %v2631
      %2633 = vmatmul.f32.gmra.mxu0 %v2570
      %v2634 = vpop.f32.mrf.mxu0
      %v2635 = vadd.f32 %v2564, %v2634
      %2636 = vmatmul.f32.gmra.mxu0 %v2573
      %v2637 = vpop.f32.mrf.mxu0
      %v2638 = vadd.f32 %v2564, %v2637
      %2639 = vmatmul.f32.gmra.mxu0 %v2576
      %v2640 = vpop.f32.mrf.mxu0
      %v2641 = vadd.f32 %v2564, %v2640
      %2642 = vmatmul.f32.gmra.mxu0 %v2579
      %v2643 = vpop.f32.mrf.mxu0
      %v2644 = vadd.f32 %v2564, %v2643
      %2645 = vmatmul.f32.gmra.mxu0 %v2582
      %v2646 = vpop.f32.mrf.mxu0
      %v2647 = vadd.f32 %v2564, %v2646
      %2648 = vmatmul.f32.gmra.mxu0 %v2585
      %v2649 = vpop.f32.mrf.mxu0
      %v2650 = vadd.f32 %v2564, %v2649
      %2651 = vmatmul.f32.gmra.mxu0 %v2588
      %v2652 = vpop.f32.mrf.mxu0
      %v2653 = vadd.f32 %v2564, %v2652
      %2654 = vmatmul.f32.gmra.mxu0 %v2591
      %v2655 = vpop.f32.mrf.mxu0
      %v2656 = vadd.f32 %v2564, %v2655
      %2657 = vmatmul.f32.gmra.mxu0 %v2594
      %v2658 = vpop.f32.mrf.mxu0
      %v2659 = vadd.f32 %v2564, %v2658
      %2660 = vmatmul.f32.gmra.mxu0 %v2597
      %v2661 = vpop.f32.mrf.mxu0
      %v2662 = vadd.f32 %v2564, %v2661
      %2663 = vmatmul.f32.gmra.mxu0 %v2600
      %v2664 = vpop.f32.mrf.mxu0
      %v2665 = vadd.f32 %v2564, %v2664
      %2666 = vmatmul.f32.gmra.mxu0 %v2603
      %v2667 = vpop.f32.mrf.mxu0
      %v2668 = vadd.f32 %v2564, %v2667
      %2669 = vmatmul.f32.gmra.mxu0 %v2606
      %v2670 = vpop.f32.mrf.mxu0
      %v2671 = vadd.f32 %v2564, %v2670
      %2672 = vmatmul.f32.gmra.mxu0 %v2609
      %v2673 = vpop.f32.mrf.mxu0
      %v2674 = vadd.f32 %v2564, %v2673
      %2675 = vmatmul.f32.gmra.mxu0 %v2612
      %v2676 = vpop.f32.mrf.mxu0
      %v2677 = vadd.f32 %v2564, %v2676
      %2678 = vdwg.mxu0
      %v2679 = vld [vmem:[%s11] sm:$0x1]
      %v2680 = vld [vmem:[%s12] sm:$0x1]
      %v2681 = vsel %vm468, %v2632, 0.0
      %2682 = vadd.xlane.f32.xlu0 %v2681
      %v2683 = vpop.xlane.xlu0 %2682
      %v2684 = vsel %vm468, %v2635, 0.0
      %2685 = vadd.xlane.f32.xlu0 %v2684
      %v2686 = vpop.xlane.xlu0 %2685
      %v2687 = vsel %vm468, %v2638, 0.0
      %2688 = vadd.xlane.f32.xlu0 %v2687
      %v2689 = vpop.xlane.xlu0 %2688
      %v2690 = vsel %vm468, %v2641, 0.0
      %2691 = vadd.xlane.f32.xlu0 %v2690
      %v2692 = vpop.xlane.xlu0 %2691
      %v2693 = vsel %vm468, %v2644, 0.0
      %2694 = vadd.xlane.f32.xlu0 %v2693
      %v2695 = vpop.xlane.xlu0 %2694
      %v2696 = vsel %vm468, %v2647, 0.0
      %2697 = vadd.xlane.f32.xlu0 %v2696
      %v2698 = vpop.xlane.xlu0 %2697
      %v2699 = vsel %vm468, %v2650, 0.0
      %2700 = vadd.xlane.f32.xlu0 %v2699
      %v2701 = vpop.xlane.xlu0 %2700
      %v2702 = vsel %vm468, %v2653, 0.0
      %2703 = vadd.xlane.f32.xlu0 %v2702
      %v2704 = vpop.xlane.xlu0 %2703
      %v2705 = vsel %vm468, %v2656, 0.0
      %2706 = vadd.xlane.f32.xlu0 %v2705
      %v2707 = vpop.xlane.xlu0 %2706
      %v2708 = vsel %vm468, %v2659, 0.0
      %2709 = vadd.xlane.f32.xlu0 %v2708
      %v2710 = vpop.xlane.xlu0 %2709
      %v2711 = vsel %vm468, %v2662, 0.0
      %2712 = vadd.xlane.f32.xlu0 %v2711
      %v2713 = vpop.xlane.xlu0 %2712
      %v2714 = vsel %vm468, %v2665, 0.0
      %2715 = vadd.xlane.f32.xlu0 %v2714
      %v2716 = vpop.xlane.xlu0 %2715
      %v2717 = vsel %vm468, %v2668, 0.0
      %2718 = vadd.xlane.f32.xlu0 %v2717
      %v2719 = vpop.xlane.xlu0 %2718
      %v2720 = vsel %vm468, %v2671, 0.0
      %2721 = vadd.xlane.f32.xlu0 %v2720
      %v2722 = vpop.xlane.xlu0 %2721
      %v2723 = vsel %vm468, %v2674, 0.0
      %2724 = vadd.xlane.f32.xlu0 %v2723
      %v2725 = vpop.xlane.xlu0 %2724
      %v2726 = vsel %vm468, %v2677, 0.0
      %2727 = vadd.xlane.f32.xlu0 %v2726
      %v2728 = vpop.xlane.xlu0 %2727
      %v2729 = vmul.f32 %v2683, %v2078
      %v2730 = vmul.f32 %v2686, %v2078
      %v2731 = vmul.f32 %v2689, %v2078
      %v2732 = vmul.f32 %v2692, %v2078
      %v2733 = vmul.f32 %v2695, %v2078
      %v2734 = vmul.f32 %v2698, %v2078
      %v2735 = vmul.f32 %v2701, %v2078
      %v2736 = vmul.f32 %v2704, %v2078
      %v2737 = vmul.f32 %v2707, %v2078
      %v2738 = vmul.f32 %v2710, %v2078
      %v2739 = vmul.f32 %v2713, %v2078
      %v2740 = vmul.f32 %v2716, %v2078
      %v2741 = vmul.f32 %v2719, %v2078
      %v2742 = vmul.f32 %v2722, %v2078
      %v2743 = vmul.f32 %v2725, %v2078
      %v2744 = vmul.f32 %v2728, %v2078
      %v2745 = vsub.f32 %v2632, %v2729
      %v2746 = vsub.f32 %v2635, %v2730
      %v2747 = vsub.f32 %v2638, %v2731
      %v2748 = vsub.f32 %v2641, %v2732
      %v2749 = vsub.f32 %v2644, %v2733
      %v2750 = vsub.f32 %v2647, %v2734
      %v2751 = vsub.f32 %v2650, %v2735
      %v2752 = vsub.f32 %v2653, %v2736
      %v2753 = vsub.f32 %v2656, %v2737
      %v2754 = vsub.f32 %v2659, %v2738
      %v2755 = vsub.f32 %v2662, %v2739
      %v2756 = vsub.f32 %v2665, %v2740
      %v2757 = vsub.f32 %v2668, %v2741
      %v2758 = vsub.f32 %v2671, %v2742
      %v2759 = vsub.f32 %v2674, %v2743
      %v2760 = vsub.f32 %v2677, %v2744
      %v2761 = vmul.f32 %v2745, %v2745
      %v2762 = vmul.f32 %v2746, %v2746
      %v2763 = vmul.f32 %v2747, %v2747
      %v2764 = vmul.f32 %v2748, %v2748
      %v2765 = vmul.f32 %v2749, %v2749
      %v2766 = vmul.f32 %v2750, %v2750
      %v2767 = vmul.f32 %v2751, %v2751
      %v2768 = vmul.f32 %v2752, %v2752
      %v2769 = vmul.f32 %v2753, %v2753
      %v2770 = vmul.f32 %v2754, %v2754
      %v2771 = vmul.f32 %v2755, %v2755
      %v2772 = vmul.f32 %v2756, %v2756
      %v2773 = vmul.f32 %v2757, %v2757
      %v2774 = vmul.f32 %v2758, %v2758
      %v2775 = vmul.f32 %v2759, %v2759
      %v2776 = vmul.f32 %v2760, %v2760
      %v2777 = vsel %vm468, %v2761, 0.0
      %2778 = vadd.xlane.f32.xlu0 %v2777
      %v2779 = vpop.xlane.xlu0 %2778
      %v2780 = vsel %vm468, %v2762, 0.0
      %2781 = vadd.xlane.f32.xlu0 %v2780
      %v2782 = vpop.xlane.xlu0 %2781
      %v2783 = vsel %vm468, %v2763, 0.0
      %2784 = vadd.xlane.f32.xlu0 %v2783
      %v2785 = vpop.xlane.xlu0 %2784
      %v2786 = vsel %vm468, %v2764, 0.0
      %2787 = vadd.xlane.f32.xlu0 %v2786
      %v2788 = vpop.xlane.xlu0 %2787
      %v2789 = vsel %vm468, %v2765, 0.0
      %2790 = vadd.xlane.f32.xlu0 %v2789
      %v2791 = vpop.xlane.xlu0 %2790
      %v2792 = vsel %vm468, %v2766, 0.0
      %2793 = vadd.xlane.f32.xlu0 %v2792
      %v2794 = vpop.xlane.xlu0 %2793
      %v2795 = vsel %vm468, %v2767, 0.0
      %2796 = vadd.xlane.f32.xlu0 %v2795
      %v2797 = vpop.xlane.xlu0 %2796
      %v2798 = vsel %vm468, %v2768, 0.0
      %2799 = vadd.xlane.f32.xlu0 %v2798
      %v2800 = vpop.xlane.xlu0 %2799
      %v2801 = vsel %vm468, %v2769, 0.0
      %2802 = vadd.xlane.f32.xlu0 %v2801
      %v2803 = vpop.xlane.xlu0 %2802
      %v2804 = vsel %vm468, %v2770, 0.0
      %2805 = vadd.xlane.f32.xlu0 %v2804
      %v2806 = vpop.xlane.xlu0 %2805
      %v2807 = vsel %vm468, %v2771, 0.0
      %2808 = vadd.xlane.f32.xlu0 %v2807
      %v2809 = vpop.xlane.xlu0 %2808
      %v2810 = vsel %vm468, %v2772, 0.0
      %2811 = vadd.xlane.f32.xlu0 %v2810
      %v2812 = vpop.xlane.xlu0 %2811
      %v2813 = vsel %vm468, %v2773, 0.0
      %2814 = vadd.xlane.f32.xlu0 %v2813
      %v2815 = vpop.xlane.xlu0 %2814
      %v2816 = vsel %vm468, %v2774, 0.0
      %2817 = vadd.xlane.f32.xlu0 %v2816
      %v2818 = vpop.xlane.xlu0 %2817
      %v2819 = vsel %vm468, %v2775, 0.0
      %2820 = vadd.xlane.f32.xlu0 %v2819
      %v2821 = vpop.xlane.xlu0 %2820
      %v2822 = vsel %vm468, %v2776, 0.0
      %2823 = vadd.xlane.f32.xlu0 %v2822
      %v2824 = vpop.xlane.xlu0 %2823
      %v2825 = vmul.f32 %v2779, %v2078
      %v2826 = vmul.f32 %v2782, %v2078
      %v2827 = vmul.f32 %v2785, %v2078
      %v2828 = vmul.f32 %v2788, %v2078
      %v2829 = vmul.f32 %v2791, %v2078
      %v2830 = vmul.f32 %v2794, %v2078
      %v2831 = vmul.f32 %v2797, %v2078
      %v2832 = vmul.f32 %v2800, %v2078
      %v2833 = vmul.f32 %v2803, %v2078
      %v2834 = vmul.f32 %v2806, %v2078
      %v2835 = vmul.f32 %v2809, %v2078
      %v2836 = vmul.f32 %v2812, %v2078
      %v2837 = vmul.f32 %v2815, %v2078
      %v2838 = vmul.f32 %v2818, %v2078
      %v2839 = vmul.f32 %v2821, %v2078
      %v2840 = vmul.f32 %v2824, %v2078
      %v2841 = vadd.f32 %v2825, 1e-05
      %v2842 = vadd.f32 %v2826, 1e-05
      %v2843 = vadd.f32 %v2827, 1e-05
      %v2844 = vadd.f32 %v2828, 1e-05
      %v2845 = vadd.f32 %v2829, 1e-05
      %v2846 = vadd.f32 %v2830, 1e-05
      %v2847 = vadd.f32 %v2831, 1e-05
      %v2848 = vadd.f32 %v2832, 1e-05
      %v2849 = vadd.f32 %v2833, 1e-05
      %v2850 = vadd.f32 %v2834, 1e-05
      %v2851 = vadd.f32 %v2835, 1e-05
      %v2852 = vadd.f32 %v2836, 1e-05
      %v2853 = vadd.f32 %v2837, 1e-05
      %v2854 = vadd.f32 %v2838, 1e-05
      %v2855 = vadd.f32 %v2839, 1e-05
      %v2856 = vadd.f32 %v2840, 1e-05
      %v2857 = vrsqrt.pop %v2841
      %v2858 = vmul.f32 %v2857, %v2841
      %v2859 = vmul.f32 %v2858, %v2857
      %v2860 = vmul.f32 0.5, %v2859
      %v2861 = vsub.f32 1.5, %v2860
      %v2862 = vmul.f32 %v2857, %v2861
      %vm2863 = vweird.f32 %v2841
      %vm2864 = vweird.f32 %v2857
      %vm2865 = vmor %vm2863, %vm2864
      %v2866 = vsel %vm2865, %v2857, %v2862
      %v2867 = vrsqrt.pop %v2842
      %v2868 = vmul.f32 %v2867, %v2842
      %v2869 = vmul.f32 %v2868, %v2867
      %v2870 = vmul.f32 0.5, %v2869
      %v2871 = vsub.f32 1.5, %v2870
      %v2872 = vmul.f32 %v2867, %v2871
      %vm2873 = vweird.f32 %v2842
      %vm2874 = vweird.f32 %v2867
      %vm2875 = vmor %vm2873, %vm2874
      %v2876 = vsel %vm2875, %v2867, %v2872
      %v2877 = vrsqrt.pop %v2843
      %v2878 = vmul.f32 %v2877, %v2843
      %v2879 = vmul.f32 %v2878, %v2877
      %v2880 = vmul.f32 0.5, %v2879
      %v2881 = vsub.f32 1.5, %v2880
      %v2882 = vmul.f32 %v2877, %v2881
      %vm2883 = vweird.f32 %v2843
      %vm2884 = vweird.f32 %v2877
      %vm2885 = vmor %vm2883, %vm2884
      %v2886 = vsel %vm2885, %v2877, %v2882
      %v2887 = vrsqrt.pop %v2844
      %v2888 = vmul.f32 %v2887, %v2844
      %v2889 = vmul.f32 %v2888, %v2887
      %v2890 = vmul.f32 0.5, %v2889
      %v2891 = vsub.f32 1.5, %v2890
      %v2892 = vmul.f32 %v2887, %v2891
      %vm2893 = vweird.f32 %v2844
      %vm2894 = vweird.f32 %v2887
      %vm2895 = vmor %vm2893, %vm2894
      %v2896 = vsel %vm2895, %v2887, %v2892
      %v2897 = vrsqrt.pop %v2845
      %v2898 = vmul.f32 %v2897, %v2845
      %v2899 = vmul.f32 %v2898, %v2897
      %v2900 = vmul.f32 0.5, %v2899
      %v2901 = vsub.f32 1.5, %v2900
      %v2902 = vmul.f32 %v2897, %v2901
      %vm2903 = vweird.f32 %v2845
      %vm2904 = vweird.f32 %v2897
      %vm2905 = vmor %vm2903, %vm2904
      %v2906 = vsel %vm2905, %v2897, %v2902
      %v2907 = vrsqrt.pop %v2846
      %v2908 = vmul.f32 %v2907, %v2846
      %v2909 = vmul.f32 %v2908, %v2907
      %v2910 = vmul.f32 0.5, %v2909
      %v2911 = vsub.f32 1.5, %v2910
      %v2912 = vmul.f32 %v2907, %v2911
      %vm2913 = vweird.f32 %v2846
      %vm2914 = vweird.f32 %v2907
      %vm2915 = vmor %vm2913, %vm2914
      %v2916 = vsel %vm2915, %v2907, %v2912
      %v2917 = vrsqrt.pop %v2847
      %v2918 = vmul.f32 %v2917, %v2847
      %v2919 = vmul.f32 %v2918, %v2917
      %v2920 = vmul.f32 0.5, %v2919
      %v2921 = vsub.f32 1.5, %v2920
      %v2922 = vmul.f32 %v2917, %v2921
      %vm2923 = vweird.f32 %v2847
      %vm2924 = vweird.f32 %v2917
      %vm2925 = vmor %vm2923, %vm2924
      %v2926 = vsel %vm2925, %v2917, %v2922
      %v2927 = vrsqrt.pop %v2848
      %v2928 = vmul.f32 %v2927, %v2848
      %v2929 = vmul.f32 %v2928, %v2927
      %v2930 = vmul.f32 0.5, %v2929
      %v2931 = vsub.f32 1.5, %v2930
      %v2932 = vmul.f32 %v2927, %v2931
      %vm2933 = vweird.f32 %v2848
      %vm2934 = vweird.f32 %v2927
      %vm2935 = vmor %vm2933, %vm2934
      %v2936 = vsel %vm2935, %v2927, %v2932
      %v2937 = vrsqrt.pop %v2849
      %v2938 = vmul.f32 %v2937, %v2849
      %v2939 = vmul.f32 %v2938, %v2937
      %v2940 = vmul.f32 0.5, %v2939
      %v2941 = vsub.f32 1.5, %v2940
      %v2942 = vmul.f32 %v2937, %v2941
      %vm2943 = vweird.f32 %v2849
      %vm2944 = vweird.f32 %v2937
      %vm2945 = vmor %vm2943, %vm2944
      %v2946 = vsel %vm2945, %v2937, %v2942
      %v2947 = vrsqrt.pop %v2850
      %v2948 = vmul.f32 %v2947, %v2850
      %v2949 = vmul.f32 %v2948, %v2947
      %v2950 = vmul.f32 0.5, %v2949
      %v2951 = vsub.f32 1.5, %v2950
      %v2952 = vmul.f32 %v2947, %v2951
      %vm2953 = vweird.f32 %v2850
      %vm2954 = vweird.f32 %v2947
      %vm2955 = vmor %vm2953, %vm2954
      %v2956 = vsel %vm2955, %v2947, %v2952
      %v2957 = vrsqrt.pop %v2851
      %v2958 = vmul.f32 %v2957, %v2851
      %v2959 = vmul.f32 %v2958, %v2957
      %v2960 = vmul.f32 0.5, %v2959
      %v2961 = vsub.f32 1.5, %v2960
      %v2962 = vmul.f32 %v2957, %v2961
      %vm2963 = vweird.f32 %v2851
      %vm2964 = vweird.f32 %v2957
      %vm2965 = vmor %vm2963, %vm2964
      %v2966 = vsel %vm2965, %v2957, %v2962
      %v2967 = vrsqrt.pop %v2852
      %v2968 = vmul.f32 %v2967, %v2852
      %v2969 = vmul.f32 %v2968, %v2967
      %v2970 = vmul.f32 0.5, %v2969
      %v2971 = vsub.f32 1.5, %v2970
      %v2972 = vmul.f32 %v2967, %v2971
      %vm2973 = vweird.f32 %v2852
      %vm2974 = vweird.f32 %v2967
      %vm2975 = vmor %vm2973, %vm2974
      %v2976 = vsel %vm2975, %v2967, %v2972
      %v2977 = vrsqrt.pop %v2853
      %v2978 = vmul.f32 %v2977, %v2853
      %v2979 = vmul.f32 %v2978, %v2977
      %v2980 = vmul.f32 0.5, %v2979
      %v2981 = vsub.f32 1.5, %v2980
      %v2982 = vmul.f32 %v2977, %v2981
      %vm2983 = vweird.f32 %v2853
      %vm2984 = vweird.f32 %v2977
      %vm2985 = vmor %vm2983, %vm2984
      %v2986 = vsel %vm2985, %v2977, %v2982
      %v2987 = vrsqrt.pop %v2854
      %v2988 = vmul.f32 %v2987, %v2854
      %v2989 = vmul.f32 %v2988, %v2987
      %v2990 = vmul.f32 0.5, %v2989
      %v2991 = vsub.f32 1.5, %v2990
      %v2992 = vmul.f32 %v2987, %v2991
      %vm2993 = vweird.f32 %v2854
      %vm2994 = vweird.f32 %v2987
      %vm2995 = vmor %vm2993, %vm2994
      %v2996 = vsel %vm2995, %v2987, %v2992
      %v2997 = vrsqrt.pop %v2855
      %v2998 = vmul.f32 %v2997, %v2855
      %v2999 = vmul.f32 %v2998, %v2997
      %v3000 = vmul.f32 0.5, %v2999
      %v3001 = vsub.f32 1.5, %v3000
      %v3002 = vmul.f32 %v2997, %v3001
      %vm3003 = vweird.f32 %v2855
      %vm3004 = vweird.f32 %v2997
      %vm3005 = vmor %vm3003, %vm3004
      %v3006 = vsel %vm3005, %v2997, %v3002
      %v3007 = vrsqrt.pop %v2856
      %v3008 = vmul.f32 %v3007, %v2856
      %v3009 = vmul.f32 %v3008, %v3007
      %v3010 = vmul.f32 0.5, %v3009
      %v3011 = vsub.f32 1.5, %v3010
      %v3012 = vmul.f32 %v3007, %v3011
      %vm3013 = vweird.f32 %v2856
      %vm3014 = vweird.f32 %v3007
      %vm3015 = vmor %vm3013, %vm3014
      %v3016 = vsel %vm3015, %v3007, %v3012
      %v3017 = vmul.f32 %v2745, %v2866
      %v3018 = vmul.f32 %v2746, %v2876
      %v3019 = vmul.f32 %v2747, %v2886
      %v3020 = vmul.f32 %v2748, %v2896
      %v3021 = vmul.f32 %v2749, %v2906
      %v3022 = vmul.f32 %v2750, %v2916
      %v3023 = vmul.f32 %v2751, %v2926
      %v3024 = vmul.f32 %v2752, %v2936
      %v3025 = vmul.f32 %v2753, %v2946
      %v3026 = vmul.f32 %v2754, %v2956
      %v3027 = vmul.f32 %v2755, %v2966
      %v3028 = vmul.f32 %v2756, %v2976
      %v3029 = vmul.f32 %v2757, %v2986
      %v3030 = vmul.f32 %v2758, %v2996
      %v3031 = vmul.f32 %v2759, %v3006
      %v3032 = vmul.f32 %v2760, %v3016
      %v3034 = vperm.slane %v2679, 0
      %v3036 = vmul.f32 %v3017, %v3034
      %v3037 = vmul.f32 %v3018, %v3034
      %v3038 = vmul.f32 %v3019, %v3034
      %v3039 = vmul.f32 %v3020, %v3034
      %v3040 = vmul.f32 %v3021, %v3034
      %v3041 = vmul.f32 %v3022, %v3034
      %v3042 = vmul.f32 %v3023, %v3034
      %v3043 = vmul.f32 %v3024, %v3034
      %v3044 = vmul.f32 %v3025, %v3034
      %v3045 = vmul.f32 %v3026, %v3034
      %v3046 = vmul.f32 %v3027, %v3034
      %v3047 = vmul.f32 %v3028, %v3034
      %v3048 = vmul.f32 %v3029, %v3034
      %v3049 = vmul.f32 %v3030, %v3034
      %v3050 = vmul.f32 %v3031, %v3034
      %v3051 = vmul.f32 %v3032, %v3034
      %v3053 = vperm.slane %v2680, 0
      %v3055 = vadd.f32 %v3036, %v3053
      %v3056 = vadd.f32 %v3037, %v3053
      %v3057 = vadd.f32 %v3038, %v3053
      %v3058 = vadd.f32 %v3039, %v3053
      %v3059 = vadd.f32 %v3040, %v3053
      %v3060 = vadd.f32 %v3041, %v3053
      %v3061 = vadd.f32 %v3042, %v3053
      %v3062 = vadd.f32 %v3043, %v3053
      %v3063 = vadd.f32 %v3044, %v3053
      %v3064 = vadd.f32 %v3045, %v3053
      %v3065 = vadd.f32 %v3046, %v3053
      %v3066 = vadd.f32 %v3047, %v3053
      %v3067 = vadd.f32 %v3048, %v3053
      %v3068 = vadd.f32 %v3049, %v3053
      %v3069 = vadd.f32 %v3050, %v3053
      %v3070 = vadd.f32 %v3051, %v3053
      %3071 = vst.msk [vmem:[%s442] sm:$0xff] %vm468, %v3055
      %3072 = vst.msk [vmem:[%s442 + $0x8] sm:$0xff] %vm468, %v3056
      %3073 = vst.msk [vmem:[%s442 + $0x10] sm:$0xff] %vm468, %v3057
      %3074 = vst.msk [vmem:[%s442 + $0x18] sm:$0xff] %vm468, %v3058
      %3075 = vst.msk [vmem:[%s442 + $0x20] sm:$0xff] %vm468, %v3059
      %3076 = vst.msk [vmem:[%s442 + $0x28] sm:$0xff] %vm468, %v3060
      %3077 = vst.msk [vmem:[%s442 + $0x30] sm:$0xff] %vm468, %v3061
      %3078 = vst.msk [vmem:[%s442 + $0x38] sm:$0xff] %vm468, %v3062
      %3079 = vst.msk [vmem:[%s442 + $0x40] sm:$0xff] %vm468, %v3063
      %3080 = vst.msk [vmem:[%s442 + $0x48] sm:$0xff] %vm468, %v3064
      %3081 = vst.msk [vmem:[%s442 + $0x50] sm:$0xff] %vm468, %v3065
      %3082 = vst.msk [vmem:[%s442 + $0x58] sm:$0xff] %vm468, %v3066
      %3083 = vst.msk [vmem:[%s442 + $0x60] sm:$0xff] %vm468, %v3067
      %3084 = vst.msk [vmem:[%s442 + $0x68] sm:$0xff] %vm468, %v3068
      %3085 = vst.msk [vmem:[%s442 + $0x70] sm:$0xff] %vm468, %v3069
      %3086 = vst.msk [vmem:[%s442 + $0x78] sm:$0xff] %vm468, %v3070
      %s3087 = smul.u32 16, %s24
      %p3088 = scmp.lt.s32.totalorder %s3087, 31
      %s3089 = scalar_select %p3088, %s3087, 31
      %s3090 = smul.addr %s3089, 8
      %s3091 = scalar_lea.vmem %s13, %s3090
      // Predicated region
      $region73: #{tpu_custom_call.1} parent=71 // pred_check
        %p3092 = pneg %p320
      $region74: #{tpu_custom_call.1} parent=71 // pred_check_branch
        %3094 = sbr.rel (%p3092) target = $region76
      $region75: #{tpu_custom_call.1} parent=71 // pred_region
        %s3095 = smul.u32 16, %s24
      $region76: #{tpu_custom_call.1} parent=71 // pred_fallthru
        _
    $region72: #{tpu_custom_call.1} parent=5 // pred_fallthru
      _
    %p3096 = scmp.le.s32.totalorder 2, %s19
    // Predicated region
    $region77: #{tpu_custom_call.1} parent=5 // pred_check
      %p3097 = pneg %p3096
    $region78: #{tpu_custom_call.1} parent=5 // pred_check_branch
      %3099 = sbr.rel (%p3097) target = $region80
    $region79: #{tpu_custom_call.1} parent=5 // pred_region
      %s3100 = ssub.s32 %s19, 2
      // Predicated region
      $region81: #{tpu_custom_call.1} parent=79 // pred_check
        %p3101 = pneg %p326
      $region82: #{tpu_custom_call.1} parent=79 // pred_check_branch
        %3103 = sbr.rel (%p3101) target = $region84
      $region83: #{tpu_custom_call.1} parent=79 // pred_region
        %s3104 = smul.u32 16, %s25
        %p3105 = scmp.lt.s32.totalorder %s3104, 31
        %s3106 = scalar_select %p3105, %s3104, 31
        %s3107 = smul.addr %s3106, 8
        %s3108 = scalar_lea.vmem %s13, %s3107
      $region84: #{tpu_custom_call.1} parent=79 // pred_fallthru
        _
    $region80: #{tpu_custom_call.1} parent=5 // pred_fallthru
      _
  $region6: #{tpu_custom_call.1} parent=0 // loop_footer
    %s23 = sadd.s32 1, %s19
  $region7: #{tpu_custom_call.1} parent=0 // loop_footer_branch
    %18 = sbr.rel target = $region3
  $region8: #{tpu_custom_call.1} parent=0 // loop_exit
    _

</llo_original>
